<compile_context>
chip_gen: v7x
topology: tpu7x:2x2x1
jax: 0.10.0
libtpu: 0.0.40
codegen_flags: <defaults>
</compile_context>

<pallas_src>
import math
import functools

import jax
import jax.numpy as jnp
from jax import lax
from jax.experimental import pallas as pl
from jax.experimental.pallas import tpu as pltpu

LN_EPS = 1e-5  # PyTorch nn.LayerNorm default


def _layernorm(h, w, b):
    # single reduction pass: mean and mean-of-squares
    mu = jnp.mean(h, axis=-1, keepdims=True)
    ms = jnp.mean(h * h, axis=-1, keepdims=True)
    var = ms - mu * mu
    return (h - mu) * lax.rsqrt(var + LN_EPS) * w + b


def _gelu_tanh(x):
    # nn.GELU(approximate='tanh')
    c = math.sqrt(2.0 / math.pi)
    return 0.5 * x * (1.0 + jnp.tanh(c * (x + 0.044715 * x * x * x)))


def _block_kernel(n_head, tq,
                  x_q_ref, x_kv_ref,
                  ln1_w_ref, ln1_b_ref,
                  wq_ref, bq_ref,          # (C, C) bf16 / (1, C) f32 (scale folded)
                  wkv_ref, bkv_ref,        # (C, 2C) bf16 / (1, 2C) f32
                  wproj_ref, bproj_ref,    # (NH, hd, C) bf16 / (1, C) f32
                  ln2_w_ref, ln2_b_ref,
                  wfc_ref, bfc_ref,        # (C, 4C) bf16 / (1, 4C) f32
                  wmlp_ref, bmlp_ref,      # (4C, C) bf16 / (1, C) f32
                  o_ref):
    x_q = x_q_ref[0]                           # (TQ, C) f32 query rows of this tile
    x_kv = x_kv_ref[0]                         # (T,  C) f32 full sequence
    T, C = x_kv.shape
    hd = C // n_head
    qt = pl.program_id(1)

    # ---------------- attention branch ----------------
    h_q = _layernorm(x_q, ln1_w_ref[...], ln1_b_ref[...])            # (TQ, C)
    h_kv = _layernorm(x_kv, ln1_w_ref[...], ln1_b_ref[...])          # (T,  C)

    # Full-width MXU projections (1/sqrt(hd) already folded into wq/bq).
    q = (jnp.dot(h_q.astype(jnp.bfloat16), wq_ref[...],
                 preferred_element_type=jnp.float32)
         + bq_ref[...]).astype(jnp.bfloat16)                         # (TQ, C)
    kv = (jnp.dot(h_kv.astype(jnp.bfloat16), wkv_ref[...],
                  preferred_element_type=jnp.float32)
          + bkv_ref[...]).astype(jnp.bfloat16)                       # (T, 2C)

    # Causal mask for this q tile (global query row = qt*tq + local row).
    row = qt * tq + lax.broadcasted_iota(jnp.int32, (tq, T), 0)
    col = lax.broadcasted_iota(jnp.int32, (tq, T), 1)
    causal = col <= row

    # Per-head score / PV matmuls: hd-wide operands only live transiently here.
    # The head sum of the output projection accumulates into y (TQ, C) f32.
    y = jnp.zeros((tq, C), jnp.float32)
    for n in range(n_head):
        qn = q[:, n * hd:(n + 1) * hd]                     # (TQ, hd)
        kn = kv[:, n * hd:(n + 1) * hd]                    # (T,  hd)
        vn = kv[:, C + n * hd:C + (n + 1) * hd]            # (T,  hd)

        s = jnp.einsum('qd,kd->qk', qn, kn,
                       preferred_element_type=jnp.float32)            # (TQ, T)
        s = jnp.where(causal, s, -1e30)                    # finite neg mask
        m = jnp.max(s, axis=-1, keepdims=True)
        p = jnp.exp(s - m)                                 # f32 exp (v5e-safe)
        l = jnp.sum(p, axis=-1, keepdims=True)

        yn = jnp.dot(p.astype(jnp.bfloat16), vn,
                     preferred_element_type=jnp.float32)               # (TQ, hd)
        yn = yn * pl.reciprocal(l, approx=True)            # normalize AFTER PV

        y = y + jnp.dot(yn.astype(jnp.bfloat16), wproj_ref[n],
                        preferred_element_type=jnp.float32)            # (TQ, C)

    y = y + bproj_ref[...]
    x1 = x_q + y                                                       # residual 1

    # ---------------- MLP branch (wide matmuls) ----------------
    h2 = _layernorm(x1, ln2_w_ref[...], ln2_b_ref[...])
    f = jnp.dot(h2.astype(jnp.bfloat16), wfc_ref[...],
                preferred_element_type=jnp.float32) + bfc_ref[...]     # (TQ, 4C)
    f = _gelu_tanh(f)
    f = jnp.dot(f.astype(jnp.bfloat16), wmlp_ref[...],
                preferred_element_type=jnp.float32) + bmlp_ref[...]    # (TQ, C)
    o_ref[0] = x1 + f                                                  # residual 2


def _vmem_limit_bytes(T, tq, C):
    weights = 2 * (C * C + 2 * C * C + C * C + 4 * C * C + 4 * C * C)  # bf16
    acts = 4 * (8 * tq * C          # x_q blocks, h_q, q, y, x1, h2, out blocks
                + 8 * T * C         # x_kv blocks, h_kv, kv (f32 + bf16 copies)
                + 4 * tq * T        # per-head scores + probs + slack
                + 3 * tq * 4 * C)   # MLP hidden (f32 + bf16 + slack)
    est = weights + acts + (4 << 20)
    try:
        cap = int(getattr(pltpu.get_tpu_info(), "vmem_capacity_bytes", 128 << 20))
    except Exception:
        cap = 64 << 20
    cap = min(cap, 128 << 20)
    return int(min(max(2 * est, 32 << 20), cap - (2 << 20)))


_PARAM_ORDER = ("ln1_w", "ln1_b", "w_q", "b_q", "w_kv", "b_kv",
                "w_proj_h", "b_proj", "ln2_w", "ln2_b",
                "w_fc", "b_fc", "w_mlp", "b_mlp")


def gpt2_block(x, kparams, n_head, tq=None):
    """x: (B, T, C) float32.  kparams: output of prepare_params()."""
    B, T, C = x.shape
    if tq is None:
        tq = min(T, 128)
    assert T % tq == 0 and (tq % 8 == 0 or tq == T)
    ordered = [kparams[k] for k in _PARAM_ORDER]

    x_q_spec = pl.BlockSpec((1, tq, C), lambda b, t: (b, t, 0))
    x_kv_spec = pl.BlockSpec((1, T, C), lambda b, t: (b, 0, 0))
    # Weights are grid-invariant: single untiled copy resident in VMEM
    # (no per-input double buffering).
    weight_spec = pl.BlockSpec(memory_space=pltpu.MemorySpace.VMEM)

    return pl.pallas_call(
        functools.partial(_block_kernel, n_head, tq),
        out_shape=jax.ShapeDtypeStruct((B, T, C), jnp.float32),
        grid_spec=pltpu.PrefetchScalarGridSpec(
            num_scalar_prefetch=0,
            grid=(B, T // tq),
            in_specs=[x_q_spec, x_kv_spec] + [weight_spec] * len(ordered),
            out_specs=pl.BlockSpec((1, tq, C), lambda b, t: (b, t, 0)),
        ),
        compiler_params=pltpu.CompilerParams(
            dimension_semantics=("parallel", "parallel"),
            vmem_limit_bytes=_vmem_limit_bytes(T, tq, C),
        ),
    )(x, x, *ordered)


def init_params(key, n_embd):
    """PyTorch-equivalent params (f32, Linear weights stored (in, out))."""
    C = n_embd
    ks = jax.random.split(key, 8)
    s = 0.02
    return {
        "ln1_w": jnp.ones((1, C), jnp.float32),
        "ln1_b": jnp.zeros((1, C), jnp.float32),
        "w_qkv": s * jax.random.normal(ks[0], (C, 3 * C), jnp.float32),
        "b_qkv": s * jax.random.normal(ks[1], (1, 3 * C), jnp.float32),
        "w_attn_proj": s * jax.random.normal(ks[2], (C, C), jnp.float32),
        "b_attn_proj": s * jax.random.normal(ks[3], (1, C), jnp.float32),
        "ln2_w": jnp.ones((1, C), jnp.float32),
        "ln2_b": jnp.zeros((1, C), jnp.float32),
        "w_fc": s * jax.random.normal(ks[4], (C, 4 * C), jnp.float32),
        "b_fc": s * jax.random.normal(ks[5], (1, 4 * C), jnp.float32),
        "w_mlp_proj": s * jax.random.normal(ks[6], (4 * C, C), jnp.float32),
        "b_mlp_proj": s * jax.random.normal(ks[7], (1, C), jnp.float32),
    }


def prepare_params(params, n_head):
    """One-time host-side transform into the kernel layout:
      * QKV weights split into a Q projection (C,C) and a fused KV projection
        (C,2C) so every projection matmul is full-lane-width,
      * the attention output projection reshaped per head (NH, hd, C) so the
        head sum accumulates on the MXU path,
      * matmul weights cast to bf16 (biases / LN params stay f32),
      * 1/sqrt(head_dim) attention scale folded into the Q projection."""
    C = params["w_qkv"].shape[0]
    hd = C // n_head
    scale = 1.0 / math.sqrt(hd)

    w_q = params["w_qkv"][:, :C] * scale
    b_q = params["b_qkv"][:, :C] * scale
    w_kv = params["w_qkv"][:, C:]
    b_kv = params["b_qkv"][:, C:]

    # (C, C) -> (NH, hd, C): rows n*hd..(n+1)*hd of the concat input dim.
    w_proj_h = params["w_attn_proj"].reshape(n_head, hd, C)

    return {
        "ln1_w": params["ln1_w"].astype(jnp.float32),
        "ln1_b": params["ln1_b"].astype(jnp.float32),
        "w_q": w_q.astype(jnp.bfloat16),
        "b_q": b_q.astype(jnp.float32),
        "w_kv": w_kv.astype(jnp.bfloat16),
        "b_kv": b_kv.astype(jnp.float32),
        "w_proj_h": w_proj_h.astype(jnp.bfloat16),
        "b_proj": params["b_attn_proj"].astype(jnp.float32),
        "ln2_w": params["ln2_w"].astype(jnp.float32),
        "ln2_b": params["ln2_b"].astype(jnp.float32),
        "w_fc": params["w_fc"].astype(jnp.bfloat16),
        "b_fc": params["b_fc"].astype(jnp.float32),
        "w_mlp": params["w_mlp_proj"].astype(jnp.bfloat16),
        "b_mlp": params["b_mlp_proj"].astype(jnp.float32),
    }


def _block_reference(x, params, n_head):
    """Pure-JAX f32 reference of the PyTorch Block forward."""
    B, T, C = x.shape
    hd = C // n_head

    def ln(h, w, b):
        mu = jnp.mean(h, axis=-1, keepdims=True)
        var = jnp.mean(jnp.square(h - mu), axis=-1, keepdims=True)
        return (h - mu) * lax.rsqrt(var + LN_EPS) * w + b

    h = ln(x, params["ln1_w"][0], params["ln1_b"][0])
    qkv = h @ params["w_qkv"] + params["b_qkv"][0]
    q, k, v = jnp.split(qkv, 3, axis=-1)

    def split_heads(t):
        return t.reshape(B, T, n_head, hd).transpose(0, 2, 1, 3)

    q, k, v = split_heads(q), split_heads(k), split_heads(v)
    s = (q @ k.transpose(0, 1, 3, 2)) / math.sqrt(hd)
    mask = jnp.tril(jnp.ones((T, T), bool))
    s = jnp.where(mask, s, -jnp.inf)
    p = jax.nn.softmax(s, axis=-1)
    y = (p @ v).transpose(0, 2, 1, 3).reshape(B, T, C)
    y = y @ params["w_attn_proj"] + params["b_attn_proj"][0]
    x = x + y
    h2 = ln(x, params["ln2_w"][0], params["ln2_b"][0])
    f = h2 @ params["w_fc"] + params["b_fc"][0]
    f = jax.nn.gelu(f, approximate=True)
    f = f @ params["w_mlp_proj"] + params["b_mlp_proj"][0]
    return x + f


if __name__ == "__main__":
    # Small, lane-dense shapes: batch=2, seq=128, n_embd=128, heads=4.
    B, T, C, NH = 2, 128, 128, 4
    key = jax.random.PRNGKey(0)
    kx, kp = jax.random.split(key)
    x = jax.random.normal(kx, (B, T, C), jnp.float32)
    params = init_params(kp, C)
    kparams = prepare_params(params, NH)

    out = gpt2_block(x, kparams, n_head=NH, tq=64)   # grid (2, 2)
    out = jax.block_until_ready(out)

    assert out.shape == (B, T, C)
    assert jnp.all(jnp.isfinite(out))

    ref = _block_reference(x, params, NH)
    err = float(jnp.max(jnp.abs(out - ref)))
    assert err < 5e-2, f"max abs err {err}"

    print("KERNEL_OK")
</pallas_src>

<mosaic_0001>
module attributes {stable_mosaic.version = 11 : i64} {
  func.func @_block_kernel(%arg0: i32, %arg1: i32, %arg2: memref<1x64x128xf32, #tpu.memory_space<vmem>>, %arg3: memref<1x128x128xf32, #tpu.memory_space<vmem>>, %arg4: memref<1x128xf32, #tpu.memory_space<vmem>>, %arg5: memref<1x128xf32, #tpu.memory_space<vmem>>, %arg6: memref<128x128xbf16, #tpu.memory_space<vmem>>, %arg7: memref<1x128xf32, #tpu.memory_space<vmem>>, %arg8: memref<128x256xbf16, #tpu.memory_space<vmem>>, %arg9: memref<1x256xf32, #tpu.memory_space<vmem>>, %arg10: memref<4x32x128xbf16, #tpu.memory_space<vmem>>, %arg11: memref<1x128xf32, #tpu.memory_space<vmem>>, %arg12: memref<1x128xf32, #tpu.memory_space<vmem>>, %arg13: memref<1x128xf32, #tpu.memory_space<vmem>>, %arg14: memref<128x512xbf16, #tpu.memory_space<vmem>>, %arg15: memref<1x512xf32, #tpu.memory_space<vmem>>, %arg16: memref<512x128xbf16, #tpu.memory_space<vmem>>, %arg17: memref<1x128xf32, #tpu.memory_space<vmem>>, %arg18: memref<1x64x128xf32, #tpu.memory_space<vmem>>) attributes {dimension_semantics = [#tpu.dimension_semantics<parallel>, #tpu.dimension_semantics<parallel>], iteration_bounds = array<i64: 2, 2>, scalar_prefetch = 0 : i64, scratch_operands = 0 : i64, tpu.core_type = #tpu.core_type<tc>, window_params = [{transform_indices = @transform_0, window_bounds = array<i64: 1, 64, 128>}, {transform_indices = @transform_1, window_bounds = array<i64: 1, 128, 128>}, {pipeline_mode = #tpu.pipeline_mode<synchronous>, transform_indices = @transform_2, window_bounds = array<i64: 1, 128>}, {pipeline_mode = #tpu.pipeline_mode<synchronous>, transform_indices = @transform_3, window_bounds = array<i64: 1, 128>}, {pipeline_mode = #tpu.pipeline_mode<synchronous>, transform_indices = @transform_4, window_bounds = array<i64: 128, 128>}, {pipeline_mode = #tpu.pipeline_mode<synchronous>, transform_indices = @transform_5, window_bounds = array<i64: 1, 128>}, {pipeline_mode = #tpu.pipeline_mode<synchronous>, transform_indices = @transform_6, window_bounds = array<i64: 128, 256>}, {pipeline_mode = #tpu.pipeline_mode<synchronous>, transform_indices = @transform_7, window_bounds = array<i64: 1, 256>}, {pipeline_mode = #tpu.pipeline_mode<synchronous>, transform_indices = @transform_8, window_bounds = array<i64: 4, 32, 128>}, {pipeline_mode = #tpu.pipeline_mode<synchronous>, transform_indices = @transform_9, window_bounds = array<i64: 1, 128>}, {pipeline_mode = #tpu.pipeline_mode<synchronous>, transform_indices = @transform_10, window_bounds = array<i64: 1, 128>}, {pipeline_mode = #tpu.pipeline_mode<synchronous>, transform_indices = @transform_11, window_bounds = array<i64: 1, 128>}, {pipeline_mode = #tpu.pipeline_mode<synchronous>, transform_indices = @transform_12, window_bounds = array<i64: 128, 512>}, {pipeline_mode = #tpu.pipeline_mode<synchronous>, transform_indices = @transform_13, window_bounds = array<i64: 1, 512>}, {pipeline_mode = #tpu.pipeline_mode<synchronous>, transform_indices = @transform_14, window_bounds = array<i64: 512, 128>}, {pipeline_mode = #tpu.pipeline_mode<synchronous>, transform_indices = @transform_15, window_bounds = array<i64: 1, 128>}, {transform_indices = @transform_16, window_bounds = array<i64: 1, 64, 128>}]} {
    %c0 = arith.constant 0 : index
    %c0_0 = arith.constant 0 : index
    %c0_1 = arith.constant 0 : index
    %0 = vector.load %arg2[%c0, %c0_0, %c0_1] : memref<1x64x128xf32, #tpu.memory_space<vmem>>, vector<1x64x128xf32>
    %1 = vector.shape_cast %0 : vector<1x64x128xf32> to vector<64x128xf32>
    %c0_2 = arith.constant 0 : index
    %c0_3 = arith.constant 0 : index
    %c0_4 = arith.constant 0 : index
    %2 = vector.load %arg3[%c0_2, %c0_3, %c0_4] : memref<1x128x128xf32, #tpu.memory_space<vmem>>, vector<1x128x128xf32>
    %3 = vector.shape_cast %2 : vector<1x128x128xf32> to vector<128x128xf32>
    %c0_5 = arith.constant 0 : index
    %c0_6 = arith.constant 0 : index
    %4 = vector.load %arg4[%c0_5, %c0_6] : memref<1x128xf32, #tpu.memory_space<vmem>>, vector<1x128xf32>
    %c0_7 = arith.constant 0 : index
    %c0_8 = arith.constant 0 : index
    %5 = vector.load %arg5[%c0_7, %c0_8] : memref<1x128xf32, #tpu.memory_space<vmem>>, vector<1x128xf32>
    %cst = arith.constant dense<0.000000e+00> : vector<64xf32>
    %6 = vector.multi_reduction <add>, %1, %cst [1] : vector<64x128xf32> to vector<64xf32>
    %7 = vector.shape_cast %6 : vector<64xf32> to vector<64x1xf32>
    %cst_9 = arith.constant 1.280000e+02 : f32
    %8 = vector.broadcast %cst_9 : f32 to vector<64x1xf32>
    %9 = arith.divf %7, %8 : vector<64x1xf32>
    %10 = arith.mulf %1, %1 : vector<64x128xf32>
    %cst_10 = arith.constant dense<0.000000e+00> : vector<64xf32>
    %11 = vector.multi_reduction <add>, %10, %cst_10 [1] : vector<64x128xf32> to vector<64xf32>
    %12 = vector.shape_cast %11 : vector<64xf32> to vector<64x1xf32>
    %cst_11 = arith.constant 1.280000e+02 : f32
    %13 = vector.broadcast %cst_11 : f32 to vector<64x1xf32>
    %14 = arith.divf %12, %13 : vector<64x1xf32>
    %15 = arith.mulf %9, %9 : vector<64x1xf32>
    %16 = arith.subf %14, %15 : vector<64x1xf32>
    %17 = vector.broadcast %9 : vector<64x1xf32> to vector<64x128xf32>
    %18 = arith.subf %1, %17 : vector<64x128xf32>
    %cst_12 = arith.constant 9.99999974E-6 : f32
    %19 = vector.broadcast %cst_12 : f32 to vector<64x1xf32>
    %20 = arith.addf %16, %19 : vector<64x1xf32>
    %21 = math.rsqrt %20 : vector<64x1xf32>
    %22 = vector.broadcast %21 : vector<64x1xf32> to vector<64x128xf32>
    %23 = arith.mulf %18, %22 : vector<64x128xf32>
    %24 = vector.broadcast %4 : vector<1x128xf32> to vector<64x128xf32>
    %25 = arith.mulf %23, %24 : vector<64x128xf32>
    %26 = vector.broadcast %5 : vector<1x128xf32> to vector<64x128xf32>
    %27 = arith.addf %25, %26 : vector<64x128xf32>
    %c0_13 = arith.constant 0 : index
    %c0_14 = arith.constant 0 : index
    %28 = vector.load %arg4[%c0_13, %c0_14] : memref<1x128xf32, #tpu.memory_space<vmem>>, vector<1x128xf32>
    %c0_15 = arith.constant 0 : index
    %c0_16 = arith.constant 0 : index
    %29 = vector.load %arg5[%c0_15, %c0_16] : memref<1x128xf32, #tpu.memory_space<vmem>>, vector<1x128xf32>
    %cst_17 = arith.constant dense<0.000000e+00> : vector<128xf32>
    %30 = vector.multi_reduction <add>, %3, %cst_17 [1] : vector<128x128xf32> to vector<128xf32>
    %31 = vector.shape_cast %30 : vector<128xf32> to vector<128x1xf32>
    %cst_18 = arith.constant 1.280000e+02 : f32
    %32 = vector.broadcast %cst_18 : f32 to vector<128x1xf32>
    %33 = arith.divf %31, %32 : vector<128x1xf32>
    %34 = arith.mulf %3, %3 : vector<128x128xf32>
    %cst_19 = arith.constant dense<0.000000e+00> : vector<128xf32>
    %35 = vector.multi_reduction <add>, %34, %cst_19 [1] : vector<128x128xf32> to vector<128xf32>
    %36 = vector.shape_cast %35 : vector<128xf32> to vector<128x1xf32>
    %cst_20 = arith.constant 1.280000e+02 : f32
    %37 = vector.broadcast %cst_20 : f32 to vector<128x1xf32>
    %38 = arith.divf %36, %37 : vector<128x1xf32>
    %39 = arith.mulf %33, %33 : vector<128x1xf32>
    %40 = arith.subf %38, %39 : vector<128x1xf32>
    %41 = vector.broadcast %33 : vector<128x1xf32> to vector<128x128xf32>
    %42 = arith.subf %3, %41 : vector<128x128xf32>
    %cst_21 = arith.constant 9.99999974E-6 : f32
    %43 = vector.broadcast %cst_21 : f32 to vector<128x1xf32>
    %44 = arith.addf %40, %43 : vector<128x1xf32>
    %45 = math.rsqrt %44 : vector<128x1xf32>
    %46 = vector.broadcast %45 : vector<128x1xf32> to vector<128x128xf32>
    %47 = arith.mulf %42, %46 : vector<128x128xf32>
    %48 = vector.broadcast %28 : vector<1x128xf32> to vector<128x128xf32>
    %49 = arith.mulf %47, %48 : vector<128x128xf32>
    %50 = vector.broadcast %29 : vector<1x128xf32> to vector<128x128xf32>
    %51 = arith.addf %49, %50 : vector<128x128xf32>
    %52 = arith.truncf %27 : vector<64x128xf32> to vector<64x128xbf16>
    %c0_22 = arith.constant 0 : index
    %c0_23 = arith.constant 0 : index
    %53 = vector.load %arg6[%c0_22, %c0_23] : memref<128x128xbf16, #tpu.memory_space<vmem>>, vector<128x128xbf16>
    %cst_24 = arith.constant dense<0.000000e+00> : vector<64x128xf32>
    %54 = tpu.matmul %52, %53, %cst_24 {dimension_numbers = #tpu.dot_dimension_numbers<[1], [0], [0], [1], [0, 0, 1, 1], [], []>} : vector<64x128xbf16>, vector<128x128xbf16>, vector<64x128xf32> -> vector<64x128xf32>
    %c0_25 = arith.constant 0 : index
    %c0_26 = arith.constant 0 : index
    %55 = vector.load %arg7[%c0_25, %c0_26] : memref<1x128xf32, #tpu.memory_space<vmem>>, vector<1x128xf32>
    %56 = vector.broadcast %55 : vector<1x128xf32> to vector<64x128xf32>
    %57 = arith.addf %54, %56 : vector<64x128xf32>
    %58 = arith.truncf %57 : vector<64x128xf32> to vector<64x128xbf16>
    %59 = arith.truncf %51 : vector<128x128xf32> to vector<128x128xbf16>
    %c0_27 = arith.constant 0 : index
    %c0_28 = arith.constant 0 : index
    %60 = vector.load %arg8[%c0_27, %c0_28] : memref<128x256xbf16, #tpu.memory_space<vmem>>, vector<128x256xbf16>
    %cst_29 = arith.constant dense<0.000000e+00> : vector<128x256xf32>
    %61 = tpu.matmul %59, %60, %cst_29 {dimension_numbers = #tpu.dot_dimension_numbers<[1], [0], [0], [1], [0, 0, 1, 1], [], []>} : vector<128x128xbf16>, vector<128x256xbf16>, vector<128x256xf32> -> vector<128x256xf32>
    %c0_30 = arith.constant 0 : index
    %c0_31 = arith.constant 0 : index
    %62 = vector.load %arg9[%c0_30, %c0_31] : memref<1x256xf32, #tpu.memory_space<vmem>>, vector<1x256xf32>
    %63 = vector.broadcast %62 : vector<1x256xf32> to vector<128x256xf32>
    %64 = arith.addf %61, %63 : vector<128x256xf32>
    %65 = arith.truncf %64 : vector<128x256xf32> to vector<128x256xbf16>
    %c64_i32 = arith.constant 64 : i32
    %66 = arith.muli %arg1, %c64_i32 : i32
    %67 = tpu.iota {dimensions = array<i32: 0>} : vector<64x128xi32>
    %68 = vector.broadcast %66 : i32 to vector<64x128xi32>
    %69 = arith.addi %68, %67 : vector<64x128xi32>
    %70 = tpu.iota {dimensions = array<i32: 1>} : vector<64x128xi32>
    %71 = arith.cmpi sle, %70, %69 : vector<64x128xi32>
    %cst_32 = arith.constant 0.000000e+00 : f32
    %72 = vector.broadcast %cst_32 : f32 to vector<64x128xf32>
    %73 = vector.extract_strided_slice %58 {offsets = [0, 0], sizes = [64, 32], strides = [1, 1]} : vector<64x128xbf16> to vector<64x32xbf16>
    %74 = vector.extract_strided_slice %65 {offsets = [0, 0], sizes = [128, 32], strides = [1, 1]} : vector<128x256xbf16> to vector<128x32xbf16>
    %75 = vector.extract_strided_slice %65 {offsets = [0, 128], sizes = [128, 32], strides = [1, 1]} : vector<128x256xbf16> to vector<128x32xbf16>
    "tpu.trace_start"() <{level = 10 : i32, message = "qd,kd->qk"}> : () -> ()
    %cst_33 = arith.constant dense<0.000000e+00> : vector<64x128xf32>
    %76 = tpu.matmul %73, %74, %cst_33 {dimension_numbers = #tpu.dot_dimension_numbers<[1], [1], [0], [0], [0, 0, 1, 0], [], []>} : vector<64x32xbf16>, vector<128x32xbf16>, vector<64x128xf32> -> vector<64x128xf32>
    %cst_34 = arith.constant -1.000000e+30 : f32
    "tpu.trace_stop"() : () -> ()
    %77 = vector.broadcast %cst_34 : f32 to vector<64x128xf32>
    %78 = arith.select %71, %76, %77 : vector<64x128xi1>, vector<64x128xf32>
    %cst_35 = arith.constant dense<0xFF800000> : vector<64xf32>
    %79 = vector.multi_reduction <maximumf>, %78, %cst_35 [1] : vector<64x128xf32> to vector<64xf32>
    %80 = vector.shape_cast %79 : vector<64xf32> to vector<64x1xf32>
    %81 = vector.broadcast %80 : vector<64x1xf32> to vector<64x128xf32>
    %82 = arith.subf %78, %81 : vector<64x128xf32>
    %83 = math.exp %82 : vector<64x128xf32>
    %cst_36 = arith.constant dense<0.000000e+00> : vector<64xf32>
    %84 = vector.multi_reduction <add>, %83, %cst_36 [1] : vector<64x128xf32> to vector<64xf32>
    %85 = vector.shape_cast %84 : vector<64xf32> to vector<64x1xf32>
    %86 = arith.truncf %83 : vector<64x128xf32> to vector<64x128xbf16>
    %cst_37 = arith.constant dense<0.000000e+00> : vector<64x32xf32>
    %87 = tpu.matmul %86, %75, %cst_37 {dimension_numbers = #tpu.dot_dimension_numbers<[1], [0], [0], [1], [0, 0, 1, 1], [], []>} : vector<64x128xbf16>, vector<128x32xbf16>, vector<64x32xf32> -> vector<64x32xf32>
    %88 = tpu.reciprocal %85 {approx = true} : vector<64x1xf32> -> vector<64x1xf32>
    %89 = vector.broadcast %88 : vector<64x1xf32> to vector<64x32xf32>
    %90 = arith.mulf %87, %89 : vector<64x32xf32>
    %91 = arith.truncf %90 : vector<64x32xf32> to vector<64x32xbf16>
    %c0_38 = arith.constant 0 : index
    %c0_39 = arith.constant 0 : index
    %c0_40 = arith.constant 0 : index
    %92 = vector.load %arg10[%c0_38, %c0_39, %c0_40] : memref<4x32x128xbf16, #tpu.memory_space<vmem>>, vector<1x32x128xbf16>
    %93 = vector.shape_cast %92 : vector<1x32x128xbf16> to vector<32x128xbf16>
    %cst_41 = arith.constant dense<0.000000e+00> : vector<64x128xf32>
    %94 = tpu.matmul %91, %93, %cst_41 {dimension_numbers = #tpu.dot_dimension_numbers<[1], [0], [0], [1], [0, 0, 1, 1], [], []>} : vector<64x32xbf16>, vector<32x128xbf16>, vector<64x128xf32> -> vector<64x128xf32>
    %95 = arith.addf %72, %94 : vector<64x128xf32>
    %96 = vector.extract_strided_slice %58 {offsets = [0, 32], sizes = [64, 32], strides = [1, 1]} : vector<64x128xbf16> to vector<64x32xbf16>
    %97 = vector.extract_strided_slice %65 {offsets = [0, 32], sizes = [128, 32], strides = [1, 1]} : vector<128x256xbf16> to vector<128x32xbf16>
    %98 = vector.extract_strided_slice %65 {offsets = [0, 160], sizes = [128, 32], strides = [1, 1]} : vector<128x256xbf16> to vector<128x32xbf16>
    "tpu.trace_start"() <{level = 10 : i32, message = "qd,kd->qk"}> : () -> ()
    %cst_42 = arith.constant dense<0.000000e+00> : vector<64x128xf32>
    %99 = tpu.matmul %96, %97, %cst_42 {dimension_numbers = #tpu.dot_dimension_numbers<[1], [1], [0], [0], [0, 0, 1, 0], [], []>} : vector<64x32xbf16>, vector<128x32xbf16>, vector<64x128xf32> -> vector<64x128xf32>
    %cst_43 = arith.constant -1.000000e+30 : f32
    "tpu.trace_stop"() : () -> ()
    %100 = vector.broadcast %cst_43 : f32 to vector<64x128xf32>
    %101 = arith.select %71, %99, %100 : vector<64x128xi1>, vector<64x128xf32>
    %cst_44 = arith.constant dense<0xFF800000> : vector<64xf32>
    %102 = vector.multi_reduction <maximumf>, %101, %cst_44 [1] : vector<64x128xf32> to vector<64xf32>
    %103 = vector.shape_cast %102 : vector<64xf32> to vector<64x1xf32>
    %104 = vector.broadcast %103 : vector<64x1xf32> to vector<64x128xf32>
    %105 = arith.subf %101, %104 : vector<64x128xf32>
    %106 = math.exp %105 : vector<64x128xf32>
    %cst_45 = arith.constant dense<0.000000e+00> : vector<64xf32>
    %107 = vector.multi_reduction <add>, %106, %cst_45 [1] : vector<64x128xf32> to vector<64xf32>
    %108 = vector.shape_cast %107 : vector<64xf32> to vector<64x1xf32>
    %109 = arith.truncf %106 : vector<64x128xf32> to vector<64x128xbf16>
    %cst_46 = arith.constant dense<0.000000e+00> : vector<64x32xf32>
    %110 = tpu.matmul %109, %98, %cst_46 {dimension_numbers = #tpu.dot_dimension_numbers<[1], [0], [0], [1], [0, 0, 1, 1], [], []>} : vector<64x128xbf16>, vector<128x32xbf16>, vector<64x32xf32> -> vector<64x32xf32>
    %111 = tpu.reciprocal %108 {approx = true} : vector<64x1xf32> -> vector<64x1xf32>
    %112 = vector.broadcast %111 : vector<64x1xf32> to vector<64x32xf32>
    %113 = arith.mulf %110, %112 : vector<64x32xf32>
    %114 = arith.truncf %113 : vector<64x32xf32> to vector<64x32xbf16>
    %c1 = arith.constant 1 : index
    %c0_47 = arith.constant 0 : index
    %c0_48 = arith.constant 0 : index
    %115 = vector.load %arg10[%c1, %c0_47, %c0_48] : memref<4x32x128xbf16, #tpu.memory_space<vmem>>, vector<1x32x128xbf16>
    %116 = vector.shape_cast %115 : vector<1x32x128xbf16> to vector<32x128xbf16>
    %cst_49 = arith.constant dense<0.000000e+00> : vector<64x128xf32>
    %117 = tpu.matmul %114, %116, %cst_49 {dimension_numbers = #tpu.dot_dimension_numbers<[1], [0], [0], [1], [0, 0, 1, 1], [], []>} : vector<64x32xbf16>, vector<32x128xbf16>, vector<64x128xf32> -> vector<64x128xf32>
    %118 = arith.addf %95, %117 : vector<64x128xf32>
    %119 = vector.extract_strided_slice %58 {offsets = [0, 64], sizes = [64, 32], strides = [1, 1]} : vector<64x128xbf16> to vector<64x32xbf16>
    %120 = vector.extract_strided_slice %65 {offsets = [0, 64], sizes = [128, 32], strides = [1, 1]} : vector<128x256xbf16> to vector<128x32xbf16>
    %121 = vector.extract_strided_slice %65 {offsets = [0, 192], sizes = [128, 32], strides = [1, 1]} : vector<128x256xbf16> to vector<128x32xbf16>
    "tpu.trace_start"() <{level = 10 : i32, message = "qd,kd->qk"}> : () -> ()
    %cst_50 = arith.constant dense<0.000000e+00> : vector<64x128xf32>
    %122 = tpu.matmul %119, %120, %cst_50 {dimension_numbers = #tpu.dot_dimension_numbers<[1], [1], [0], [0], [0, 0, 1, 0], [], []>} : vector<64x32xbf16>, vector<128x32xbf16>, vector<64x128xf32> -> vector<64x128xf32>
    %cst_51 = arith.constant -1.000000e+30 : f32
    "tpu.trace_stop"() : () -> ()
    %123 = vector.broadcast %cst_51 : f32 to vector<64x128xf32>
    %124 = arith.select %71, %122, %123 : vector<64x128xi1>, vector<64x128xf32>
    %cst_52 = arith.constant dense<0xFF800000> : vector<64xf32>
    %125 = vector.multi_reduction <maximumf>, %124, %cst_52 [1] : vector<64x128xf32> to vector<64xf32>
    %126 = vector.shape_cast %125 : vector<64xf32> to vector<64x1xf32>
    %127 = vector.broadcast %126 : vector<64x1xf32> to vector<64x128xf32>
    %128 = arith.subf %124, %127 : vector<64x128xf32>
    %129 = math.exp %128 : vector<64x128xf32>
    %cst_53 = arith.constant dense<0.000000e+00> : vector<64xf32>
    %130 = vector.multi_reduction <add>, %129, %cst_53 [1] : vector<64x128xf32> to vector<64xf32>
    %131 = vector.shape_cast %130 : vector<64xf32> to vector<64x1xf32>
    %132 = arith.truncf %129 : vector<64x128xf32> to vector<64x128xbf16>
    %cst_54 = arith.constant dense<0.000000e+00> : vector<64x32xf32>
    %133 = tpu.matmul %132, %121, %cst_54 {dimension_numbers = #tpu.dot_dimension_numbers<[1], [0], [0], [1], [0, 0, 1, 1], [], []>} : vector<64x128xbf16>, vector<128x32xbf16>, vector<64x32xf32> -> vector<64x32xf32>
    %134 = tpu.reciprocal %131 {approx = true} : vector<64x1xf32> -> vector<64x1xf32>
    %135 = vector.broadcast %134 : vector<64x1xf32> to vector<64x32xf32>
    %136 = arith.mulf %133, %135 : vector<64x32xf32>
    %137 = arith.truncf %136 : vector<64x32xf32> to vector<64x32xbf16>
    %c2 = arith.constant 2 : index
    %c0_55 = arith.constant 0 : index
    %c0_56 = arith.constant 0 : index
    %138 = vector.load %arg10[%c2, %c0_55, %c0_56] : memref<4x32x128xbf16, #tpu.memory_space<vmem>>, vector<1x32x128xbf16>
    %139 = vector.shape_cast %138 : vector<1x32x128xbf16> to vector<32x128xbf16>
    %cst_57 = arith.constant dense<0.000000e+00> : vector<64x128xf32>
    %140 = tpu.matmul %137, %139, %cst_57 {dimension_numbers = #tpu.dot_dimension_numbers<[1], [0], [0], [1], [0, 0, 1, 1], [], []>} : vector<64x32xbf16>, vector<32x128xbf16>, vector<64x128xf32> -> vector<64x128xf32>
    %141 = arith.addf %118, %140 : vector<64x128xf32>
    %142 = vector.extract_strided_slice %58 {offsets = [0, 96], sizes = [64, 32], strides = [1, 1]} : vector<64x128xbf16> to vector<64x32xbf16>
    %143 = vector.extract_strided_slice %65 {offsets = [0, 96], sizes = [128, 32], strides = [1, 1]} : vector<128x256xbf16> to vector<128x32xbf16>
    %144 = vector.extract_strided_slice %65 {offsets = [0, 224], sizes = [128, 32], strides = [1, 1]} : vector<128x256xbf16> to vector<128x32xbf16>
    "tpu.trace_start"() <{level = 10 : i32, message = "qd,kd->qk"}> : () -> ()
    %cst_58 = arith.constant dense<0.000000e+00> : vector<64x128xf32>
    %145 = tpu.matmul %142, %143, %cst_58 {dimension_numbers = #tpu.dot_dimension_numbers<[1], [1], [0], [0], [0, 0, 1, 0], [], []>} : vector<64x32xbf16>, vector<128x32xbf16>, vector<64x128xf32> -> vector<64x128xf32>
    %cst_59 = arith.constant -1.000000e+30 : f32
    "tpu.trace_stop"() : () -> ()
    %146 = vector.broadcast %cst_59 : f32 to vector<64x128xf32>
    %147 = arith.select %71, %145, %146 : vector<64x128xi1>, vector<64x128xf32>
    %cst_60 = arith.constant dense<0xFF800000> : vector<64xf32>
    %148 = vector.multi_reduction <maximumf>, %147, %cst_60 [1] : vector<64x128xf32> to vector<64xf32>
    %149 = vector.shape_cast %148 : vector<64xf32> to vector<64x1xf32>
    %150 = vector.broadcast %149 : vector<64x1xf32> to vector<64x128xf32>
    %151 = arith.subf %147, %150 : vector<64x128xf32>
    %152 = math.exp %151 : vector<64x128xf32>
    %cst_61 = arith.constant dense<0.000000e+00> : vector<64xf32>
    %153 = vector.multi_reduction <add>, %152, %cst_61 [1] : vector<64x128xf32> to vector<64xf32>
    %154 = vector.shape_cast %153 : vector<64xf32> to vector<64x1xf32>
    %155 = arith.truncf %152 : vector<64x128xf32> to vector<64x128xbf16>
    %cst_62 = arith.constant dense<0.000000e+00> : vector<64x32xf32>
    %156 = tpu.matmul %155, %144, %cst_62 {dimension_numbers = #tpu.dot_dimension_numbers<[1], [0], [0], [1], [0, 0, 1, 1], [], []>} : vector<64x128xbf16>, vector<128x32xbf16>, vector<64x32xf32> -> vector<64x32xf32>
    %157 = tpu.reciprocal %154 {approx = true} : vector<64x1xf32> -> vector<64x1xf32>
    %158 = vector.broadcast %157 : vector<64x1xf32> to vector<64x32xf32>
    %159 = arith.mulf %156, %158 : vector<64x32xf32>
    %160 = arith.truncf %159 : vector<64x32xf32> to vector<64x32xbf16>
    %c3 = arith.constant 3 : index
    %c0_63 = arith.constant 0 : index
    %c0_64 = arith.constant 0 : index
    %161 = vector.load %arg10[%c3, %c0_63, %c0_64] : memref<4x32x128xbf16, #tpu.memory_space<vmem>>, vector<1x32x128xbf16>
    %162 = vector.shape_cast %161 : vector<1x32x128xbf16> to vector<32x128xbf16>
    %cst_65 = arith.constant dense<0.000000e+00> : vector<64x128xf32>
    %163 = tpu.matmul %160, %162, %cst_65 {dimension_numbers = #tpu.dot_dimension_numbers<[1], [0], [0], [1], [0, 0, 1, 1], [], []>} : vector<64x32xbf16>, vector<32x128xbf16>, vector<64x128xf32> -> vector<64x128xf32>
    %164 = arith.addf %141, %163 : vector<64x128xf32>
    %c0_66 = arith.constant 0 : index
    %c0_67 = arith.constant 0 : index
    %165 = vector.load %arg11[%c0_66, %c0_67] : memref<1x128xf32, #tpu.memory_space<vmem>>, vector<1x128xf32>
    %166 = vector.broadcast %165 : vector<1x128xf32> to vector<64x128xf32>
    %167 = arith.addf %164, %166 : vector<64x128xf32>
    %168 = arith.addf %1, %167 : vector<64x128xf32>
    %c0_68 = arith.constant 0 : index
    %c0_69 = arith.constant 0 : index
    %169 = vector.load %arg12[%c0_68, %c0_69] : memref<1x128xf32, #tpu.memory_space<vmem>>, vector<1x128xf32>
    %c0_70 = arith.constant 0 : index
    %c0_71 = arith.constant 0 : index
    %170 = vector.load %arg13[%c0_70, %c0_71] : memref<1x128xf32, #tpu.memory_space<vmem>>, vector<1x128xf32>
    %cst_72 = arith.constant dense<0.000000e+00> : vector<64xf32>
    %171 = vector.multi_reduction <add>, %168, %cst_72 [1] : vector<64x128xf32> to vector<64xf32>
    %172 = vector.shape_cast %171 : vector<64xf32> to vector<64x1xf32>
    %cst_73 = arith.constant 1.280000e+02 : f32
    %173 = vector.broadcast %cst_73 : f32 to vector<64x1xf32>
    %174 = arith.divf %172, %173 : vector<64x1xf32>
    %175 = arith.mulf %168, %168 : vector<64x128xf32>
    %cst_74 = arith.constant dense<0.000000e+00> : vector<64xf32>
    %176 = vector.multi_reduction <add>, %175, %cst_74 [1] : vector<64x128xf32> to vector<64xf32>
    %177 = vector.shape_cast %176 : vector<64xf32> to vector<64x1xf32>
    %cst_75 = arith.constant 1.280000e+02 : f32
    %178 = vector.broadcast %cst_75 : f32 to vector<64x1xf32>
    %179 = arith.divf %177, %178 : vector<64x1xf32>
    %180 = arith.mulf %174, %174 : vector<64x1xf32>
    %181 = arith.subf %179, %180 : vector<64x1xf32>
    %182 = vector.broadcast %174 : vector<64x1xf32> to vector<64x128xf32>
    %183 = arith.subf %168, %182 : vector<64x128xf32>
    %cst_76 = arith.constant 9.99999974E-6 : f32
    %184 = vector.broadcast %cst_76 : f32 to vector<64x1xf32>
    %185 = arith.addf %181, %184 : vector<64x1xf32>
    %186 = math.rsqrt %185 : vector<64x1xf32>
    %187 = vector.broadcast %186 : vector<64x1xf32> to vector<64x128xf32>
    %188 = arith.mulf %183, %187 : vector<64x128xf32>
    %189 = vector.broadcast %169 : vector<1x128xf32> to vector<64x128xf32>
    %190 = arith.mulf %188, %189 : vector<64x128xf32>
    %191 = vector.broadcast %170 : vector<1x128xf32> to vector<64x128xf32>
    %192 = arith.addf %190, %191 : vector<64x128xf32>
    %193 = arith.truncf %192 : vector<64x128xf32> to vector<64x128xbf16>
    %c0_77 = arith.constant 0 : index
    %c0_78 = arith.constant 0 : index
    %194 = vector.load %arg14[%c0_77, %c0_78] : memref<128x512xbf16, #tpu.memory_space<vmem>>, vector<128x512xbf16>
    %cst_79 = arith.constant dense<0.000000e+00> : vector<64x512xf32>
    %195 = tpu.matmul %193, %194, %cst_79 {dimension_numbers = #tpu.dot_dimension_numbers<[1], [0], [0], [1], [0, 0, 1, 1], [], []>} : vector<64x128xbf16>, vector<128x512xbf16>, vector<64x512xf32> -> vector<64x512xf32>
    %c0_80 = arith.constant 0 : index
    %c0_81 = arith.constant 0 : index
    %196 = vector.load %arg15[%c0_80, %c0_81] : memref<1x512xf32, #tpu.memory_space<vmem>>, vector<1x512xf32>
    %197 = vector.broadcast %196 : vector<1x512xf32> to vector<64x512xf32>
    %198 = arith.addf %195, %197 : vector<64x512xf32>
    %cst_82 = arith.constant 5.000000e-01 : f32
    %199 = vector.broadcast %cst_82 : f32 to vector<64x512xf32>
    %200 = arith.mulf %199, %198 : vector<64x512xf32>
    %cst_83 = arith.constant 4.471500e-02 : f32
    %201 = vector.broadcast %cst_83 : f32 to vector<64x512xf32>
    %202 = arith.mulf %201, %198 : vector<64x512xf32>
    %203 = arith.mulf %202, %198 : vector<64x512xf32>
    %204 = arith.mulf %203, %198 : vector<64x512xf32>
    %205 = arith.addf %198, %204 : vector<64x512xf32>
    %cst_84 = arith.constant 0.797884583 : f32
    %206 = vector.broadcast %cst_84 : f32 to vector<64x512xf32>
    %207 = arith.mulf %206, %205 : vector<64x512xf32>
    %208 = math.tanh %207 : vector<64x512xf32>
    %cst_85 = arith.constant 1.000000e+00 : f32
    %209 = vector.broadcast %cst_85 : f32 to vector<64x512xf32>
    %210 = arith.addf %209, %208 : vector<64x512xf32>
    %211 = arith.mulf %200, %210 : vector<64x512xf32>
    %212 = arith.truncf %211 : vector<64x512xf32> to vector<64x512xbf16>
    %c0_86 = arith.constant 0 : index
    %c0_87 = arith.constant 0 : index
    %213 = vector.load %arg16[%c0_86, %c0_87] : memref<512x128xbf16, #tpu.memory_space<vmem>>, vector<512x128xbf16>
    %cst_88 = arith.constant dense<0.000000e+00> : vector<64x128xf32>
    %214 = tpu.matmul %212, %213, %cst_88 {dimension_numbers = #tpu.dot_dimension_numbers<[1], [0], [0], [1], [0, 0, 1, 1], [], []>} : vector<64x512xbf16>, vector<512x128xbf16>, vector<64x128xf32> -> vector<64x128xf32>
    %c0_89 = arith.constant 0 : index
    %c0_90 = arith.constant 0 : index
    %215 = vector.load %arg17[%c0_89, %c0_90] : memref<1x128xf32, #tpu.memory_space<vmem>>, vector<1x128xf32>
    %216 = vector.broadcast %215 : vector<1x128xf32> to vector<64x128xf32>
    %217 = arith.addf %214, %216 : vector<64x128xf32>
    %218 = arith.addf %168, %217 : vector<64x128xf32>
    %c0_91 = arith.constant 0 : index
    %c0_92 = arith.constant 0 : index
    %c0_93 = arith.constant 0 : index
    %219 = vector.load %arg18[%c0_91, %c0_92, %c0_93] : memref<1x64x128xf32, #tpu.memory_space<vmem>>, vector<1x64x128xf32>
    %220 = vector.shape_cast %219 : vector<1x64x128xf32> to vector<64x128xf32>
    %221 = vector.shape_cast %218 : vector<64x128xf32> to vector<1x64x128xf32>
    tpu.vector_store %arg18[%c0_91, %c0_92, %c0_93], %221 {strides = array<i32>} : memref<1x64x128xf32, #tpu.memory_space<vmem>>, vector<1x64x128xf32>,
    return
  }
  func.func @transform_0(%arg0: i32, %arg1: i32) -> (i32, i32, i32) {
    %c0_i32 = arith.constant 0 : i32
    %c0_i32_0 = arith.constant 0 : i32
    return %arg0, %arg1, %c0_i32 : i32, i32, i32
  }
  func.func @transform_1(%arg0: i32, %arg1: i32) -> (i32, i32, i32) {
    %c0_i32 = arith.constant 0 : i32
    %c0_i32_0 = arith.constant 0 : i32
    %c0_i32_1 = arith.constant 0 : i32
    return %arg0, %c0_i32, %c0_i32_0 : i32, i32, i32
  }
  func.func @transform_2(%arg0: i32, %arg1: i32) -> (i32, i32) {
    %c0_i32 = arith.constant 0 : i32
    %c0_i32_0 = arith.constant 0 : i32
    %c0_i32_1 = arith.constant 0 : i32
    return %c0_i32, %c0_i32_0 : i32, i32
  }
  func.func @transform_3(%arg0: i32, %arg1: i32) -> (i32, i32) {
    %c0_i32 = arith.constant 0 : i32
    %c0_i32_0 = arith.constant 0 : i32
    %c0_i32_1 = arith.constant 0 : i32
    return %c0_i32, %c0_i32_0 : i32, i32
  }
  func.func @transform_4(%arg0: i32, %arg1: i32) -> (i32, i32) {
    %c0_i32 = arith.constant 0 : i32
    %c0_i32_0 = arith.constant 0 : i32
    %c0_i32_1 = arith.constant 0 : i32
    return %c0_i32, %c0_i32_0 : i32, i32
  }
  func.func @transform_5(%arg0: i32, %arg1: i32) -> (i32, i32) {
    %c0_i32 = arith.constant 0 : i32
    %c0_i32_0 = arith.constant 0 : i32
    %c0_i32_1 = arith.constant 0 : i32
    return %c0_i32, %c0_i32_0 : i32, i32
  }
  func.func @transform_6(%arg0: i32, %arg1: i32) -> (i32, i32) {
    %c0_i32 = arith.constant 0 : i32
    %c0_i32_0 = arith.constant 0 : i32
    %c0_i32_1 = arith.constant 0 : i32
    return %c0_i32, %c0_i32_0 : i32, i32
  }
  func.func @transform_7(%arg0: i32, %arg1: i32) -> (i32, i32) {
    %c0_i32 = arith.constant 0 : i32
    %c0_i32_0 = arith.constant 0 : i32
    %c0_i32_1 = arith.constant 0 : i32
    return %c0_i32, %c0_i32_0 : i32, i32
  }
  func.func @transform_8(%arg0: i32, %arg1: i32) -> (i32, i32, i32) {
    %c0_i32 = arith.constant 0 : i32
    %c0_i32_0 = arith.constant 0 : i32
    %c0_i32_1 = arith.constant 0 : i32
    %c0_i32_2 = arith.constant 0 : i32
    return %c0_i32, %c0_i32_0, %c0_i32_1 : i32, i32, i32
  }
  func.func @transform_9(%arg0: i32, %arg1: i32) -> (i32, i32) {
    %c0_i32 = arith.constant 0 : i32
    %c0_i32_0 = arith.constant 0 : i32
    %c0_i32_1 = arith.constant 0 : i32
    return %c0_i32, %c0_i32_0 : i32, i32
  }
  func.func @transform_10(%arg0: i32, %arg1: i32) -> (i32, i32) {
    %c0_i32 = arith.constant 0 : i32
    %c0_i32_0 = arith.constant 0 : i32
    %c0_i32_1 = arith.constant 0 : i32
    return %c0_i32, %c0_i32_0 : i32, i32
  }
  func.func @transform_11(%arg0: i32, %arg1: i32) -> (i32, i32) {
    %c0_i32 = arith.constant 0 : i32
    %c0_i32_0 = arith.constant 0 : i32
    %c0_i32_1 = arith.constant 0 : i32
    return %c0_i32, %c0_i32_0 : i32, i32
  }
  func.func @transform_12(%arg0: i32, %arg1: i32) -> (i32, i32) {
    %c0_i32 = arith.constant 0 : i32
    %c0_i32_0 = arith.constant 0 : i32
    %c0_i32_1 = arith.constant 0 : i32
    return %c0_i32, %c0_i32_0 : i32, i32
  }
  func.func @transform_13(%arg0: i32, %arg1: i32) -> (i32, i32) {
    %c0_i32 = arith.constant 0 : i32
    %c0_i32_0 = arith.constant 0 : i32
    %c0_i32_1 = arith.constant 0 : i32
    return %c0_i32, %c0_i32_0 : i32, i32
  }
  func.func @transform_14(%arg0: i32, %arg1: i32) -> (i32, i32) {
    %c0_i32 = arith.constant 0 : i32
    %c0_i32_0 = arith.constant 0 : i32
    %c0_i32_1 = arith.constant 0 : i32
    return %c0_i32, %c0_i32_0 : i32, i32
  }
  func.func @transform_15(%arg0: i32, %arg1: i32) -> (i32, i32) {
    %c0_i32 = arith.constant 0 : i32
    %c0_i32_0 = arith.constant 0 : i32
    %c0_i32_1 = arith.constant 0 : i32
    return %c0_i32, %c0_i32_0 : i32, i32
  }
  func.func @transform_16(%arg0: i32, %arg1: i32) -> (i32, i32, i32) {
    %c0_i32 = arith.constant 0 : i32
    %c0_i32_0 = arith.constant 0 : i32
    return %arg0, %arg1, %c0_i32 : i32, i32, i32
  }
}

</mosaic_0001>

<llo_original>
// kernel: tpu_custom_call.1
$region0: #{tpu_custom_call.1}
  #allocation0 [shape = 'u32[]', space=smem, size = 0x4, offset = 0x4, fixed_abs, tag = 'smem constant byte address 0x4 - core index']
  #allocation1 [shape = 'u32[144,128]{1,0:T(1,128)}', space=vmem, size = 0x12000, scoped, tag = 'internal scratch']
  %s0 = inlined_call_operand.hbm [shape: f32[2,128,128], index: 0, kind: input, shape index: {}]
  %s1 = inlined_call_operand.hbm [shape: f32[2,128,128], index: 1, kind: input, shape index: {}]
  %s2 = inlined_call_operand.vmem [shape: f32[1,128], index: 2, kind: input, shape index: {}]
  %s3 = inlined_call_operand.vmem [shape: f32[1,128], index: 3, kind: input, shape index: {}]
  %s4 = inlined_call_operand.hbm [shape: bf16[128,128], index: 4, kind: input, shape index: {}]
  %s5 = inlined_call_operand.vmem [shape: f32[1,128], index: 5, kind: input, shape index: {}]
  %s6 = inlined_call_operand.hbm [shape: bf16[128,256], index: 6, kind: input, shape index: {}]
  %s7 = inlined_call_operand.vmem [shape: f32[1,256], index: 7, kind: input, shape index: {}]
  %s8 = inlined_call_operand.hbm [shape: bf16[4,32,128], index: 8, kind: input, shape index: {}]
  %s9 = inlined_call_operand.vmem [shape: f32[1,128], index: 9, kind: input, shape index: {}]
  %s10 = inlined_call_operand.vmem [shape: f32[1,128], index: 10, kind: input, shape index: {}]
  %s11 = inlined_call_operand.vmem [shape: f32[1,128], index: 11, kind: input, shape index: {}]
  %s12 = inlined_call_operand.hbm [shape: bf16[128,512], index: 12, kind: input, shape index: {}]
  %s13 = inlined_call_operand.vmem [shape: f32[1,512], index: 13, kind: input, shape index: {}]
  %s14 = inlined_call_operand.hbm [shape: bf16[512,128], index: 14, kind: input, shape index: {}]
  %s15 = inlined_call_operand.vmem [shape: f32[1,128], index: 15, kind: input, shape index: {}]
  %s16 = inlined_call_operand.hbm [shape: f32[2,128,128], index: 16, kind: output, shape index: {}]
  %s17 = sld [smem:[#allocation0]]
  $region125: #{tpu_custom_call.1} parent=0
    _
  %s19 = ssub.s32 1, %s17
  %s20 = scalar_select 0, %s19, %s17
  $region1: #{tpu_custom_call.1} parent=0
    #allocation2 [shape = 'u8[65536]{0}', space=vmem, size = 0x10000, scoped, tag = 'input window, operand 0']
    #allocation3 [shape = 's32[2]{0}', space=sflag, size = 0x8, scoped, tag = 'scoped memory for tpu_custom_call.1']
    #allocation4 [shape = 's32[2]{0}', space=sflag, size = 0x8, scoped, tag = 'scoped memory for tpu_custom_call.1']
    #allocation5 [shape = 'u8[131072]{0}', space=vmem, size = 0x20000, scoped, tag = 'input window, operand 1']
    #allocation6 [shape = 's32[2]{0}', space=sflag, size = 0x8, scoped, tag = 'scoped memory for tpu_custom_call.1']
    #allocation7 [shape = 'u8[32768]{0}', space=vmem, size = 0x8000, scoped, tag = 'input window, operand 4, single buffered']
    #allocation8 [shape = 'u8[65536]{0}', space=vmem, size = 0x10000, scoped, tag = 'input window, operand 6, single buffered']
    #allocation9 [shape = 's32[1]{0}', space=sflag, size = 0x4, scoped, tag = 'scoped memory for tpu_custom_call.1']
    #allocation10 [shape = 'u8[32768]{0}', space=vmem, size = 0x8000, scoped, tag = 'input window, operand 8, single buffered']
    #allocation11 [shape = 'u8[131072]{0}', space=vmem, size = 0x20000, scoped, tag = 'input window, operand 12, single buffered']
    #allocation12 [shape = 's32[1]{0}', space=sflag, size = 0x4, scoped, tag = 'scoped memory for tpu_custom_call.1']
    #allocation13 [shape = 'u8[131072]{0}', space=vmem, size = 0x20000, scoped, tag = 'input window, operand 14, single buffered']
    #allocation14 [shape = 'u8[65536]{0}', space=vmem, size = 0x10000, scoped, tag = 'output window, operand 0']
    %21 = vsyncpa [#allocation3], 0
    %s22 = scalar_lea.sflag [#allocation3], 1
    %23 = vsyncpa %s22, 0
    %24 = vsyncpa [#allocation6], 0
    %s25 = scalar_lea.sflag [#allocation6], 1
    %26 = vsyncpa %s25, 0
    %27 = vsyncpa [#allocation9], 0
    %28 = vsyncpa [#allocation12], 0
    %29 = vsyncpa [#allocation4], 0
    %s30 = scalar_lea.sflag [#allocation4], 1
    %31 = vsyncpa %s30, 0
    loop: start=0, step=1, limit=6
    $region2: #{tpu_custom_call.1} parent=1 // loop_pre_header
      _
    $region3: #{tpu_custom_call.1} parent=1 // loop_header
      %s33 = sphi 0, %s37
      %p34 = scmp.ge.s32.totalorder %s33, 6
      %s40 = sphi 0, %s52
      %s41 = sphi 0, %s48
      %s42 = sphi 0, %s40
      %s43 = sphi 0, %s41
      %s44 = sphi 0, %s42
      %s45 = sphi 0, %s43
      %s57 = sphi 0, %s59
      %s60 = sphi 0, %s57
      %s61 = sphi 0, %s60
      %s77 = sphi 0, %s61
      %s83 = sphi 0, %s85
      %s86 = sphi 0, %s83
      %s87 = sphi 0, %s86
      %s103 = sphi 0, %s87
      %s107 = sphi 0, %s107
      %s109 = sphi 0, %s107
      %s110 = sphi 0, %s109
      %s124 = sphi 0, %s110
      %s128 = sphi 0, %s128
      %s130 = sphi 0, %s128
      %s131 = sphi 0, %s130
      %s145 = sphi 0, %s131
      %s149 = sphi 0, %s149
      %s151 = sphi 0, %s149
      %s152 = sphi 0, %s151
      %s166 = sphi 0, %s152
      %s170 = sphi 0, %s170
      %s172 = sphi 0, %s170
      %s173 = sphi 0, %s172
      %s187 = sphi 0, %s173
      %s191 = sphi 0, %s191
      %s193 = sphi 0, %s191
      %s194 = sphi 0, %s193
      %s208 = sphi 0, %s194
      %s212 = sphi 0, %s212
      %s214 = sphi 0, %s212
      %s215 = sphi 0, %s214
      %s229 = sphi 0, %s215
      %s233 = sphi 0, %s233
      %s235 = sphi 0, %s233
      %s236 = sphi 0, %s235
      %s250 = sphi 0, %s236
      %s254 = sphi 0, %s254
      %s256 = sphi 0, %s254
      %s257 = sphi 0, %s256
      %s271 = sphi 0, %s257
      %s275 = sphi 0, %s275
      %s277 = sphi 0, %s275
      %s278 = sphi 0, %s277
      %s292 = sphi 0, %s278
      %s296 = sphi 0, %s296
      %s298 = sphi 0, %s296
      %s299 = sphi 0, %s298
      %s313 = sphi 0, %s299
      %s317 = sphi 0, %s317
      %s319 = sphi 0, %s317
      %s320 = sphi 0, %s319
      %s334 = sphi 0, %s320
      %s338 = sphi 0, %s338
      %s340 = sphi 0, %s338
      %s341 = sphi 0, %s340
      %s355 = sphi 0, %s341
      %s359 = sphi 0, %s359
      %s361 = sphi 0, %s359
      %s362 = sphi 0, %s361
      %s376 = sphi 0, %s362
      %s380 = sphi 0, %s380
      %s382 = sphi 0, %s380
      %s383 = sphi 0, %s382
      %s397 = sphi 0, %s383
      %s405 = sphi 0, %s407
      %s408 = sphi 0, %s405
      %s409 = sphi 0, %s408
      %s425 = sphi 0, %s409
    $region4: #{tpu_custom_call.1} parent=1 // loop_header_branch
      %36 = sbr.rel (%p34) target = $region8
    $region5: #{tpu_custom_call.1} parent=1 // loop_body
      %s38 = ssub.s32 %s33, 1
      %s39 = ssub.s32 %s33, 2
      %s46 = sadd.s32 1, %s41
      %p47 = scmp.ge.s32.totalorder %s46, 2
      %s48 = scalar_select %p47, 0, %s46
      %s49 = sadd.s32 1, %s40
      %s50 = scalar_select %p47, %s49, %s40
      %p51 = scmp.ge.s32.totalorder %s50, 2
      %s52 = scalar_select %p51, 0, %s50
      %s53 = ssub.s32 %s40, %s52
      %s54 = ssub.s32 %s41, %s48
      %s55 = sor.u32 %s53, %s54
      %p56 = scmp.eq.s32.totalorder %s55, 0
      %s58 = sadd.s32 %s57, 1
      %s59 = scalar_select %p56, %s57, %s58
      %p62 = pneg %p56
      %p63 = scmp.eq.s32.totalorder %s33, 3
      %p64 = por %p62, %p63
      %p65 = scmp.ne.s32.totalorder %s57, %s60
      %p66 = scmp.eq.s32.totalorder %s33, 0
      %p67 = por %p65, %p66
      %p68 = scmp.ne.s32.totalorder %s57, %s60
      %p69 = scmp.eq.s32.totalorder %s38, 3
      %p70 = por %p68, %p69
      %p71 = scmp.ne.s32.totalorder %s60, %s61
      %p72 = scmp.eq.s32.totalorder %s38, 0
      %p73 = por %p71, %p72
      %p74 = scmp.ne.s32.totalorder %s60, %s61
      %p75 = scmp.eq.s32.totalorder %s39, 3
      %p76 = por %p74, %p75
      %p78 = scmp.ne.s32.totalorder %s61, %s77
      %p79 = scmp.eq.s32.totalorder %s39, 0
      %p80 = por %p78, %p79
      %s81 = ssub.s32 %s40, %s52
      %p82 = scmp.eq.s32.totalorder %s81, 0
      %s84 = sadd.s32 %s83, 1
      %s85 = scalar_select %p82, %s83, %s84
      %p88 = pneg %p82
      %p89 = scmp.eq.s32.totalorder %s33, 3
      %p90 = por %p88, %p89
      %p91 = scmp.ne.s32.totalorder %s83, %s86
      %p92 = scmp.eq.s32.totalorder %s33, 0
      %p93 = por %p91, %p92
      %p94 = scmp.ne.s32.totalorder %s83, %s86
      %p95 = scmp.eq.s32.totalorder %s38, 3
      %p96 = por %p94, %p95
      %p97 = scmp.ne.s32.totalorder %s86, %s87
      %p98 = scmp.eq.s32.totalorder %s38, 0
      %p99 = por %p97, %p98
      %p100 = scmp.ne.s32.totalorder %s86, %s87
      %p101 = scmp.eq.s32.totalorder %s39, 3
      %p102 = por %p100, %p101
      %p104 = scmp.ne.s32.totalorder %s87, %s103
      %p105 = scmp.eq.s32.totalorder %s39, 0
      %p106 = por %p104, %p105
      %s108 = sadd.s32 %s107, 1
      %p111 = scmp.eq.s32.totalorder %s33, 3
      %p112 = scmp.ne.s32.totalorder %s107, %s109
      %p113 = scmp.eq.s32.totalorder %s33, 0
      %p114 = por %p112, %p113
      %p115 = scmp.ne.s32.totalorder %s107, %s109
      %p116 = scmp.eq.s32.totalorder %s38, 3
      %p117 = por %p115, %p116
      %p118 = scmp.ne.s32.totalorder %s109, %s110
      %p119 = scmp.eq.s32.totalorder %s38, 0
      %p120 = por %p118, %p119
      %p121 = scmp.ne.s32.totalorder %s109, %s110
      %p122 = scmp.eq.s32.totalorder %s39, 3
      %p123 = por %p121, %p122
      %p125 = scmp.ne.s32.totalorder %s110, %s124
      %p126 = scmp.eq.s32.totalorder %s39, 0
      %p127 = por %p125, %p126
      %s129 = sadd.s32 %s128, 1
      %p132 = scmp.eq.s32.totalorder %s33, 3
      %p133 = scmp.ne.s32.totalorder %s128, %s130
      %p134 = scmp.eq.s32.totalorder %s33, 0
      %p135 = por %p133, %p134
      %p136 = scmp.ne.s32.totalorder %s128, %s130
      %p137 = scmp.eq.s32.totalorder %s38, 3
      %p138 = por %p136, %p137
      %p139 = scmp.ne.s32.totalorder %s130, %s131
      %p140 = scmp.eq.s32.totalorder %s38, 0
      %p141 = por %p139, %p140
      %p142 = scmp.ne.s32.totalorder %s130, %s131
      %p143 = scmp.eq.s32.totalorder %s39, 3
      %p144 = por %p142, %p143
      %p146 = scmp.ne.s32.totalorder %s131, %s145
      %p147 = scmp.eq.s32.totalorder %s39, 0
      %p148 = por %p146, %p147
      %s150 = sadd.s32 %s149, 1
      %p153 = scmp.eq.s32.totalorder %s33, 3
      %p154 = scmp.ne.s32.totalorder %s149, %s151
      %p155 = scmp.eq.s32.totalorder %s33, 0
      %p156 = por %p154, %p155
      %p157 = scmp.ne.s32.totalorder %s149, %s151
      %p158 = scmp.eq.s32.totalorder %s38, 3
      %p159 = por %p157, %p158
      %p160 = scmp.ne.s32.totalorder %s151, %s152
      %p161 = scmp.eq.s32.totalorder %s38, 0
      %p162 = por %p160, %p161
      %p163 = scmp.ne.s32.totalorder %s151, %s152
      %p164 = scmp.eq.s32.totalorder %s39, 3
      %p165 = por %p163, %p164
      %p167 = scmp.ne.s32.totalorder %s152, %s166
      %p168 = scmp.eq.s32.totalorder %s39, 0
      %p169 = por %p167, %p168
      %s171 = sadd.s32 %s170, 1
      %p174 = scmp.eq.s32.totalorder %s33, 3
      %p175 = scmp.ne.s32.totalorder %s170, %s172
      %p176 = scmp.eq.s32.totalorder %s33, 0
      %p177 = por %p175, %p176
      %p178 = scmp.ne.s32.totalorder %s170, %s172
      %p179 = scmp.eq.s32.totalorder %s38, 3
      %p180 = por %p178, %p179
      %p181 = scmp.ne.s32.totalorder %s172, %s173
      %p182 = scmp.eq.s32.totalorder %s38, 0
      %p183 = por %p181, %p182
      %p184 = scmp.ne.s32.totalorder %s172, %s173
      %p185 = scmp.eq.s32.totalorder %s39, 3
      %p186 = por %p184, %p185
      %p188 = scmp.ne.s32.totalorder %s173, %s187
      %p189 = scmp.eq.s32.totalorder %s39, 0
      %p190 = por %p188, %p189
      %s192 = sadd.s32 %s191, 1
      %p195 = scmp.eq.s32.totalorder %s33, 3
      %p196 = scmp.ne.s32.totalorder %s191, %s193
      %p197 = scmp.eq.s32.totalorder %s33, 0
      %p198 = por %p196, %p197
      %p199 = scmp.ne.s32.totalorder %s191, %s193
      %p200 = scmp.eq.s32.totalorder %s38, 3
      %p201 = por %p199, %p200
      %p202 = scmp.ne.s32.totalorder %s193, %s194
      %p203 = scmp.eq.s32.totalorder %s38, 0
      %p204 = por %p202, %p203
      %p205 = scmp.ne.s32.totalorder %s193, %s194
      %p206 = scmp.eq.s32.totalorder %s39, 3
      %p207 = por %p205, %p206
      %p209 = scmp.ne.s32.totalorder %s194, %s208
      %p210 = scmp.eq.s32.totalorder %s39, 0
      %p211 = por %p209, %p210
      %s213 = sadd.s32 %s212, 1
      %p216 = scmp.eq.s32.totalorder %s33, 3
      %p217 = scmp.ne.s32.totalorder %s212, %s214
      %p218 = scmp.eq.s32.totalorder %s33, 0
      %p219 = por %p217, %p218
      %p220 = scmp.ne.s32.totalorder %s212, %s214
      %p221 = scmp.eq.s32.totalorder %s38, 3
      %p222 = por %p220, %p221
      %p223 = scmp.ne.s32.totalorder %s214, %s215
      %p224 = scmp.eq.s32.totalorder %s38, 0
      %p225 = por %p223, %p224
      %p226 = scmp.ne.s32.totalorder %s214, %s215
      %p227 = scmp.eq.s32.totalorder %s39, 3
      %p228 = por %p226, %p227
      %p230 = scmp.ne.s32.totalorder %s215, %s229
      %p231 = scmp.eq.s32.totalorder %s39, 0
      %p232 = por %p230, %p231
      %s234 = sadd.s32 %s233, 1
      %p237 = scmp.eq.s32.totalorder %s33, 3
      %p238 = scmp.ne.s32.totalorder %s233, %s235
      %p239 = scmp.eq.s32.totalorder %s33, 0
      %p240 = por %p238, %p239
      %p241 = scmp.ne.s32.totalorder %s233, %s235
      %p242 = scmp.eq.s32.totalorder %s38, 3
      %p243 = por %p241, %p242
      %p244 = scmp.ne.s32.totalorder %s235, %s236
      %p245 = scmp.eq.s32.totalorder %s38, 0
      %p246 = por %p244, %p245
      %p247 = scmp.ne.s32.totalorder %s235, %s236
      %p248 = scmp.eq.s32.totalorder %s39, 3
      %p249 = por %p247, %p248
      %p251 = scmp.ne.s32.totalorder %s236, %s250
      %p252 = scmp.eq.s32.totalorder %s39, 0
      %p253 = por %p251, %p252
      %s255 = sadd.s32 %s254, 1
      %p258 = scmp.eq.s32.totalorder %s33, 3
      %p259 = scmp.ne.s32.totalorder %s254, %s256
      %p260 = scmp.eq.s32.totalorder %s33, 0
      %p261 = por %p259, %p260
      %p262 = scmp.ne.s32.totalorder %s254, %s256
      %p263 = scmp.eq.s32.totalorder %s38, 3
      %p264 = por %p262, %p263
      %p265 = scmp.ne.s32.totalorder %s256, %s257
      %p266 = scmp.eq.s32.totalorder %s38, 0
      %p267 = por %p265, %p266
      %p268 = scmp.ne.s32.totalorder %s256, %s257
      %p269 = scmp.eq.s32.totalorder %s39, 3
      %p270 = por %p268, %p269
      %p272 = scmp.ne.s32.totalorder %s257, %s271
      %p273 = scmp.eq.s32.totalorder %s39, 0
      %p274 = por %p272, %p273
      %s276 = sadd.s32 %s275, 1
      %p279 = scmp.eq.s32.totalorder %s33, 3
      %p280 = scmp.ne.s32.totalorder %s275, %s277
      %p281 = scmp.eq.s32.totalorder %s33, 0
      %p282 = por %p280, %p281
      %p283 = scmp.ne.s32.totalorder %s275, %s277
      %p284 = scmp.eq.s32.totalorder %s38, 3
      %p285 = por %p283, %p284
      %p286 = scmp.ne.s32.totalorder %s277, %s278
      %p287 = scmp.eq.s32.totalorder %s38, 0
      %p288 = por %p286, %p287
      %p289 = scmp.ne.s32.totalorder %s277, %s278
      %p290 = scmp.eq.s32.totalorder %s39, 3
      %p291 = por %p289, %p290
      %p293 = scmp.ne.s32.totalorder %s278, %s292
      %p294 = scmp.eq.s32.totalorder %s39, 0
      %p295 = por %p293, %p294
      %s297 = sadd.s32 %s296, 1
      %p300 = scmp.eq.s32.totalorder %s33, 3
      %p301 = scmp.ne.s32.totalorder %s296, %s298
      %p302 = scmp.eq.s32.totalorder %s33, 0
      %p303 = por %p301, %p302
      %p304 = scmp.ne.s32.totalorder %s296, %s298
      %p305 = scmp.eq.s32.totalorder %s38, 3
      %p306 = por %p304, %p305
      %p307 = scmp.ne.s32.totalorder %s298, %s299
      %p308 = scmp.eq.s32.totalorder %s38, 0
      %p309 = por %p307, %p308
      %p310 = scmp.ne.s32.totalorder %s298, %s299
      %p311 = scmp.eq.s32.totalorder %s39, 3
      %p312 = por %p310, %p311
      %p314 = scmp.ne.s32.totalorder %s299, %s313
      %p315 = scmp.eq.s32.totalorder %s39, 0
      %p316 = por %p314, %p315
      %s318 = sadd.s32 %s317, 1
      %p321 = scmp.eq.s32.totalorder %s33, 3
      %p322 = scmp.ne.s32.totalorder %s317, %s319
      %p323 = scmp.eq.s32.totalorder %s33, 0
      %p324 = por %p322, %p323
      %p325 = scmp.ne.s32.totalorder %s317, %s319
      %p326 = scmp.eq.s32.totalorder %s38, 3
      %p327 = por %p325, %p326
      %p328 = scmp.ne.s32.totalorder %s319, %s320
      %p329 = scmp.eq.s32.totalorder %s38, 0
      %p330 = por %p328, %p329
      %p331 = scmp.ne.s32.totalorder %s319, %s320
      %p332 = scmp.eq.s32.totalorder %s39, 3
      %p333 = por %p331, %p332
      %p335 = scmp.ne.s32.totalorder %s320, %s334
      %p336 = scmp.eq.s32.totalorder %s39, 0
      %p337 = por %p335, %p336
      %s339 = sadd.s32 %s338, 1
      %p342 = scmp.eq.s32.totalorder %s33, 3
      %p343 = scmp.ne.s32.totalorder %s338, %s340
      %p344 = scmp.eq.s32.totalorder %s33, 0
      %p345 = por %p343, %p344
      %p346 = scmp.ne.s32.totalorder %s338, %s340
      %p347 = scmp.eq.s32.totalorder %s38, 3
      %p348 = por %p346, %p347
      %p349 = scmp.ne.s32.totalorder %s340, %s341
      %p350 = scmp.eq.s32.totalorder %s38, 0
      %p351 = por %p349, %p350
      %p352 = scmp.ne.s32.totalorder %s340, %s341
      %p353 = scmp.eq.s32.totalorder %s39, 3
      %p354 = por %p352, %p353
      %p356 = scmp.ne.s32.totalorder %s341, %s355
      %p357 = scmp.eq.s32.totalorder %s39, 0
      %p358 = por %p356, %p357
      %s360 = sadd.s32 %s359, 1
      %p363 = scmp.eq.s32.totalorder %s33, 3
      %p364 = scmp.ne.s32.totalorder %s359, %s361
      %p365 = scmp.eq.s32.totalorder %s33, 0
      %p366 = por %p364, %p365
      %p367 = scmp.ne.s32.totalorder %s359, %s361
      %p368 = scmp.eq.s32.totalorder %s38, 3
      %p369 = por %p367, %p368
      %p370 = scmp.ne.s32.totalorder %s361, %s362
      %p371 = scmp.eq.s32.totalorder %s38, 0
      %p372 = por %p370, %p371
      %p373 = scmp.ne.s32.totalorder %s361, %s362
      %p374 = scmp.eq.s32.totalorder %s39, 3
      %p375 = por %p373, %p374
      %p377 = scmp.ne.s32.totalorder %s362, %s376
      %p378 = scmp.eq.s32.totalorder %s39, 0
      %p379 = por %p377, %p378
      %s381 = sadd.s32 %s380, 1
      %p384 = scmp.eq.s32.totalorder %s33, 3
      %p385 = scmp.ne.s32.totalorder %s380, %s382
      %p386 = scmp.eq.s32.totalorder %s33, 0
      %p387 = por %p385, %p386
      %p388 = scmp.ne.s32.totalorder %s380, %s382
      %p389 = scmp.eq.s32.totalorder %s38, 3
      %p390 = por %p388, %p389
      %p391 = scmp.ne.s32.totalorder %s382, %s383
      %p392 = scmp.eq.s32.totalorder %s38, 0
      %p393 = por %p391, %p392
      %p394 = scmp.ne.s32.totalorder %s382, %s383
      %p395 = scmp.eq.s32.totalorder %s39, 3
      %p396 = por %p394, %p395
      %p398 = scmp.ne.s32.totalorder %s383, %s397
      %p399 = scmp.eq.s32.totalorder %s39, 0
      %p400 = por %p398, %p399
      %s401 = ssub.s32 %s40, %s52
      %s402 = ssub.s32 %s41, %s48
      %s403 = sor.u32 %s401, %s402
      %p404 = scmp.eq.s32.totalorder %s403, 0
      %s406 = sadd.s32 %s405, 1
      %s407 = scalar_select %p404, %s405, %s406
      %p410 = pneg %p404
      %p411 = scmp.eq.s32.totalorder %s33, 3
      %p412 = por %p410, %p411
      %p413 = scmp.ne.s32.totalorder %s405, %s408
      %p414 = scmp.eq.s32.totalorder %s33, 0
      %p415 = por %p413, %p414
      %p416 = scmp.ne.s32.totalorder %s405, %s408
      %p417 = scmp.eq.s32.totalorder %s38, 3
      %p418 = por %p416, %p417
      %p419 = scmp.ne.s32.totalorder %s408, %s409
      %p420 = scmp.eq.s32.totalorder %s38, 0
      %p421 = por %p419, %p420
      %p422 = scmp.ne.s32.totalorder %s408, %s409
      %p423 = scmp.eq.s32.totalorder %s39, 3
      %p424 = por %p422, %p423
      %p426 = scmp.ne.s32.totalorder %s409, %s425
      %p427 = scmp.eq.s32.totalorder %s39, 0
      %p428 = por %p426, %p427
      %p429 = scmp.le.s32.totalorder 1, %s33
      %p430 = scmp.lt.s32.totalorder %s33, 5
      %p431 = pnand %p429, %p430
      %p432 = pneg %p431
      // Predicated region
      $region9: #{tpu_custom_call.1} parent=5 // pred_check
        _
      $region10: #{tpu_custom_call.1} parent=5 // pred_check_branch
        %434 = sbr.rel (%p431) target = $region12
      $region11: #{tpu_custom_call.1} parent=5 // pred_region
        %s435 = ssub.s32 %s33, 1
        // Predicated region
        $region13: #{tpu_custom_call.1} parent=11 // pred_check
          %p436 = pneg %p120
        $region14: #{tpu_custom_call.1} parent=11 // pred_check_branch
          %438 = sbr.rel (%p436) target = $region16
        $region15: #{tpu_custom_call.1} parent=11 // pred_region
          _
        $region16: #{tpu_custom_call.1} parent=11 // pred_fallthru
          _
        // Predicated region
        $region17: #{tpu_custom_call.1} parent=11 // pred_check
          %p439 = pneg %p141
        $region18: #{tpu_custom_call.1} parent=11 // pred_check_branch
          %441 = sbr.rel (%p439) target = $region20
        $region19: #{tpu_custom_call.1} parent=11 // pred_region
          _
        $region20: #{tpu_custom_call.1} parent=11 // pred_fallthru
          _
        // Predicated region
        $region21: #{tpu_custom_call.1} parent=11 // pred_check
          %p442 = pneg %p162
        $region22: #{tpu_custom_call.1} parent=11 // pred_check_branch
          %444 = sbr.rel (%p442) target = $region24
        $region23: #{tpu_custom_call.1} parent=11 // pred_region
          %s446 = ssub.s32 1024, 1024
          %447 = vsyncadd [#allocation6], %s446
          %s448 = sshll.u32 [#allocation7], 4
          %s449 = int_to_ptr.vmem [resolvable:$true] %s448
          %454 = dma.hbm_to_vmem [thread:$0]  %s4, 1024, %s449, [#allocation6], 64, 64, 4
        $region24: #{tpu_custom_call.1} parent=11 // pred_fallthru
          _
        // Predicated region
        $region25: #{tpu_custom_call.1} parent=11 // pred_check
          %p455 = pneg %p183
        $region26: #{tpu_custom_call.1} parent=11 // pred_check_branch
          %457 = sbr.rel (%p455) target = $region28
        $region27: #{tpu_custom_call.1} parent=11 // pred_region
          _
        $region28: #{tpu_custom_call.1} parent=11 // pred_fallthru
          _
        // Predicated region
        $region29: #{tpu_custom_call.1} parent=11 // pred_check
          %p458 = pneg %p204
        $region30: #{tpu_custom_call.1} parent=11 // pred_check_branch
          %460 = sbr.rel (%p458) target = $region32
        $region31: #{tpu_custom_call.1} parent=11 // pred_region
          %s462 = ssub.s32 2048, 2048
          %463 = vsyncadd [#allocation9], %s462
          %s464 = sshll.u32 [#allocation8], 4
          %s465 = int_to_ptr.vmem [resolvable:$true] %s464
          %470 = dma.hbm_to_vmem [thread:$0]  %s6, 2048, %s465, [#allocation9], 128, 128, 8
        $region32: #{tpu_custom_call.1} parent=11 // pred_fallthru
          _
        // Predicated region
        $region33: #{tpu_custom_call.1} parent=11 // pred_check
          %p471 = pneg %p225
        $region34: #{tpu_custom_call.1} parent=11 // pred_check_branch
          %473 = sbr.rel (%p471) target = $region36
        $region35: #{tpu_custom_call.1} parent=11 // pred_region
          _
        $region36: #{tpu_custom_call.1} parent=11 // pred_fallthru
          _
        // Predicated region
        $region37: #{tpu_custom_call.1} parent=11 // pred_check
          %p474 = pneg %p246
        $region38: #{tpu_custom_call.1} parent=11 // pred_check_branch
          %476 = sbr.rel (%p474) target = $region40
        $region39: #{tpu_custom_call.1} parent=11 // pred_region
          %s478 = ssub.s32 1024, 1024
          %479 = vsyncadd [#allocation9], %s478
          %s480 = sshll.u32 [#allocation10], 4
          %s481 = int_to_ptr.vmem [resolvable:$true] %s480
          %486 = dma.hbm_to_vmem [thread:$0]  %s8, 1024, %s481, [#allocation9], 64, 64, 4
        $region40: #{tpu_custom_call.1} parent=11 // pred_fallthru
          _
        // Predicated region
        $region41: #{tpu_custom_call.1} parent=11 // pred_check
          %p487 = pneg %p267
        $region42: #{tpu_custom_call.1} parent=11 // pred_check_branch
          %489 = sbr.rel (%p487) target = $region44
        $region43: #{tpu_custom_call.1} parent=11 // pred_region
          _
        $region44: #{tpu_custom_call.1} parent=11 // pred_fallthru
          _
        // Predicated region
        $region45: #{tpu_custom_call.1} parent=11 // pred_check
          %p490 = pneg %p288
        $region46: #{tpu_custom_call.1} parent=11 // pred_check_branch
          %492 = sbr.rel (%p490) target = $region48
        $region47: #{tpu_custom_call.1} parent=11 // pred_region
          _
        $region48: #{tpu_custom_call.1} parent=11 // pred_fallthru
          _
        // Predicated region
        $region49: #{tpu_custom_call.1} parent=11 // pred_check
          %p493 = pneg %p309
        $region50: #{tpu_custom_call.1} parent=11 // pred_check_branch
          %495 = sbr.rel (%p493) target = $region52
        $region51: #{tpu_custom_call.1} parent=11 // pred_region
          _
        $region52: #{tpu_custom_call.1} parent=11 // pred_fallthru
          _
        // Predicated region
        $region53: #{tpu_custom_call.1} parent=11 // pred_check
          %p496 = pneg %p330
        $region54: #{tpu_custom_call.1} parent=11 // pred_check_branch
          %498 = sbr.rel (%p496) target = $region56
        $region55: #{tpu_custom_call.1} parent=11 // pred_region
          %s500 = ssub.s32 4096, 4096
          %501 = vsyncadd [#allocation12], %s500
          %s502 = sshll.u32 [#allocation11], 4
          %s503 = int_to_ptr.vmem [resolvable:$true] %s502
          %508 = dma.hbm_to_vmem [thread:$0]  %s12, 4096, %s503, [#allocation12], 256, 256, 16
        $region56: #{tpu_custom_call.1} parent=11 // pred_fallthru
          _
        // Predicated region
        $region57: #{tpu_custom_call.1} parent=11 // pred_check
          %p509 = pneg %p351
        $region58: #{tpu_custom_call.1} parent=11 // pred_check_branch
          %511 = sbr.rel (%p509) target = $region60
        $region59: #{tpu_custom_call.1} parent=11 // pred_region
          _
        $region60: #{tpu_custom_call.1} parent=11 // pred_fallthru
          _
        // Predicated region
        $region61: #{tpu_custom_call.1} parent=11 // pred_check
          %p512 = pneg %p372
        $region62: #{tpu_custom_call.1} parent=11 // pred_check_branch
          %514 = sbr.rel (%p512) target = $region64
        $region63: #{tpu_custom_call.1} parent=11 // pred_region
          %s516 = ssub.s32 4096, 4096
          %517 = vsyncadd [#allocation12], %s516
          %s518 = sshll.u32 [#allocation13], 4
          %s519 = int_to_ptr.vmem [resolvable:$true] %s518
          %524 = dma.hbm_to_vmem [thread:$0]  %s14, 4096, %s519, [#allocation12], 64, 64, 4
        $region64: #{tpu_custom_call.1} parent=11 // pred_fallthru
          _
        // Predicated region
        $region65: #{tpu_custom_call.1} parent=11 // pred_check
          %p525 = pneg %p393
        $region66: #{tpu_custom_call.1} parent=11 // pred_check_branch
          %527 = sbr.rel (%p525) target = $region68
        $region67: #{tpu_custom_call.1} parent=11 // pred_region
          _
        $region68: #{tpu_custom_call.1} parent=11 // pred_fallthru
          _
      $region12: #{tpu_custom_call.1} parent=5 // pred_fallthru
        _
      %p528 = scmp.lt.s32.totalorder %s33, 4
      // Predicated region
      $region69: #{tpu_custom_call.1} parent=5 // pred_check
        %p529 = pneg %p528
      $region70: #{tpu_custom_call.1} parent=5 // pred_check_branch
        %531 = sbr.rel (%p529) target = $region72
      $region71: #{tpu_custom_call.1} parent=5 // pred_region
        // Predicated region
        $region73: #{tpu_custom_call.1} parent=71 // pred_check
          %p532 = pneg %p67
        $region74: #{tpu_custom_call.1} parent=71 // pred_check_branch
          %534 = sbr.rel (%p532) target = $region76
        $region75: #{tpu_custom_call.1} parent=71 // pred_region
          %s535 = sand.u32 %s57, 1
          %s536 = scalar_lea.sflag [#allocation3], %s535
          %s537 = sand.u32 %s57, 1
          %s538 = smul.addr %s537, 64
          %s539 = scalar_lea.vmem [#allocation2], %s538
          %s540 = smul.u32 8, %s41
          %s542 = ssub.s32 1024, 1024
          %543 = vsyncadd %s536, %s542
          %s544 = smul.addr %s40, 16
          %s545 = sadd.s32 %s540, %s544
          %s546 = smul.addr %s545, 128
          %s547 = scalar_lea.hbm %s0, %s546
          %s548 = sshll.u32 %s539, 4
          %s549 = int_to_ptr.vmem [resolvable:$true] %s548
          %554 = dma.hbm_to_vmem [thread:$0]  %s547, 1024, %s549, %s536, 128, 128, 8
        $region76: #{tpu_custom_call.1} parent=71 // pred_fallthru
          _
        // Predicated region
        $region77: #{tpu_custom_call.1} parent=71 // pred_check
          %p555 = pneg %p93
        $region78: #{tpu_custom_call.1} parent=71 // pred_check_branch
          %557 = sbr.rel (%p555) target = $region80
        $region79: #{tpu_custom_call.1} parent=71 // pred_region
          %s558 = sand.u32 %s33, 1
          %s559 = scalar_lea.sflag [#allocation6], %s558
          %s560 = sand.u32 %s83, 1
          %s561 = smul.addr %s560, 128
          %s562 = scalar_lea.vmem [#allocation5], %s561
          %s564 = ssub.s32 2048, 2048
          %565 = vsyncadd %s559, %s564
          %s566 = smul.addr %s40, 16
          %s567 = smul.addr %s566, 128
          %s568 = scalar_lea.hbm %s1, %s567
          %s569 = sshll.u32 %s562, 4
          %s570 = int_to_ptr.vmem [resolvable:$true] %s569
          %575 = dma.hbm_to_vmem [thread:$0]  %s568, 2048, %s570, %s559, 128, 128, 8
        $region80: #{tpu_custom_call.1} parent=71 // pred_fallthru
          _
      $region72: #{tpu_custom_call.1} parent=5 // pred_fallthru
        _
      %p576 = scmp.le.s32.totalorder 1, %s33
      %p577 = scmp.lt.s32.totalorder %s33, 5
      %p578 = pnand %p576, %p577
      %p579 = pneg %p578
      // Predicated region
      $region81: #{tpu_custom_call.1} parent=5 // pred_check
        _
      $region82: #{tpu_custom_call.1} parent=5 // pred_check_branch
        %581 = sbr.rel (%p578) target = $region84
      $region83: #{tpu_custom_call.1} parent=5 // pred_region
        %s582 = ssub.s32 %s33, 1
        %s583 = sand.u32 %s60, 1
        %s584 = scalar_lea.sflag [#allocation3], %s583
        %s585 = sand.u32 %s60, 1
        %s586 = smul.addr %s585, 64
        %s587 = scalar_lea.vmem [#allocation2], %s586
        // Predicated region
        $region85: #{tpu_custom_call.1} parent=83 // pred_check
          %p588 = pneg %p73
        $region86: #{tpu_custom_call.1} parent=83 // pred_check_branch
          %590 = sbr.rel (%p588) target = $region88
        $region87: #{tpu_custom_call.1} parent=83 // pred_region
          %591 = dma.done %s584, 1024
        $region88: #{tpu_custom_call.1} parent=83 // pred_fallthru
          _
        %s592 = sand.u32 %s38, 1
        %s593 = scalar_lea.sflag [#allocation6], %s592
        %s594 = sand.u32 %s86, 1
        %s595 = smul.addr %s594, 128
        %s596 = scalar_lea.vmem [#allocation5], %s595
        // Predicated region
        $region89: #{tpu_custom_call.1} parent=83 // pred_check
          %p597 = pneg %p99
        $region90: #{tpu_custom_call.1} parent=83 // pred_check_branch
          %599 = sbr.rel (%p597) target = $region92
        $region91: #{tpu_custom_call.1} parent=83 // pred_region
          %600 = dma.done %s593, 2048
        $region92: #{tpu_custom_call.1} parent=83 // pred_fallthru
          _
        // Predicated region
        $region93: #{tpu_custom_call.1} parent=83 // pred_check
          %p601 = pneg %p162
        $region94: #{tpu_custom_call.1} parent=83 // pred_check_branch
          %603 = sbr.rel (%p601) target = $region96
        $region95: #{tpu_custom_call.1} parent=83 // pred_region
          %604 = dma.done [#allocation6], 1024
        $region96: #{tpu_custom_call.1} parent=83 // pred_fallthru
          _
        // Predicated region
        $region97: #{tpu_custom_call.1} parent=83 // pred_check
          %p605 = pneg %p204
        $region98: #{tpu_custom_call.1} parent=83 // pred_check_branch
          %607 = sbr.rel (%p605) target = $region100
        $region99: #{tpu_custom_call.1} parent=83 // pred_region
          %608 = dma.done [#allocation9], 2048
        $region100: #{tpu_custom_call.1} parent=83 // pred_fallthru
          _
        // Predicated region
        $region101: #{tpu_custom_call.1} parent=83 // pred_check
          %p609 = pneg %p246
        $region102: #{tpu_custom_call.1} parent=83 // pred_check_branch
          %611 = sbr.rel (%p609) target = $region104
        $region103: #{tpu_custom_call.1} parent=83 // pred_region
          %612 = dma.done [#allocation9], 1024
        $region104: #{tpu_custom_call.1} parent=83 // pred_fallthru
          _
        // Predicated region
        $region105: #{tpu_custom_call.1} parent=83 // pred_check
          %p613 = pneg %p330
        $region106: #{tpu_custom_call.1} parent=83 // pred_check_branch
          %615 = sbr.rel (%p613) target = $region108
        $region107: #{tpu_custom_call.1} parent=83 // pred_region
          %616 = dma.done [#allocation12], 4096
        $region108: #{tpu_custom_call.1} parent=83 // pred_fallthru
          _
        // Predicated region
        $region109: #{tpu_custom_call.1} parent=83 // pred_check
          %p617 = pneg %p372
        $region110: #{tpu_custom_call.1} parent=83 // pred_check_branch
          %619 = sbr.rel (%p617) target = $region112
        $region111: #{tpu_custom_call.1} parent=83 // pred_region
          %620 = dma.done [#allocation12], 4096
        $region112: #{tpu_custom_call.1} parent=83 // pred_fallthru
          _
        %s621 = sand.u32 %s60, 1
        %s622 = scalar_lea.sflag [#allocation3], %s621
        %s623 = sand.u32 %s60, 1
        %s624 = smul.addr %s623, 64
        %s625 = scalar_lea.vmem [#allocation2], %s624
        %p626 = pneg %p73
        %p627 = pneg %p70
        %s628 = sand.u32 %s38, 1
        %s629 = scalar_lea.sflag [#allocation6], %s628
        %s630 = sand.u32 %s86, 1
        %s631 = smul.addr %s630, 128
        %s632 = scalar_lea.vmem [#allocation5], %s631
        %p633 = pneg %p99
        %p634 = pneg %p96
        %p635 = pneg %p120
        %p636 = pneg %p117
        %p637 = pneg %p141
        %p638 = pneg %p138
        %p639 = pneg %p162
        %p640 = pneg %p159
        %p641 = pneg %p183
        %p642 = pneg %p180
        %p643 = pneg %p204
        %p644 = pneg %p201
        %p645 = pneg %p225
        %p646 = pneg %p222
        %p647 = pneg %p246
        %p648 = pneg %p243
        %p649 = pneg %p267
        %p650 = pneg %p264
        %p651 = pneg %p288
        %p652 = pneg %p285
        %p653 = pneg %p309
        %p654 = pneg %p306
        %p655 = pneg %p330
        %p656 = pneg %p327
        %p657 = pneg %p351
        %p658 = pneg %p348
        %p659 = pneg %p372
        %p660 = pneg %p369
        %p661 = pneg %p393
        %p662 = pneg %p390
        %p663 = pneg %p421
        %p664 = pneg %p418
        %s665 = sand.u32 %s408, 1
        %s666 = scalar_lea.sflag [#allocation4], %s665
        %s667 = sand.u32 %s408, 1
        %s668 = smul.addr %s667, 64
        %s669 = scalar_lea.vmem [#allocation14], %s668
        %s670 = smul.u32 8, %s43
        %s671 = smul.u32 8, %s43
        %v673 = vld [vmem:[%s587] sm:$0xff]
        %v674 = vld [vmem:[%s587 + $0x8] sm:$0xff]
        %v675 = vld [vmem:[%s587 + $0x10] sm:$0xff]
        %v676 = vld [vmem:[%s587 + $0x18] sm:$0xff]
        %v677 = vld [vmem:[%s587 + $0x20] sm:$0xff]
        %v678 = vld [vmem:[%s587 + $0x28] sm:$0xff]
        %v679 = vld [vmem:[%s587 + $0x30] sm:$0xff]
        %v680 = vld [vmem:[%s587 + $0x38] sm:$0xff]
        %v681 = vld [vmem:[%s596] sm:$0xff]
        %v682 = vld [vmem:[%s596 + $0x8] sm:$0xff]
        %v683 = vld [vmem:[%s596 + $0x10] sm:$0xff]
        %v684 = vld [vmem:[%s596 + $0x18] sm:$0xff]
        %v685 = vld [vmem:[%s596 + $0x20] sm:$0xff]
        %v686 = vld [vmem:[%s596 + $0x28] sm:$0xff]
        %v687 = vld [vmem:[%s596 + $0x30] sm:$0xff]
        %v688 = vld [vmem:[%s596 + $0x38] sm:$0xff]
        %v689 = vld [vmem:[%s596 + $0x40] sm:$0xff]
        %v690 = vld [vmem:[%s596 + $0x48] sm:$0xff]
        %v691 = vld [vmem:[%s596 + $0x50] sm:$0xff]
        %v692 = vld [vmem:[%s596 + $0x58] sm:$0xff]
        %v693 = vld [vmem:[%s596 + $0x60] sm:$0xff]
        %v694 = vld [vmem:[%s596 + $0x68] sm:$0xff]
        %v695 = vld [vmem:[%s596 + $0x70] sm:$0xff]
        %v696 = vld [vmem:[%s596 + $0x78] sm:$0xff]
        %v697 = vld [vmem:[%s2] sm:$0x1]
        %v698 = vld [vmem:[%s3] sm:$0x1]
        %699 = vadd.xlane.f32.xlu0 %v673
        %v700 = vpop.xlane.xlu0 %699
        %701 = vadd.xlane.f32.xlu0 %v674
        %v702 = vpop.xlane.xlu0 %701
        %703 = vadd.xlane.f32.xlu0 %v675
        %v704 = vpop.xlane.xlu0 %703
        %705 = vadd.xlane.f32.xlu0 %v676
        %v706 = vpop.xlane.xlu0 %705
        %707 = vadd.xlane.f32.xlu0 %v677
        %v708 = vpop.xlane.xlu0 %707
        %709 = vadd.xlane.f32.xlu0 %v678
        %v710 = vpop.xlane.xlu0 %709
        %711 = vadd.xlane.f32.xlu0 %v679
        %v712 = vpop.xlane.xlu0 %711
        %713 = vadd.xlane.f32.xlu0 %v680
        %v714 = vpop.xlane.xlu0 %713
        %v715 = vrcp.pop 128.0
        %v716 = vmul.f32 %v700, %v715
        %v717 = vmul.f32 %v702, %v715
        %v718 = vmul.f32 %v704, %v715
        %v719 = vmul.f32 %v706, %v715
        %v720 = vmul.f32 %v708, %v715
        %v721 = vmul.f32 %v710, %v715
        %v722 = vmul.f32 %v712, %v715
        %v723 = vmul.f32 %v714, %v715
        %v724 = vmul.f32 %v673, %v673
        %v725 = vmul.f32 %v674, %v674
        %v726 = vmul.f32 %v675, %v675
        %v727 = vmul.f32 %v676, %v676
        %v728 = vmul.f32 %v677, %v677
        %v729 = vmul.f32 %v678, %v678
        %v730 = vmul.f32 %v679, %v679
        %v731 = vmul.f32 %v680, %v680
        %732 = vadd.xlane.f32.xlu0 %v724
        %v733 = vpop.xlane.xlu0 %732
        %734 = vadd.xlane.f32.xlu0 %v725
        %v735 = vpop.xlane.xlu0 %734
        %736 = vadd.xlane.f32.xlu0 %v726
        %v737 = vpop.xlane.xlu0 %736
        %738 = vadd.xlane.f32.xlu0 %v727
        %v739 = vpop.xlane.xlu0 %738
        %740 = vadd.xlane.f32.xlu0 %v728
        %v741 = vpop.xlane.xlu0 %740
        %742 = vadd.xlane.f32.xlu0 %v729
        %v743 = vpop.xlane.xlu0 %742
        %744 = vadd.xlane.f32.xlu0 %v730
        %v745 = vpop.xlane.xlu0 %744
        %746 = vadd.xlane.f32.xlu0 %v731
        %v747 = vpop.xlane.xlu0 %746
        %v748 = vmul.f32 %v733, %v715
        %v749 = vmul.f32 %v735, %v715
        %v750 = vmul.f32 %v737, %v715
        %v751 = vmul.f32 %v739, %v715
        %v752 = vmul.f32 %v741, %v715
        %v753 = vmul.f32 %v743, %v715
        %v754 = vmul.f32 %v745, %v715
        %v755 = vmul.f32 %v747, %v715
        %v756 = vmul.f32 %v716, %v716
        %v757 = vmul.f32 %v717, %v717
        %v758 = vmul.f32 %v718, %v718
        %v759 = vmul.f32 %v719, %v719
        %v760 = vmul.f32 %v720, %v720
        %v761 = vmul.f32 %v721, %v721
        %v762 = vmul.f32 %v722, %v722
        %v763 = vmul.f32 %v723, %v723
        %v764 = vsub.f32 %v748, %v756
        %v765 = vsub.f32 %v749, %v757
        %v766 = vsub.f32 %v750, %v758
        %v767 = vsub.f32 %v751, %v759
        %v768 = vsub.f32 %v752, %v760
        %v769 = vsub.f32 %v753, %v761
        %v770 = vsub.f32 %v754, %v762
        %v771 = vsub.f32 %v755, %v763
        %v772 = vsub.f32 %v673, %v716
        %v773 = vsub.f32 %v674, %v717
        %v774 = vsub.f32 %v675, %v718
        %v775 = vsub.f32 %v676, %v719
        %v776 = vsub.f32 %v677, %v720
        %v777 = vsub.f32 %v678, %v721
        %v778 = vsub.f32 %v679, %v722
        %v779 = vsub.f32 %v680, %v723
        %v780 = vadd.f32 %v764, 1e-05
        %v781 = vadd.f32 %v765, 1e-05
        %v782 = vadd.f32 %v766, 1e-05
        %v783 = vadd.f32 %v767, 1e-05
        %v784 = vadd.f32 %v768, 1e-05
        %v785 = vadd.f32 %v769, 1e-05
        %v786 = vadd.f32 %v770, 1e-05
        %v787 = vadd.f32 %v771, 1e-05
        %v788 = vrsqrt.pop %v780
        %v789 = vrsqrt.pop %v781
        %v790 = vrsqrt.pop %v782
        %v791 = vrsqrt.pop %v783
        %v792 = vrsqrt.pop %v784
        %v793 = vrsqrt.pop %v785
        %v794 = vrsqrt.pop %v786
        %v795 = vrsqrt.pop %v787
        %v796 = vmul.f32 %v772, %v788
        %v797 = vmul.f32 %v773, %v789
        %v798 = vmul.f32 %v774, %v790
        %v799 = vmul.f32 %v775, %v791
        %v800 = vmul.f32 %v776, %v792
        %v801 = vmul.f32 %v777, %v793
        %v802 = vmul.f32 %v778, %v794
        %v803 = vmul.f32 %v779, %v795
        %v805 = vlaneseq
        %v806 = vshrl.u32 %v805, 7
        %v807 = vsub.s32 0, %v806
        %v808 = vrot.slane %v697, %v807
        %v810 = vmul.f32 %v796, %v808
        %v811 = vmul.f32 %v797, %v808
        %v812 = vmul.f32 %v798, %v808
        %v813 = vmul.f32 %v799, %v808
        %v814 = vmul.f32 %v800, %v808
        %v815 = vmul.f32 %v801, %v808
        %v816 = vmul.f32 %v802, %v808
        %v817 = vmul.f32 %v803, %v808
        %v819 = vlaneseq
        %v820 = vshrl.u32 %v819, 7
        %v821 = vsub.s32 0, %v820
        %v822 = vrot.slane %v698, %v821
        %v824 = vadd.f32 %v810, %v822
        %v825 = vadd.f32 %v811, %v822
        %v826 = vadd.f32 %v812, %v822
        %v827 = vadd.f32 %v813, %v822
        %v828 = vadd.f32 %v814, %v822
        %v829 = vadd.f32 %v815, %v822
        %v830 = vadd.f32 %v816, %v822
        %v831 = vadd.f32 %v817, %v822
        %832 = vadd.xlane.f32.xlu0 %v681
        %v833 = vpop.xlane.xlu0 %832
        %834 = vadd.xlane.f32.xlu0 %v682
        %v835 = vpop.xlane.xlu0 %834
        %836 = vadd.xlane.f32.xlu0 %v683
        %v837 = vpop.xlane.xlu0 %836
        %838 = vadd.xlane.f32.xlu0 %v684
        %v839 = vpop.xlane.xlu0 %838
        %840 = vadd.xlane.f32.xlu0 %v685
        %v841 = vpop.xlane.xlu0 %840
        %842 = vadd.xlane.f32.xlu0 %v686
        %v843 = vpop.xlane.xlu0 %842
        %844 = vadd.xlane.f32.xlu0 %v687
        %v845 = vpop.xlane.xlu0 %844
        %846 = vadd.xlane.f32.xlu0 %v688
        %v847 = vpop.xlane.xlu0 %846
        %848 = vadd.xlane.f32.xlu0 %v689
        %v849 = vpop.xlane.xlu0 %848
        %850 = vadd.xlane.f32.xlu0 %v690
        %v851 = vpop.xlane.xlu0 %850
        %852 = vadd.xlane.f32.xlu0 %v691
        %v853 = vpop.xlane.xlu0 %852
        %854 = vadd.xlane.f32.xlu0 %v692
        %v855 = vpop.xlane.xlu0 %854
        %856 = vadd.xlane.f32.xlu0 %v693
        %v857 = vpop.xlane.xlu0 %856
        %858 = vadd.xlane.f32.xlu0 %v694
        %v859 = vpop.xlane.xlu0 %858
        %860 = vadd.xlane.f32.xlu0 %v695
        %v861 = vpop.xlane.xlu0 %860
        %862 = vadd.xlane.f32.xlu0 %v696
        %v863 = vpop.xlane.xlu0 %862
        %v864 = vmul.f32 %v833, %v715
        %v865 = vmul.f32 %v835, %v715
        %v866 = vmul.f32 %v837, %v715
        %v867 = vmul.f32 %v839, %v715
        %v868 = vmul.f32 %v841, %v715
        %v869 = vmul.f32 %v843, %v715
        %v870 = vmul.f32 %v845, %v715
        %v871 = vmul.f32 %v847, %v715
        %v872 = vmul.f32 %v849, %v715
        %v873 = vmul.f32 %v851, %v715
        %v874 = vmul.f32 %v853, %v715
        %v875 = vmul.f32 %v855, %v715
        %v876 = vmul.f32 %v857, %v715
        %v877 = vmul.f32 %v859, %v715
        %v878 = vmul.f32 %v861, %v715
        %v879 = vmul.f32 %v863, %v715
        %v880 = vmul.f32 %v681, %v681
        %v881 = vmul.f32 %v682, %v682
        %v882 = vmul.f32 %v683, %v683
        %v883 = vmul.f32 %v684, %v684
        %v884 = vmul.f32 %v685, %v685
        %v885 = vmul.f32 %v686, %v686
        %v886 = vmul.f32 %v687, %v687
        %v887 = vmul.f32 %v688, %v688
        %v888 = vmul.f32 %v689, %v689
        %v889 = vmul.f32 %v690, %v690
        %v890 = vmul.f32 %v691, %v691
        %v891 = vmul.f32 %v692, %v692
        %v892 = vmul.f32 %v693, %v693
        %v893 = vmul.f32 %v694, %v694
        %v894 = vmul.f32 %v695, %v695
        %v895 = vmul.f32 %v696, %v696
        %896 = vadd.xlane.f32.xlu0 %v880
        %v897 = vpop.xlane.xlu0 %896
        %898 = vadd.xlane.f32.xlu0 %v881
        %v899 = vpop.xlane.xlu0 %898
        %900 = vadd.xlane.f32.xlu0 %v882
        %v901 = vpop.xlane.xlu0 %900
        %902 = vadd.xlane.f32.xlu0 %v883
        %v903 = vpop.xlane.xlu0 %902
        %904 = vadd.xlane.f32.xlu0 %v884
        %v905 = vpop.xlane.xlu0 %904
        %906 = vadd.xlane.f32.xlu0 %v885
        %v907 = vpop.xlane.xlu0 %906
        %908 = vadd.xlane.f32.xlu0 %v886
        %v909 = vpop.xlane.xlu0 %908
        %910 = vadd.xlane.f32.xlu0 %v887
        %v911 = vpop.xlane.xlu0 %910
        %912 = vadd.xlane.f32.xlu0 %v888
        %v913 = vpop.xlane.xlu0 %912
        %914 = vadd.xlane.f32.xlu0 %v889
        %v915 = vpop.xlane.xlu0 %914
        %916 = vadd.xlane.f32.xlu0 %v890
        %v917 = vpop.xlane.xlu0 %916
        %918 = vadd.xlane.f32.xlu0 %v891
        %v919 = vpop.xlane.xlu0 %918
        %920 = vadd.xlane.f32.xlu0 %v892
        %v921 = vpop.xlane.xlu0 %920
        %922 = vadd.xlane.f32.xlu0 %v893
        %v923 = vpop.xlane.xlu0 %922
        %924 = vadd.xlane.f32.xlu0 %v894
        %v925 = vpop.xlane.xlu0 %924
        %926 = vadd.xlane.f32.xlu0 %v895
        %v927 = vpop.xlane.xlu0 %926
        %v928 = vmul.f32 %v897, %v715
        %v929 = vmul.f32 %v899, %v715
        %v930 = vmul.f32 %v901, %v715
        %v931 = vmul.f32 %v903, %v715
        %v932 = vmul.f32 %v905, %v715
        %v933 = vmul.f32 %v907, %v715
        %v934 = vmul.f32 %v909, %v715
        %v935 = vmul.f32 %v911, %v715
        %v936 = vmul.f32 %v913, %v715
        %v937 = vmul.f32 %v915, %v715
        %v938 = vmul.f32 %v917, %v715
        %v939 = vmul.f32 %v919, %v715
        %v940 = vmul.f32 %v921, %v715
        %v941 = vmul.f32 %v923, %v715
        %v942 = vmul.f32 %v925, %v715
        %v943 = vmul.f32 %v927, %v715
        %v944 = vmul.f32 %v864, %v864
        %v945 = vmul.f32 %v865, %v865
        %v946 = vmul.f32 %v866, %v866
        %v947 = vmul.f32 %v867, %v867
        %v948 = vmul.f32 %v868, %v868
        %v949 = vmul.f32 %v869, %v869
        %v950 = vmul.f32 %v870, %v870
        %v951 = vmul.f32 %v871, %v871
        %v952 = vmul.f32 %v872, %v872
        %v953 = vmul.f32 %v873, %v873
        %v954 = vmul.f32 %v874, %v874
        %v955 = vmul.f32 %v875, %v875
        %v956 = vmul.f32 %v876, %v876
        %v957 = vmul.f32 %v877, %v877
        %v958 = vmul.f32 %v878, %v878
        %v959 = vmul.f32 %v879, %v879
        %v960 = vsub.f32 %v928, %v944
        %v961 = vsub.f32 %v929, %v945
        %v962 = vsub.f32 %v930, %v946
        %v963 = vsub.f32 %v931, %v947
        %v964 = vsub.f32 %v932, %v948
        %v965 = vsub.f32 %v933, %v949
        %v966 = vsub.f32 %v934, %v950
        %v967 = vsub.f32 %v935, %v951
        %v968 = vsub.f32 %v936, %v952
        %v969 = vsub.f32 %v937, %v953
        %v970 = vsub.f32 %v938, %v954
        %v971 = vsub.f32 %v939, %v955
        %v972 = vsub.f32 %v940, %v956
        %v973 = vsub.f32 %v941, %v957
        %v974 = vsub.f32 %v942, %v958
        %v975 = vsub.f32 %v943, %v959
        %v976 = vsub.f32 %v681, %v864
        %v977 = vsub.f32 %v682, %v865
        %v978 = vsub.f32 %v683, %v866
        %v979 = vsub.f32 %v684, %v867
        %v980 = vsub.f32 %v685, %v868
        %v981 = vsub.f32 %v686, %v869
        %v982 = vsub.f32 %v687, %v870
        %v983 = vsub.f32 %v688, %v871
        %v984 = vsub.f32 %v689, %v872
        %v985 = vsub.f32 %v690, %v873
        %v986 = vsub.f32 %v691, %v874
        %v987 = vsub.f32 %v692, %v875
        %v988 = vsub.f32 %v693, %v876
        %v989 = vsub.f32 %v694, %v877
        %v990 = vsub.f32 %v695, %v878
        %v991 = vsub.f32 %v696, %v879
        %v992 = vadd.f32 %v960, 1e-05
        %v993 = vadd.f32 %v961, 1e-05
        %v994 = vadd.f32 %v962, 1e-05
        %v995 = vadd.f32 %v963, 1e-05
        %v996 = vadd.f32 %v964, 1e-05
        %v997 = vadd.f32 %v965, 1e-05
        %v998 = vadd.f32 %v966, 1e-05
        %v999 = vadd.f32 %v967, 1e-05
        %v1000 = vadd.f32 %v968, 1e-05
        %v1001 = vadd.f32 %v969, 1e-05
        %v1002 = vadd.f32 %v970, 1e-05
        %v1003 = vadd.f32 %v971, 1e-05
        %v1004 = vadd.f32 %v972, 1e-05
        %v1005 = vadd.f32 %v973, 1e-05
        %v1006 = vadd.f32 %v974, 1e-05
        %v1007 = vadd.f32 %v975, 1e-05
        %v1008 = vrsqrt.pop %v992
        %v1009 = vrsqrt.pop %v993
        %v1010 = vrsqrt.pop %v994
        %v1011 = vrsqrt.pop %v995
        %v1012 = vrsqrt.pop %v996
        %v1013 = vrsqrt.pop %v997
        %v1014 = vrsqrt.pop %v998
        %v1015 = vrsqrt.pop %v999
        %v1016 = vrsqrt.pop %v1000
        %v1017 = vrsqrt.pop %v1001
        %v1018 = vrsqrt.pop %v1002
        %v1019 = vrsqrt.pop %v1003
        %v1020 = vrsqrt.pop %v1004
        %v1021 = vrsqrt.pop %v1005
        %v1022 = vrsqrt.pop %v1006
        %v1023 = vrsqrt.pop %v1007
        %v1024 = vmul.f32 %v976, %v1008
        %v1025 = vmul.f32 %v977, %v1009
        %v1026 = vmul.f32 %v978, %v1010
        %v1027 = vmul.f32 %v979, %v1011
        %v1028 = vmul.f32 %v980, %v1012
        %v1029 = vmul.f32 %v981, %v1013
        %v1030 = vmul.f32 %v982, %v1014
        %v1031 = vmul.f32 %v983, %v1015
        %v1032 = vmul.f32 %v984, %v1016
        %v1033 = vmul.f32 %v985, %v1017
        %v1034 = vmul.f32 %v986, %v1018
        %v1035 = vmul.f32 %v987, %v1019
        %v1036 = vmul.f32 %v988, %v1020
        %v1037 = vmul.f32 %v989, %v1021
        %v1038 = vmul.f32 %v990, %v1022
        %v1039 = vmul.f32 %v991, %v1023
        %v1040 = vmul.f32 %v1024, %v808
        %v1041 = vmul.f32 %v1025, %v808
        %v1042 = vmul.f32 %v1026, %v808
        %v1043 = vmul.f32 %v1027, %v808
        %v1044 = vmul.f32 %v1028, %v808
        %v1045 = vmul.f32 %v1029, %v808
        %v1046 = vmul.f32 %v1030, %v808
        %v1047 = vmul.f32 %v1031, %v808
        %v1048 = vmul.f32 %v1032, %v808
        %v1049 = vmul.f32 %v1033, %v808
        %v1050 = vmul.f32 %v1034, %v808
        %v1051 = vmul.f32 %v1035, %v808
        %v1052 = vmul.f32 %v1036, %v808
        %v1053 = vmul.f32 %v1037, %v808
        %v1054 = vmul.f32 %v1038, %v808
        %v1055 = vmul.f32 %v1039, %v808
        %v1056 = vadd.f32 %v1040, %v822
        %v1057 = vadd.f32 %v1041, %v822
        %v1058 = vadd.f32 %v1042, %v822
        %v1059 = vadd.f32 %v1043, %v822
        %v1060 = vadd.f32 %v1044, %v822
        %v1061 = vadd.f32 %v1045, %v822
        %v1062 = vadd.f32 %v1046, %v822
        %v1063 = vadd.f32 %v1047, %v822
        %v1064 = vadd.f32 %v1048, %v822
        %v1065 = vadd.f32 %v1049, %v822
        %v1066 = vadd.f32 %v1050, %v822
        %v1067 = vadd.f32 %v1051, %v822
        %v1068 = vadd.f32 %v1052, %v822
        %v1069 = vadd.f32 %v1053, %v822
        %v1070 = vadd.f32 %v1054, %v822
        %v1071 = vadd.f32 %v1055, %v822
        %v1072 = vpack.c.bf16 %v825, %v824
        %v1073 = vpack.c.bf16 %v827, %v826
        %v1074 = vpack.c.bf16 %v829, %v828
        %v1075 = vpack.c.bf16 %v831, %v830
        %v1076 = vld [vmem:[#allocation7] sm:$0xf]
        %v1077 = vld [vmem:[#allocation7 + $0x4] sm:$0xf]
        %v1078 = vld [vmem:[#allocation7 + $0x8] sm:$0xf]
        %v1079 = vld [vmem:[#allocation7 + $0xc] sm:$0xf]
        %v1080 = vld [vmem:[#allocation7 + $0x10] sm:$0xf]
        %v1081 = vld [vmem:[#allocation7 + $0x14] sm:$0xf]
        %v1082 = vld [vmem:[#allocation7 + $0x18] sm:$0xf]
        %v1083 = vld [vmem:[#allocation7 + $0x1c] sm:$0xf]
        %v1084 = vld [vmem:[#allocation7 + $0x20] sm:$0xf]
        %v1085 = vld [vmem:[#allocation7 + $0x24] sm:$0xf]
        %v1086 = vld [vmem:[#allocation7 + $0x28] sm:$0xf]
        %v1087 = vld [vmem:[#allocation7 + $0x2c] sm:$0xf]
        %v1088 = vld [vmem:[#allocation7 + $0x30] sm:$0xf]
        %v1089 = vld [vmem:[#allocation7 + $0x34] sm:$0xf]
        %v1090 = vld [vmem:[#allocation7 + $0x38] sm:$0xf]
        %v1091 = vld [vmem:[#allocation7 + $0x3c] sm:$0xf]
        %v1092 = vld [vmem:[%s5] sm:$0x1]
        %v1094 = vlaneseq
        %v1095 = vshrl.u32 %v1094, 7
        %v1096 = vsub.s32 0, %v1095
        %v1097 = vrot.slane %v1092, %v1096
        %v1115 = vunpack.c.l.b16 %v1076
        %v1116 = vunpack.c.l.b16 %v1077
        %v1117 = vunpack.c.l.b16 %v1078
        %v1118 = vunpack.c.l.b16 %v1079
        %v1119 = vunpack.c.l.b16 %v1080
        %v1120 = vunpack.c.l.b16 %v1081
        %v1121 = vunpack.c.l.b16 %v1082
        %v1122 = vunpack.c.l.b16 %v1083
        %v1123 = vunpack.c.l.b16 %v1084
        %v1124 = vunpack.c.l.b16 %v1085
        %v1125 = vunpack.c.l.b16 %v1086
        %v1126 = vunpack.c.l.b16 %v1087
        %v1127 = vunpack.c.l.b16 %v1088
        %v1128 = vunpack.c.l.b16 %v1089
        %v1129 = vunpack.c.l.b16 %v1090
        %v1130 = vunpack.c.l.b16 %v1091
        %v1131 = vpack.c.b16 %v1116, %v1115
        %v1132 = vpack.c.b16 %v1118, %v1117
        %v1133 = vpack.c.b16 %v1120, %v1119
        %v1134 = vpack.c.b16 %v1122, %v1121
        %v1135 = vpack.c.b16 %v1124, %v1123
        %v1136 = vpack.c.b16 %v1126, %v1125
        %v1137 = vpack.c.b16 %v1128, %v1127
        %v1138 = vpack.c.b16 %v1130, %v1129
        %1147 = vmatprep.subr.bf16.mxu0 0
        %1148 = vmatpush1.bf16.msra.mxu0 %v1131
        %1149 = vmatprep.subr.bf16.mxu0 0
        %1150 = vmatpush1.bf16.msra.mxu0 %v1132
        %1151 = vmatprep.subr.bf16.mxu0 0
        %1152 = vmatpush1.bf16.msra.mxu0 %v1133
        %1153 = vmatprep.subr.bf16.mxu0 0
        %1154 = vmatpush1.bf16.msra.mxu0 %v1134
        %1155 = vmatprep.subr.bf16.mxu0 0
        %1156 = vmatpush1.bf16.msra.mxu0 %v1135
        %1157 = vmatprep.subr.bf16.mxu0 0
        %1158 = vmatpush1.bf16.msra.mxu0 %v1136
        %1159 = vmatprep.subr.bf16.mxu0 0
        %1160 = vmatpush1.bf16.msra.mxu0 %v1137
        %1161 = vmatprep.subr.bf16.mxu0 0
        %1162 = vmatpush1.bf16.msra.mxu0 %v1138
        %1163 = vmatprep.subr.bf16.mxu0 0
        %1164 = vmatpush1.bf16.msra.mxu0 0
        %1165 = vmatprep.subr.bf16.mxu0 0
        %1166 = vmatpush1.bf16.msra.mxu0 0
        %1167 = vmatprep.subr.bf16.mxu0 0
        %1168 = vmatpush1.bf16.msra.mxu0 0
        %1169 = vmatprep.subr.bf16.mxu0 0
        %1170 = vmatpush1.bf16.msra.mxu0 0
        %1171 = vmatprep.subr.bf16.mxu0 0
        %1172 = vmatpush1.bf16.msra.mxu0 0
        %1173 = vmatprep.subr.bf16.mxu0 0
        %1174 = vmatpush1.bf16.msra.mxu0 0
        %1175 = vmatprep.subr.bf16.mxu0 0
        %1176 = vmatpush1.bf16.msra.mxu0 0
        %1177 = vmatprep.subr.bf16.mxu0 0
        %1178 = vmatpush1.bf16.msra.mxu0 0
        %1179 = vmatprep.mubr.bf16.mxu0 0
        %1180 = vmatmul.mubr.bf16.gmra.mrb[0].mxu0 %v1072
        %v1181 = vpop.f32.mrb[0].mxu0
        %v1182 = vadd.f32 %v1097, %v1181
        %v1183 = vpop.f32.mrb[0].mxu0
        %v1184 = vpop.f32.mrb[0].mxu0
        %v1185 = vadd.f32 %v1097, %v1184
        %v1186 = vpop.f32.mrb[0].mxu0
        %1187 = vmatprep.mubr.bf16.mxu0 0
        %1188 = vmatmul.mubr.bf16.gmra.mrb[0].mxu0 %v1073
        %v1189 = vpop.f32.mrb[0].mxu0
        %v1190 = vadd.f32 %v1097, %v1189
        %v1191 = vpop.f32.mrb[0].mxu0
        %v1192 = vpop.f32.mrb[0].mxu0
        %v1193 = vadd.f32 %v1097, %v1192
        %v1194 = vpop.f32.mrb[0].mxu0
        %1195 = vmatprep.mubr.bf16.mxu0 0
        %1196 = vmatmul.mubr.bf16.gmra.mrb[0].mxu0 %v1074
        %v1197 = vpop.f32.mrb[0].mxu0
        %v1198 = vadd.f32 %v1097, %v1197
        %v1199 = vpop.f32.mrb[0].mxu0
        %v1200 = vpop.f32.mrb[0].mxu0
        %v1201 = vadd.f32 %v1097, %v1200
        %v1202 = vpop.f32.mrb[0].mxu0
        %1203 = vmatprep.mubr.bf16.mxu0 0
        %1204 = vmatmul.mubr.bf16.gmra.mrb[0].mxu0 %v1075
        %v1205 = vpop.f32.mrb[0].mxu0
        %v1206 = vadd.f32 %v1097, %v1205
        %v1207 = vpop.f32.mrb[0].mxu0
        %v1208 = vpop.f32.mrb[0].mxu0
        %v1209 = vadd.f32 %v1097, %v1208
        %v1210 = vpop.f32.mrb[0].mxu0
        %1211 = vdwg.mxu0
        %v1212 = vpack.c.bf16 %v1185, %v1182
        %v1213 = vpack.c.bf16 %v1193, %v1190
        %v1214 = vpack.c.bf16 %v1201, %v1198
        %v1215 = vpack.c.bf16 %v1209, %v1206
        %v1216 = vpack.c.bf16 %v1057, %v1056
        %v1217 = vpack.c.bf16 %v1059, %v1058
        %v1218 = vpack.c.bf16 %v1061, %v1060
        %v1219 = vpack.c.bf16 %v1063, %v1062
        %v1220 = vpack.c.bf16 %v1065, %v1064
        %v1221 = vpack.c.bf16 %v1067, %v1066
        %v1222 = vpack.c.bf16 %v1069, %v1068
        %v1223 = vpack.c.bf16 %v1071, %v1070
        %v1224 = vld [vmem:[#allocation8] sm:$0xff]
        %v1225 = vld [vmem:[#allocation8 + $0x8] sm:$0xff]
        %v1226 = vld [vmem:[#allocation8 + $0x10] sm:$0xff]
        %v1227 = vld [vmem:[#allocation8 + $0x18] sm:$0xff]
        %v1228 = vld [vmem:[#allocation8 + $0x20] sm:$0xff]
        %v1229 = vld [vmem:[#allocation8 + $0x28] sm:$0xff]
        %v1230 = vld [vmem:[#allocation8 + $0x30] sm:$0xff]
        %v1231 = vld [vmem:[#allocation8 + $0x38] sm:$0xff]
        %v1232 = vld [vmem:[#allocation8 + $0x40] sm:$0xff]
        %v1233 = vld [vmem:[#allocation8 + $0x48] sm:$0xff]
        %v1234 = vld [vmem:[#allocation8 + $0x50] sm:$0xff]
        %v1235 = vld [vmem:[#allocation8 + $0x58] sm:$0xff]
        %v1236 = vld [vmem:[#allocation8 + $0x60] sm:$0xff]
        %v1237 = vld [vmem:[#allocation8 + $0x68] sm:$0xff]
        %v1238 = vld [vmem:[#allocation8 + $0x70] sm:$0xff]
        %v1239 = vld [vmem:[#allocation8 + $0x78] sm:$0xff]
        %v1240 = vld [vmem:[%s7] sm:$0x3]
        %v1242 = vlaneseq
        %v1243 = vshrl.u32 %v1242, 7
        %v1244 = vsub.s32 0, %v1243
        %v1245 = vrot.slane %v1240, %v1244
        %v1246 = vlaneseq
        %v1247 = vshrl.u32 %v1246, 7
        %v1248 = vsub.s32 1, %v1247
        %v1249 = vrot.slane %v1240, %v1248
        %v1268 = vunpack.c.l.b16 %v1224
        %v1269 = vunpack.c.h.b16 %v1224
        %v1270 = vunpack.c.l.b16 %v1225
        %v1271 = vunpack.c.h.b16 %v1225
        %v1272 = vunpack.c.l.b16 %v1226
        %v1273 = vunpack.c.h.b16 %v1226
        %v1274 = vunpack.c.l.b16 %v1227
        %v1275 = vunpack.c.h.b16 %v1227
        %v1276 = vunpack.c.l.b16 %v1228
        %v1277 = vunpack.c.h.b16 %v1228
        %v1278 = vunpack.c.l.b16 %v1229
        %v1279 = vunpack.c.h.b16 %v1229
        %v1280 = vunpack.c.l.b16 %v1230
        %v1281 = vunpack.c.h.b16 %v1230
        %v1282 = vunpack.c.l.b16 %v1231
        %v1283 = vunpack.c.h.b16 %v1231
        %v1284 = vunpack.c.l.b16 %v1232
        %v1285 = vunpack.c.h.b16 %v1232
        %v1286 = vunpack.c.l.b16 %v1233
        %v1287 = vunpack.c.h.b16 %v1233
        %v1288 = vunpack.c.l.b16 %v1234
        %v1289 = vunpack.c.h.b16 %v1234
        %v1290 = vunpack.c.l.b16 %v1235
        %v1291 = vunpack.c.h.b16 %v1235
        %v1292 = vunpack.c.l.b16 %v1236
        %v1293 = vunpack.c.h.b16 %v1236
        %v1294 = vunpack.c.l.b16 %v1237
        %v1295 = vunpack.c.h.b16 %v1237
        %v1296 = vunpack.c.l.b16 %v1238
        %v1297 = vunpack.c.h.b16 %v1238
        %v1298 = vunpack.c.l.b16 %v1239
        %v1299 = vunpack.c.h.b16 %v1239
        %v1300 = vpack.c.b16 %v1270, %v1268
        %v1301 = vpack.c.b16 %v1271, %v1269
        %v1302 = vpack.c.b16 %v1274, %v1272
        %v1303 = vpack.c.b16 %v1275, %v1273
        %v1304 = vpack.c.b16 %v1278, %v1276
        %v1305 = vpack.c.b16 %v1279, %v1277
        %v1306 = vpack.c.b16 %v1282, %v1280
        %v1307 = vpack.c.b16 %v1283, %v1281
        %v1308 = vpack.c.b16 %v1286, %v1284
        %v1309 = vpack.c.b16 %v1287, %v1285
        %v1310 = vpack.c.b16 %v1290, %v1288
        %v1311 = vpack.c.b16 %v1291, %v1289
        %v1312 = vpack.c.b16 %v1294, %v1292
        %v1313 = vpack.c.b16 %v1295, %v1293
        %v1314 = vpack.c.b16 %v1298, %v1296
        %v1315 = vpack.c.b16 %v1299, %v1297
        %1332 = vmatprep.subr.bf16.mxu0 %v1301
        %1333 = vmatpush1.bf16.msra.mxu0 %v1300
        %1334 = vmatprep.subr.bf16.mxu0 %v1303
        %1335 = vmatpush1.bf16.msra.mxu0 %v1302
        %1336 = vmatprep.subr.bf16.mxu0 %v1305
        %1337 = vmatpush1.bf16.msra.mxu0 %v1304
        %1338 = vmatprep.subr.bf16.mxu0 %v1307
        %1339 = vmatpush1.bf16.msra.mxu0 %v1306
        %1340 = vmatprep.subr.bf16.mxu0 %v1309
        %1341 = vmatpush1.bf16.msra.mxu0 %v1308
        %1342 = vmatprep.subr.bf16.mxu0 %v1311
        %1343 = vmatpush1.bf16.msra.mxu0 %v1310
        %1344 = vmatprep.subr.bf16.mxu0 %v1313
        %1345 = vmatpush1.bf16.msra.mxu0 %v1312
        %1346 = vmatprep.subr.bf16.mxu0 %v1315
        %1347 = vmatpush1.bf16.msra.mxu0 %v1314
        %1348 = vmatprep.subr.bf16.mxu0 0
        %1349 = vmatpush1.bf16.msra.mxu0 0
        %1350 = vmatprep.subr.bf16.mxu0 0
        %1351 = vmatpush1.bf16.msra.mxu0 0
        %1352 = vmatprep.subr.bf16.mxu0 0
        %1353 = vmatpush1.bf16.msra.mxu0 0
        %1354 = vmatprep.subr.bf16.mxu0 0
        %1355 = vmatpush1.bf16.msra.mxu0 0
        %1356 = vmatprep.subr.bf16.mxu0 0
        %1357 = vmatpush1.bf16.msra.mxu0 0
        %1358 = vmatprep.subr.bf16.mxu0 0
        %1359 = vmatpush1.bf16.msra.mxu0 0
        %1360 = vmatprep.subr.bf16.mxu0 0
        %1361 = vmatpush1.bf16.msra.mxu0 0
        %1362 = vmatprep.subr.bf16.mxu0 0
        %1363 = vmatpush1.bf16.msra.mxu0 0
        %1364 = vmatprep.mubr.bf16.mxu0 0
        %1365 = vmatmul.mubr.bf16.gmra.mrb[0].mxu0 %v1216
        %v1366 = vpop.f32.mrb[0].mxu0
        %v1367 = vadd.f32 %v1245, %v1366
        %v1368 = vpop.f32.mrb[0].mxu0
        %v1369 = vadd.f32 %v1249, %v1368
        %v1370 = vpop.f32.mrb[0].mxu0
        %v1371 = vadd.f32 %v1245, %v1370
        %v1372 = vpop.f32.mrb[0].mxu0
        %v1373 = vadd.f32 %v1249, %v1372
        %1374 = vmatprep.mubr.bf16.mxu0 0
        %1375 = vmatmul.mubr.bf16.gmra.mrb[0].mxu0 %v1217
        %v1376 = vpop.f32.mrb[0].mxu0
        %v1377 = vadd.f32 %v1245, %v1376
        %v1378 = vpop.f32.mrb[0].mxu0
        %v1379 = vadd.f32 %v1249, %v1378
        %v1380 = vpop.f32.mrb[0].mxu0
        %v1381 = vadd.f32 %v1245, %v1380
        %v1382 = vpop.f32.mrb[0].mxu0
        %v1383 = vadd.f32 %v1249, %v1382
        %1384 = vmatprep.mubr.bf16.mxu0 0
        %1385 = vmatmul.mubr.bf16.gmra.mrb[0].mxu0 %v1218
        %v1386 = vpop.f32.mrb[0].mxu0
        %v1387 = vadd.f32 %v1245, %v1386
        %v1388 = vpop.f32.mrb[0].mxu0
        %v1389 = vadd.f32 %v1249, %v1388
        %v1390 = vpop.f32.mrb[0].mxu0
        %v1391 = vadd.f32 %v1245, %v1390
        %v1392 = vpop.f32.mrb[0].mxu0
        %v1393 = vadd.f32 %v1249, %v1392
        %1394 = vmatprep.mubr.bf16.mxu0 0
        %1395 = vmatmul.mubr.bf16.gmra.mrb[0].mxu0 %v1219
        %v1396 = vpop.f32.mrb[0].mxu0
        %v1397 = vadd.f32 %v1245, %v1396
        %v1398 = vpop.f32.mrb[0].mxu0
        %v1399 = vadd.f32 %v1249, %v1398
        %v1400 = vpop.f32.mrb[0].mxu0
        %v1401 = vadd.f32 %v1245, %v1400
        %v1402 = vpop.f32.mrb[0].mxu0
        %v1403 = vadd.f32 %v1249, %v1402
        %1404 = vmatprep.mubr.bf16.mxu0 0
        %1405 = vmatmul.mubr.bf16.gmra.mrb[0].mxu0 %v1220
        %v1406 = vpop.f32.mrb[0].mxu0
        %v1407 = vadd.f32 %v1245, %v1406
        %v1408 = vpop.f32.mrb[0].mxu0
        %v1409 = vadd.f32 %v1249, %v1408
        %v1410 = vpop.f32.mrb[0].mxu0
        %v1411 = vadd.f32 %v1245, %v1410
        %v1412 = vpop.f32.mrb[0].mxu0
        %v1413 = vadd.f32 %v1249, %v1412
        %1414 = vmatprep.mubr.bf16.mxu0 0
        %1415 = vmatmul.mubr.bf16.gmra.mrb[0].mxu0 %v1221
        %v1416 = vpop.f32.mrb[0].mxu0
        %v1417 = vadd.f32 %v1245, %v1416
        %v1418 = vpop.f32.mrb[0].mxu0
        %v1419 = vadd.f32 %v1249, %v1418
        %v1420 = vpop.f32.mrb[0].mxu0
        %v1421 = vadd.f32 %v1245, %v1420
        %v1422 = vpop.f32.mrb[0].mxu0
        %v1423 = vadd.f32 %v1249, %v1422
        %1424 = vmatprep.mubr.bf16.mxu0 0
        %1425 = vmatmul.mubr.bf16.gmra.mrb[0].mxu0 %v1222
        %v1426 = vpop.f32.mrb[0].mxu0
        %v1427 = vadd.f32 %v1245, %v1426
        %v1428 = vpop.f32.mrb[0].mxu0
        %v1429 = vadd.f32 %v1249, %v1428
        %v1430 = vpop.f32.mrb[0].mxu0
        %v1431 = vadd.f32 %v1245, %v1430
        %v1432 = vpop.f32.mrb[0].mxu0
        %v1433 = vadd.f32 %v1249, %v1432
        %1434 = vmatprep.mubr.bf16.mxu0 0
        %1435 = vmatmul.mubr.bf16.gmra.mrb[0].mxu0 %v1223
        %v1436 = vpop.f32.mrb[0].mxu0
        %v1437 = vadd.f32 %v1245, %v1436
        %v1438 = vpop.f32.mrb[0].mxu0
        %v1439 = vadd.f32 %v1249, %v1438
        %v1440 = vpop.f32.mrb[0].mxu0
        %v1441 = vadd.f32 %v1245, %v1440
        %v1442 = vpop.f32.mrb[0].mxu0
        %v1443 = vadd.f32 %v1249, %v1442
        %1444 = vdwg.mxu0
        %v1445 = vpack.c.bf16 %v1371, %v1367
        %v1446 = vpack.c.bf16 %v1373, %v1369
        %v1447 = vpack.c.bf16 %v1381, %v1377
        %v1448 = vpack.c.bf16 %v1383, %v1379
        %v1449 = vpack.c.bf16 %v1391, %v1387
        %v1450 = vpack.c.bf16 %v1393, %v1389
        %v1451 = vpack.c.bf16 %v1401, %v1397
        %v1452 = vpack.c.bf16 %v1403, %v1399
        %v1453 = vpack.c.bf16 %v1411, %v1407
        %v1454 = vpack.c.bf16 %v1413, %v1409
        %v1455 = vpack.c.bf16 %v1421, %v1417
        %v1456 = vpack.c.bf16 %v1423, %v1419
        %v1457 = vpack.c.bf16 %v1431, %v1427
        %v1458 = vpack.c.bf16 %v1433, %v1429
        %v1459 = vpack.c.bf16 %v1441, %v1437
        %v1460 = vpack.c.bf16 %v1443, %v1439
        %s1461 = smul.u32 %s43, 64
        %v1462 = vlaneseq
        %v1463 = vshrl.u32 %v1462, 7
        %v1464 = vadd.s32 %v1463, 8
        %v1465 = vadd.s32 %v1463, 16
        %v1466 = vadd.s32 %v1463, 24
        %v1467 = vadd.s32 %v1463, 32
        %v1468 = vadd.s32 %v1463, 40
        %v1469 = vadd.s32 %v1463, 48
        %v1470 = vadd.s32 %v1463, 56
        %v1471 = vstv %s1461
        %v1472 = vadd.s32 %v1471, %v1463
        %v1473 = vadd.s32 %v1471, %v1464
        %v1474 = vadd.s32 %v1471, %v1465
        %v1475 = vadd.s32 %v1471, %v1466
        %v1476 = vadd.s32 %v1471, %v1467
        %v1477 = vadd.s32 %v1471, %v1468
        %v1478 = vadd.s32 %v1471, %v1469
        %v1479 = vadd.s32 %v1471, %v1470
        %v1480 = vlaneseq
        %v1481 = vand.u32 %v1480, 127
        %vm1482 = vcmp.le.s32.totalorder %v1481, %v1472
        %vm1483 = vcmp.le.s32.totalorder %v1481, %v1473
        %vm1484 = vcmp.le.s32.totalorder %v1481, %v1474
        %vm1485 = vcmp.le.s32.totalorder %v1481, %v1475
        %vm1486 = vcmp.le.s32.totalorder %v1481, %v1476
        %vm1487 = vcmp.le.s32.totalorder %v1481, %v1477
        %vm1488 = vcmp.le.s32.totalorder %v1481, %v1478
        %vm1489 = vcmp.le.s32.totalorder %v1481, %v1479
        %vm1490 = vcmask 261120
        %v1492 = vsel %vm1490, %v1212, 0
        %v1495 = vsel %vm1490, %v1213, 0
        %v1498 = vsel %vm1490, %v1214, 0
        %v1501 = vsel %vm1490, %v1215, 0
        %v1504 = vsel %vm1490, %v1445, 0
        %v1507 = vsel %vm1490, %v1447, 0
        %v1510 = vsel %vm1490, %v1449, 0
        %v1513 = vsel %vm1490, %v1451, 0
        %v1516 = vsel %vm1490, %v1453, 0
        %v1519 = vsel %vm1490, %v1455, 0
        %v1522 = vsel %vm1490, %v1457, 0
        %v1525 = vsel %vm1490, %v1459, 0
        %1527 = vmatprep.subr.bf16.mxu0 0
        %1528 = vmatpush1.bf16.xpose.msra.mxu0 %v1504
        %1529 = vmatprep.subr.bf16.mxu0 0
        %1530 = vmatpush1.bf16.xpose.msra.mxu0 %v1507
        %1531 = vmatprep.subr.bf16.mxu0 0
        %1532 = vmatpush1.bf16.xpose.msra.mxu0 %v1510
        %1533 = vmatprep.subr.bf16.mxu0 0
        %1534 = vmatpush1.bf16.xpose.msra.mxu0 %v1513
        %1535 = vmatprep.subr.bf16.mxu0 0
        %1536 = vmatpush1.bf16.xpose.msra.mxu0 %v1516
        %1537 = vmatprep.subr.bf16.mxu0 0
        %1538 = vmatpush1.bf16.xpose.msra.mxu0 %v1519
        %1539 = vmatprep.subr.bf16.mxu0 0
        %1540 = vmatpush1.bf16.xpose.msra.mxu0 %v1522
        %1541 = vmatprep.subr.bf16.mxu0 0
        %1542 = vmatpush1.bf16.xpose.msra.mxu0 %v1525
        %1543 = vmatprep.subr.bf16.mxu0 0
        %1544 = vmatpush1.bf16.xpose.msra.mxu0 0
        %1545 = vmatprep.subr.bf16.mxu0 0
        %1546 = vmatpush1.bf16.xpose.msra.mxu0 0
        %1547 = vmatprep.subr.bf16.mxu0 0
        %1548 = vmatpush1.bf16.xpose.msra.mxu0 0
        %1549 = vmatprep.subr.bf16.mxu0 0
        %1550 = vmatpush1.bf16.xpose.msra.mxu0 0
        %1551 = vmatprep.subr.bf16.mxu0 0
        %1552 = vmatpush1.bf16.xpose.msra.mxu0 0
        %1553 = vmatprep.subr.bf16.mxu0 0
        %1554 = vmatpush1.bf16.xpose.msra.mxu0 0
        %1555 = vmatprep.subr.bf16.mxu0 0
        %1556 = vmatpush1.bf16.xpose.msra.mxu0 0
        %1557 = vmatprep.subr.bf16.mxu0 0
        %1558 = vmatpush1.bf16.xpose.msra.mxu0 0
        %1559 = vmatprep.mubr.bf16.mxu0 0
        %1560 = vmatmul.mubr.bf16.gmra.mrb[0].mxu0 %v1492
        %v1561 = vpop.f32.mrb[0].mxu0
        %v1562 = vadd.f32 0.0, %v1561
        %v1563 = vpop.f32.mrb[0].mxu0
        %v1564 = vpop.f32.mrb[0].mxu0
        %v1565 = vadd.f32 0.0, %v1564
        %v1566 = vpop.f32.mrb[0].mxu0
        %1567 = vmatprep.mubr.bf16.mxu0 0
        %1568 = vmatmul.mubr.bf16.gmra.mrb[0].mxu0 %v1495
        %v1569 = vpop.f32.mrb[0].mxu0
        %v1570 = vadd.f32 0.0, %v1569
        %v1571 = vpop.f32.mrb[0].mxu0
        %v1572 = vpop.f32.mrb[0].mxu0
        %v1573 = vadd.f32 0.0, %v1572
        %v1574 = vpop.f32.mrb[0].mxu0
        %1575 = vmatprep.mubr.bf16.mxu0 0
        %1576 = vmatmul.mubr.bf16.gmra.mrb[0].mxu0 %v1498
        %v1577 = vpop.f32.mrb[0].mxu0
        %v1578 = vadd.f32 0.0, %v1577
        %v1579 = vpop.f32.mrb[0].mxu0
        %v1580 = vpop.f32.mrb[0].mxu0
        %v1581 = vadd.f32 0.0, %v1580
        %v1582 = vpop.f32.mrb[0].mxu0
        %1583 = vmatprep.mubr.bf16.mxu0 0
        %1584 = vmatmul.mubr.bf16.gmra.mrb[0].mxu0 %v1501
        %v1585 = vpop.f32.mrb[0].mxu0
        %v1586 = vadd.f32 0.0, %v1585
        %v1587 = vpop.f32.mrb[0].mxu0
        %v1588 = vpop.f32.mrb[0].mxu0
        %v1589 = vadd.f32 0.0, %v1588
        %v1590 = vpop.f32.mrb[0].mxu0
        %1591 = vdwg.mxu0
        %v1592 = vsel %vm1482, %v1562, -1e+30
        %v1593 = vsel %vm1483, %v1565, -1e+30
        %v1594 = vsel %vm1484, %v1570, -1e+30
        %v1595 = vsel %vm1485, %v1573, -1e+30
        %v1596 = vsel %vm1486, %v1578, -1e+30
        %v1597 = vsel %vm1487, %v1581, -1e+30
        %v1598 = vsel %vm1488, %v1586, -1e+30
        %v1599 = vsel %vm1489, %v1589, -1e+30
        %1600 = vmax.xlane.f32.xlu0 %v1592
        %v1601 = vpop.xlane.xlu0 %1600
        %1602 = vmax.xlane.f32.xlu0 %v1593
        %v1603 = vpop.xlane.xlu0 %1602
        %1604 = vmax.xlane.f32.xlu0 %v1594
        %v1605 = vpop.xlane.xlu0 %1604
        %1606 = vmax.xlane.f32.xlu0 %v1595
        %v1607 = vpop.xlane.xlu0 %1606
        %1608 = vmax.xlane.f32.xlu0 %v1596
        %v1609 = vpop.xlane.xlu0 %1608
        %1610 = vmax.xlane.f32.xlu0 %v1597
        %v1611 = vpop.xlane.xlu0 %1610
        %1612 = vmax.xlane.f32.xlu0 %v1598
        %v1613 = vpop.xlane.xlu0 %1612
        %1614 = vmax.xlane.f32.xlu0 %v1599
        %v1615 = vpop.xlane.xlu0 %1614
        %v1616 = vsub.f32 %v1592, %v1601
        %v1617 = vsub.f32 %v1593, %v1603
        %v1618 = vsub.f32 %v1594, %v1605
        %v1619 = vsub.f32 %v1595, %v1607
        %v1620 = vsub.f32 %v1596, %v1609
        %v1621 = vsub.f32 %v1597, %v1611
        %v1622 = vsub.f32 %v1598, %v1613
        %v1623 = vsub.f32 %v1599, %v1615
        %v1624 = vmul.f32 %v1616, 1.442695
        %v1625 = vpow.pop %v1624
        %v1626 = vmul.f32 %v1617, 1.442695
        %v1627 = vpow.pop %v1626
        %v1628 = vmul.f32 %v1618, 1.442695
        %v1629 = vpow.pop %v1628
        %v1630 = vmul.f32 %v1619, 1.442695
        %v1631 = vpow.pop %v1630
        %v1632 = vmul.f32 %v1620, 1.442695
        %v1633 = vpow.pop %v1632
        %v1634 = vmul.f32 %v1621, 1.442695
        %v1635 = vpow.pop %v1634
        %v1636 = vmul.f32 %v1622, 1.442695
        %v1637 = vpow.pop %v1636
        %v1638 = vmul.f32 %v1623, 1.442695
        %v1639 = vpow.pop %v1638
        %1640 = vadd.xlane.f32.xlu0 %v1625
        %v1641 = vpop.xlane.xlu0 %1640
        %1642 = vadd.xlane.f32.xlu0 %v1627
        %v1643 = vpop.xlane.xlu0 %1642
        %1644 = vadd.xlane.f32.xlu0 %v1629
        %v1645 = vpop.xlane.xlu0 %1644
        %1646 = vadd.xlane.f32.xlu0 %v1631
        %v1647 = vpop.xlane.xlu0 %1646
        %1648 = vadd.xlane.f32.xlu0 %v1633
        %v1649 = vpop.xlane.xlu0 %1648
        %1650 = vadd.xlane.f32.xlu0 %v1635
        %v1651 = vpop.xlane.xlu0 %1650
        %1652 = vadd.xlane.f32.xlu0 %v1637
        %v1653 = vpop.xlane.xlu0 %1652
        %1654 = vadd.xlane.f32.xlu0 %v1639
        %v1655 = vpop.xlane.xlu0 %1654
        %v1656 = vpack.c.bf16 %v1627, %v1625
        %v1657 = vpack.c.bf16 %v1631, %v1629
        %v1658 = vpack.c.bf16 %v1635, %v1633
        %v1659 = vpack.c.bf16 %v1639, %v1637
        %1660 = vmatprep.subr.bf16.mxu0 0
        %1661 = vmatpush1.bf16.msra.mxu0 %v1446
        %1662 = vmatprep.subr.bf16.mxu0 0
        %1663 = vmatpush1.bf16.msra.mxu0 %v1448
        %1664 = vmatprep.subr.bf16.mxu0 0
        %1665 = vmatpush1.bf16.msra.mxu0 %v1450
        %1666 = vmatprep.subr.bf16.mxu0 0
        %1667 = vmatpush1.bf16.msra.mxu0 %v1452
        %1668 = vmatprep.subr.bf16.mxu0 0
        %1669 = vmatpush1.bf16.msra.mxu0 %v1454
        %1670 = vmatprep.subr.bf16.mxu0 0
        %1671 = vmatpush1.bf16.msra.mxu0 %v1456
        %1672 = vmatprep.subr.bf16.mxu0 0
        %1673 = vmatpush1.bf16.msra.mxu0 %v1458
        %1674 = vmatprep.subr.bf16.mxu0 0
        %1675 = vmatpush1.bf16.msra.mxu0 %v1460
        %1676 = vmatprep.subr.bf16.mxu0 0
        %1677 = vmatpush1.bf16.msra.mxu0 0
        %1678 = vmatprep.subr.bf16.mxu0 0
        %1679 = vmatpush1.bf16.msra.mxu0 0
        %1680 = vmatprep.subr.bf16.mxu0 0
        %1681 = vmatpush1.bf16.msra.mxu0 0
        %1682 = vmatprep.subr.bf16.mxu0 0
        %1683 = vmatpush1.bf16.msra.mxu0 0
        %1684 = vmatprep.subr.bf16.mxu0 0
        %1685 = vmatpush1.bf16.msra.mxu0 0
        %1686 = vmatprep.subr.bf16.mxu0 0
        %1687 = vmatpush1.bf16.msra.mxu0 0
        %1688 = vmatprep.subr.bf16.mxu0 0
        %1689 = vmatpush1.bf16.msra.mxu0 0
        %1690 = vmatprep.subr.bf16.mxu0 0
        %1691 = vmatpush1.bf16.msra.mxu0 0
        %1692 = vmatprep.mubr.bf16.mxu0 0
        %1693 = vmatmul.mubr.bf16.gmra.mrb[0].mxu0 %v1656
        %v1694 = vpop.f32.mrb[0].mxu0
        %v1695 = vadd.f32 0.0, %v1694
        %v1696 = vpop.f32.mrb[0].mxu0
        %v1697 = vpop.f32.mrb[0].mxu0
        %v1698 = vadd.f32 0.0, %v1697
        %v1699 = vpop.f32.mrb[0].mxu0
        %1700 = vmatprep.mubr.bf16.mxu0 0
        %1701 = vmatmul.mubr.bf16.gmra.mrb[0].mxu0 %v1657
        %v1702 = vpop.f32.mrb[0].mxu0
        %v1703 = vadd.f32 0.0, %v1702
        %v1704 = vpop.f32.mrb[0].mxu0
        %v1705 = vpop.f32.mrb[0].mxu0
        %v1706 = vadd.f32 0.0, %v1705
        %v1707 = vpop.f32.mrb[0].mxu0
        %1708 = vmatprep.mubr.bf16.mxu0 0
        %1709 = vmatmul.mubr.bf16.gmra.mrb[0].mxu0 %v1658
        %v1710 = vpop.f32.mrb[0].mxu0
        %v1711 = vadd.f32 0.0, %v1710
        %v1712 = vpop.f32.mrb[0].mxu0
        %v1713 = vpop.f32.mrb[0].mxu0
        %v1714 = vadd.f32 0.0, %v1713
        %v1715 = vpop.f32.mrb[0].mxu0
        %1716 = vmatprep.mubr.bf16.mxu0 0
        %1717 = vmatmul.mubr.bf16.gmra.mrb[0].mxu0 %v1659
        %v1718 = vpop.f32.mrb[0].mxu0
        %v1719 = vadd.f32 0.0, %v1718
        %v1720 = vpop.f32.mrb[0].mxu0
        %v1721 = vpop.f32.mrb[0].mxu0
        %v1722 = vadd.f32 0.0, %v1721
        %v1723 = vpop.f32.mrb[0].mxu0
        %1724 = vdwg.mxu0
        %v1725 = vrcp.pop %v1641
        %v1726 = vrcp.pop %v1643
        %v1727 = vrcp.pop %v1645
        %v1728 = vrcp.pop %v1647
        %v1729 = vrcp.pop %v1649
        %v1730 = vrcp.pop %v1651
        %v1731 = vrcp.pop %v1653
        %v1732 = vrcp.pop %v1655
        %v1733 = vmul.f32 %v1695, %v1725
        %v1734 = vmul.f32 %v1698, %v1726
        %v1735 = vmul.f32 %v1703, %v1727
        %v1736 = vmul.f32 %v1706, %v1728
        %v1737 = vmul.f32 %v1711, %v1729
        %v1738 = vmul.f32 %v1714, %v1730
        %v1739 = vmul.f32 %v1719, %v1731
        %v1740 = vmul.f32 %v1722, %v1732
        %v1741 = vpack.c.bf16 %v1734, %v1733
        %v1742 = vpack.c.bf16 %v1736, %v1735
        %v1743 = vpack.c.bf16 %v1738, %v1737
        %v1744 = vpack.c.bf16 %v1740, %v1739
        %v1745 = vld [vmem:[#allocation10] sm:$0xf]
        %v1746 = vld [vmem:[#allocation10 + $0x4] sm:$0xf]
        %v1747 = vld [vmem:[#allocation10 + $0x8] sm:$0xf]
        %v1748 = vld [vmem:[#allocation10 + $0xc] sm:$0xf]
        %1753 = vrot.lane.b32.xlu0 %v1212, 96
        %v1754 = vpop.permute.xlu0 %1753
        %1755 = vrot.lane.b32.xlu0 %v1213, 96
        %v1756 = vpop.permute.xlu0 %1755
        %1757 = vrot.lane.b32.xlu0 %v1214, 96
        %v1758 = vpop.permute.xlu0 %1757
        %1759 = vrot.lane.b32.xlu0 %v1215, 96
        %v1760 = vpop.permute.xlu0 %1759
        %1769 = vrot.lane.b32.xlu0 %v1445, 96
        %v1770 = vpop.permute.xlu0 %1769
        %1771 = vrot.lane.b32.xlu0 %v1447, 96
        %v1772 = vpop.permute.xlu0 %1771
        %1773 = vrot.lane.b32.xlu0 %v1449, 96
        %v1774 = vpop.permute.xlu0 %1773
        %1775 = vrot.lane.b32.xlu0 %v1451, 96
        %v1776 = vpop.permute.xlu0 %1775
        %1777 = vrot.lane.b32.xlu0 %v1453, 96
        %v1778 = vpop.permute.xlu0 %1777
        %1779 = vrot.lane.b32.xlu0 %v1455, 96
        %v1780 = vpop.permute.xlu0 %1779
        %1781 = vrot.lane.b32.xlu0 %v1457, 96
        %v1782 = vpop.permute.xlu0 %1781
        %1783 = vrot.lane.b32.xlu0 %v1459, 96
        %v1784 = vpop.permute.xlu0 %1783
        %v1786 = vsel %vm1490, %v1754, 0
        %v1789 = vsel %vm1490, %v1756, 0
        %v1792 = vsel %vm1490, %v1758, 0
        %v1795 = vsel %vm1490, %v1760, 0
        %v1798 = vsel %vm1490, %v1770, 0
        %v1801 = vsel %vm1490, %v1772, 0
        %v1804 = vsel %vm1490, %v1774, 0
        %v1807 = vsel %vm1490, %v1776, 0
        %v1810 = vsel %vm1490, %v1778, 0
        %v1813 = vsel %vm1490, %v1780, 0
        %v1816 = vsel %vm1490, %v1782, 0
        %v1819 = vsel %vm1490, %v1784, 0
        %1821 = vmatprep.subr.bf16.mxu0 0
        %1822 = vmatpush1.bf16.xpose.msra.mxu0 %v1798
        %1823 = vmatprep.subr.bf16.mxu0 0
        %1824 = vmatpush1.bf16.xpose.msra.mxu0 %v1801
        %1825 = vmatprep.subr.bf16.mxu0 0
        %1826 = vmatpush1.bf16.xpose.msra.mxu0 %v1804
        %1827 = vmatprep.subr.bf16.mxu0 0
        %1828 = vmatpush1.bf16.xpose.msra.mxu0 %v1807
        %1829 = vmatprep.subr.bf16.mxu0 0
        %1830 = vmatpush1.bf16.xpose.msra.mxu0 %v1810
        %1831 = vmatprep.subr.bf16.mxu0 0
        %1832 = vmatpush1.bf16.xpose.msra.mxu0 %v1813
        %1833 = vmatprep.subr.bf16.mxu0 0
        %1834 = vmatpush1.bf16.xpose.msra.mxu0 %v1816
        %1835 = vmatprep.subr.bf16.mxu0 0
        %1836 = vmatpush1.bf16.xpose.msra.mxu0 %v1819
        %1837 = vmatprep.subr.bf16.mxu0 0
        %1838 = vmatpush1.bf16.xpose.msra.mxu0 0
        %1839 = vmatprep.subr.bf16.mxu0 0
        %1840 = vmatpush1.bf16.xpose.msra.mxu0 0
        %1841 = vmatprep.subr.bf16.mxu0 0
        %1842 = vmatpush1.bf16.xpose.msra.mxu0 0
        %1843 = vmatprep.subr.bf16.mxu0 0
        %1844 = vmatpush1.bf16.xpose.msra.mxu0 0
        %1845 = vmatprep.subr.bf16.mxu0 0
        %1846 = vmatpush1.bf16.xpose.msra.mxu0 0
        %1847 = vmatprep.subr.bf16.mxu0 0
        %1848 = vmatpush1.bf16.xpose.msra.mxu0 0
        %1849 = vmatprep.subr.bf16.mxu0 0
        %1850 = vmatpush1.bf16.xpose.msra.mxu0 0
        %1851 = vmatprep.subr.bf16.mxu0 0
        %1852 = vmatpush1.bf16.xpose.msra.mxu0 0
        %1853 = vmatprep.mubr.bf16.mxu0 0
        %1854 = vmatmul.mubr.bf16.gmra.mrb[0].mxu0 %v1786
        %v1855 = vpop.f32.mrb[0].mxu0
        %v1856 = vadd.f32 0.0, %v1855
        %v1857 = vpop.f32.mrb[0].mxu0
        %v1858 = vpop.f32.mrb[0].mxu0
        %v1859 = vadd.f32 0.0, %v1858
        %v1860 = vpop.f32.mrb[0].mxu0
        %1861 = vmatprep.mubr.bf16.mxu0 0
        %1862 = vmatmul.mubr.bf16.gmra.mrb[0].mxu0 %v1789
        %v1863 = vpop.f32.mrb[0].mxu0
        %v1864 = vadd.f32 0.0, %v1863
        %v1865 = vpop.f32.mrb[0].mxu0
        %v1866 = vpop.f32.mrb[0].mxu0
        %v1867 = vadd.f32 0.0, %v1866
        %v1868 = vpop.f32.mrb[0].mxu0
        %1869 = vmatprep.mubr.bf16.mxu0 0
        %1870 = vmatmul.mubr.bf16.gmra.mrb[0].mxu0 %v1792
        %v1871 = vpop.f32.mrb[0].mxu0
        %v1872 = vadd.f32 0.0, %v1871
        %v1873 = vpop.f32.mrb[0].mxu0
        %v1874 = vpop.f32.mrb[0].mxu0
        %v1875 = vadd.f32 0.0, %v1874
        %v1876 = vpop.f32.mrb[0].mxu0
        %1877 = vmatprep.mubr.bf16.mxu0 0
        %1878 = vmatmul.mubr.bf16.gmra.mrb[0].mxu0 %v1795
        %v1879 = vpop.f32.mrb[0].mxu0
        %v1880 = vadd.f32 0.0, %v1879
        %v1881 = vpop.f32.mrb[0].mxu0
        %v1882 = vpop.f32.mrb[0].mxu0
        %v1883 = vadd.f32 0.0, %v1882
        %v1884 = vpop.f32.mrb[0].mxu0
        %1885 = vdwg.mxu0
        %v1886 = vsel %vm1482, %v1856, -1e+30
        %v1887 = vsel %vm1483, %v1859, -1e+30
        %v1888 = vsel %vm1484, %v1864, -1e+30
        %v1889 = vsel %vm1485, %v1867, -1e+30
        %v1890 = vsel %vm1486, %v1872, -1e+30
        %v1891 = vsel %vm1487, %v1875, -1e+30
        %v1892 = vsel %vm1488, %v1880, -1e+30
        %v1893 = vsel %vm1489, %v1883, -1e+30
        %1894 = vmax.xlane.f32.xlu0 %v1886
        %v1895 = vpop.xlane.xlu0 %1894
        %1896 = vmax.xlane.f32.xlu0 %v1887
        %v1897 = vpop.xlane.xlu0 %1896
        %1898 = vmax.xlane.f32.xlu0 %v1888
        %v1899 = vpop.xlane.xlu0 %1898
        %1900 = vmax.xlane.f32.xlu0 %v1889
        %v1901 = vpop.xlane.xlu0 %1900
        %1902 = vmax.xlane.f32.xlu0 %v1890
        %v1903 = vpop.xlane.xlu0 %1902
        %1904 = vmax.xlane.f32.xlu0 %v1891
        %v1905 = vpop.xlane.xlu0 %1904
        %1906 = vmax.xlane.f32.xlu0 %v1892
        %v1907 = vpop.xlane.xlu0 %1906
        %1908 = vmax.xlane.f32.xlu0 %v1893
        %v1909 = vpop.xlane.xlu0 %1908
        %v1910 = vsub.f32 %v1886, %v1895
        %v1911 = vsub.f32 %v1887, %v1897
        %v1912 = vsub.f32 %v1888, %v1899
        %v1913 = vsub.f32 %v1889, %v1901
        %v1914 = vsub.f32 %v1890, %v1903
        %v1915 = vsub.f32 %v1891, %v1905
        %v1916 = vsub.f32 %v1892, %v1907
        %v1917 = vsub.f32 %v1893, %v1909
        %v1918 = vmul.f32 %v1910, 1.442695
        %v1919 = vpow.pop %v1918
        %v1920 = vmul.f32 %v1911, 1.442695
        %v1921 = vpow.pop %v1920
        %v1922 = vmul.f32 %v1912, 1.442695
        %v1923 = vpow.pop %v1922
        %v1924 = vmul.f32 %v1913, 1.442695
        %v1925 = vpow.pop %v1924
        %v1926 = vmul.f32 %v1914, 1.442695
        %v1927 = vpow.pop %v1926
        %v1928 = vmul.f32 %v1915, 1.442695
        %v1929 = vpow.pop %v1928
        %v1930 = vmul.f32 %v1916, 1.442695
        %v1931 = vpow.pop %v1930
        %v1932 = vmul.f32 %v1917, 1.442695
        %v1933 = vpow.pop %v1932
        %1934 = vadd.xlane.f32.xlu0 %v1919
        %v1935 = vpop.xlane.xlu0 %1934
        %1936 = vadd.xlane.f32.xlu0 %v1921
        %v1937 = vpop.xlane.xlu0 %1936
        %1938 = vadd.xlane.f32.xlu0 %v1923
        %v1939 = vpop.xlane.xlu0 %1938
        %1940 = vadd.xlane.f32.xlu0 %v1925
        %v1941 = vpop.xlane.xlu0 %1940
        %1942 = vadd.xlane.f32.xlu0 %v1927
        %v1943 = vpop.xlane.xlu0 %1942
        %1944 = vadd.xlane.f32.xlu0 %v1929
        %v1945 = vpop.xlane.xlu0 %1944
        %1946 = vadd.xlane.f32.xlu0 %v1931
        %v1947 = vpop.xlane.xlu0 %1946
        %1948 = vadd.xlane.f32.xlu0 %v1933
        %v1949 = vpop.xlane.xlu0 %1948
        %v1950 = vpack.c.bf16 %v1921, %v1919
        %v1951 = vpack.c.bf16 %v1925, %v1923
        %v1952 = vpack.c.bf16 %v1929, %v1927
        %v1953 = vpack.c.bf16 %v1933, %v1931
        %1962 = vrot.lane.b32.xlu0 %v1446, 96
        %v1963 = vpop.permute.xlu0 %1962
        %1964 = vrot.lane.b32.xlu0 %v1448, 96
        %v1965 = vpop.permute.xlu0 %1964
        %1966 = vrot.lane.b32.xlu0 %v1450, 96
        %v1967 = vpop.permute.xlu0 %1966
        %1968 = vrot.lane.b32.xlu0 %v1452, 96
        %v1969 = vpop.permute.xlu0 %1968
        %1970 = vrot.lane.b32.xlu0 %v1454, 96
        %v1971 = vpop.permute.xlu0 %1970
        %1972 = vrot.lane.b32.xlu0 %v1456, 96
        %v1973 = vpop.permute.xlu0 %1972
        %1974 = vrot.lane.b32.xlu0 %v1458, 96
        %v1975 = vpop.permute.xlu0 %1974
        %1976 = vrot.lane.b32.xlu0 %v1460, 96
        %v1977 = vpop.permute.xlu0 %1976
        %1986 = vmatprep.subr.bf16.mxu0 0
        %1987 = vmatpush1.bf16.msra.mxu0 %v1963
        %1988 = vmatprep.subr.bf16.mxu0 0
        %1989 = vmatpush1.bf16.msra.mxu0 %v1965
        %1990 = vmatprep.subr.bf16.mxu0 0
        %1991 = vmatpush1.bf16.msra.mxu0 %v1967
        %1992 = vmatprep.subr.bf16.mxu0 0
        %1993 = vmatpush1.bf16.msra.mxu0 %v1969
        %1994 = vmatprep.subr.bf16.mxu0 0
        %1995 = vmatpush1.bf16.msra.mxu0 %v1971
        %1996 = vmatprep.subr.bf16.mxu0 0
        %1997 = vmatpush1.bf16.msra.mxu0 %v1973
        %1998 = vmatprep.subr.bf16.mxu0 0
        %1999 = vmatpush1.bf16.msra.mxu0 %v1975
        %2000 = vmatprep.subr.bf16.mxu0 0
        %2001 = vmatpush1.bf16.msra.mxu0 %v1977
        %2002 = vmatprep.subr.bf16.mxu0 0
        %2003 = vmatpush1.bf16.msra.mxu0 0
        %2004 = vmatprep.subr.bf16.mxu0 0
        %2005 = vmatpush1.bf16.msra.mxu0 0
        %2006 = vmatprep.subr.bf16.mxu0 0
        %2007 = vmatpush1.bf16.msra.mxu0 0
        %2008 = vmatprep.subr.bf16.mxu0 0
        %2009 = vmatpush1.bf16.msra.mxu0 0
        %2010 = vmatprep.subr.bf16.mxu0 0
        %2011 = vmatpush1.bf16.msra.mxu0 0
        %2012 = vmatprep.subr.bf16.mxu0 0
        %2013 = vmatpush1.bf16.msra.mxu0 0
        %2014 = vmatprep.subr.bf16.mxu0 0
        %2015 = vmatpush1.bf16.msra.mxu0 0
        %2016 = vmatprep.subr.bf16.mxu0 0
        %2017 = vmatpush1.bf16.msra.mxu0 0
        %2018 = vmatprep.mubr.bf16.mxu0 0
        %2019 = vmatmul.mubr.bf16.gmra.mrb[0].mxu0 %v1950
        %v2020 = vpop.f32.mrb[0].mxu0
        %v2021 = vadd.f32 0.0, %v2020
        %v2022 = vpop.f32.mrb[0].mxu0
        %v2023 = vpop.f32.mrb[0].mxu0
        %v2024 = vadd.f32 0.0, %v2023
        %v2025 = vpop.f32.mrb[0].mxu0
        %2026 = vmatprep.mubr.bf16.mxu0 0
        %2027 = vmatmul.mubr.bf16.gmra.mrb[0].mxu0 %v1951
        %v2028 = vpop.f32.mrb[0].mxu0
        %v2029 = vadd.f32 0.0, %v2028
        %v2030 = vpop.f32.mrb[0].mxu0
        %v2031 = vpop.f32.mrb[0].mxu0
        %v2032 = vadd.f32 0.0, %v2031
        %v2033 = vpop.f32.mrb[0].mxu0
        %2034 = vmatprep.mubr.bf16.mxu0 0
        %2035 = vmatmul.mubr.bf16.gmra.mrb[0].mxu0 %v1952
        %v2036 = vpop.f32.mrb[0].mxu0
        %v2037 = vadd.f32 0.0, %v2036
        %v2038 = vpop.f32.mrb[0].mxu0
        %v2039 = vpop.f32.mrb[0].mxu0
        %v2040 = vadd.f32 0.0, %v2039
        %v2041 = vpop.f32.mrb[0].mxu0
        %2042 = vmatprep.mubr.bf16.mxu0 0
        %2043 = vmatmul.mubr.bf16.gmra.mrb[0].mxu0 %v1953
        %v2044 = vpop.f32.mrb[0].mxu0
        %v2045 = vadd.f32 0.0, %v2044
        %v2046 = vpop.f32.mrb[0].mxu0
        %v2047 = vpop.f32.mrb[0].mxu0
        %v2048 = vadd.f32 0.0, %v2047
        %v2049 = vpop.f32.mrb[0].mxu0
        %2050 = vdwg.mxu0
        %v2051 = vrcp.pop %v1935
        %v2052 = vrcp.pop %v1937
        %v2053 = vrcp.pop %v1939
        %v2054 = vrcp.pop %v1941
        %v2055 = vrcp.pop %v1943
        %v2056 = vrcp.pop %v1945
        %v2057 = vrcp.pop %v1947
        %v2058 = vrcp.pop %v1949
        %v2059 = vmul.f32 %v2021, %v2051
        %v2060 = vmul.f32 %v2024, %v2052
        %v2061 = vmul.f32 %v2029, %v2053
        %v2062 = vmul.f32 %v2032, %v2054
        %v2063 = vmul.f32 %v2037, %v2055
        %v2064 = vmul.f32 %v2040, %v2056
        %v2065 = vmul.f32 %v2045, %v2057
        %v2066 = vmul.f32 %v2048, %v2058
        %v2067 = vpack.c.bf16 %v2060, %v2059
        %v2068 = vpack.c.bf16 %v2062, %v2061
        %v2069 = vpack.c.bf16 %v2064, %v2063
        %v2070 = vpack.c.bf16 %v2066, %v2065
        %s2071 = scalar_lea.vmem [#allocation10], 16
        %v2072 = vld [vmem:[%s2071] sm:$0xf]
        %v2073 = vld [vmem:[%s2071 + $0x4] sm:$0xf]
        %v2074 = vld [vmem:[%s2071 + $0x8] sm:$0xf]
        %v2075 = vld [vmem:[%s2071 + $0xc] sm:$0xf]
        %v2080 = vunpack.c.l.b16 %v2072
        %v2081 = vunpack.c.l.b16 %v2073
        %v2082 = vunpack.c.l.b16 %v2074
        %v2083 = vunpack.c.l.b16 %v2075
        %v2084 = vpack.c.b16 %v2081, %v2080
        %v2085 = vpack.c.b16 %v2083, %v2082
        %v2089 = vsel %vm1490, %v2067, 0
        %v2092 = vsel %vm1490, %v2068, 0
        %v2095 = vsel %vm1490, %v2069, 0
        %v2098 = vsel %vm1490, %v2070, 0
        %2100 = vmatprep.subr.bf16.mxu0 0
        %2101 = vmatpush1.bf16.msra.mxu0 %v2084
        %2102 = vmatprep.subr.bf16.mxu0 0
        %2103 = vmatpush1.bf16.msra.mxu0 %v2085
        %2104 = vmatprep.subr.bf16.mxu0 0
        %2105 = vmatpush1.bf16.msra.mxu0 0
        %2106 = vmatprep.subr.bf16.mxu0 0
        %2107 = vmatpush1.bf16.msra.mxu0 0
        %2108 = vmatprep.subr.bf16.mxu0 0
        %2109 = vmatpush1.bf16.msra.mxu0 0
        %2110 = vmatprep.subr.bf16.mxu0 0
        %2111 = vmatpush1.bf16.msra.mxu0 0
        %2112 = vmatprep.subr.bf16.mxu0 0
        %2113 = vmatpush1.bf16.msra.mxu0 0
        %2114 = vmatprep.subr.bf16.mxu0 0
        %2115 = vmatpush1.bf16.msra.mxu0 0
        %2116 = vmatprep.subr.bf16.mxu0 0
        %2117 = vmatpush1.bf16.msra.mxu0 0
        %2118 = vmatprep.subr.bf16.mxu0 0
        %2119 = vmatpush1.bf16.msra.mxu0 0
        %2120 = vmatprep.subr.bf16.mxu0 0
        %2121 = vmatpush1.bf16.msra.mxu0 0
        %2122 = vmatprep.subr.bf16.mxu0 0
        %2123 = vmatpush1.bf16.msra.mxu0 0
        %2124 = vmatprep.subr.bf16.mxu0 0
        %2125 = vmatpush1.bf16.msra.mxu0 0
        %2126 = vmatprep.subr.bf16.mxu0 0
        %2127 = vmatpush1.bf16.msra.mxu0 0
        %2128 = vmatprep.subr.bf16.mxu0 0
        %2129 = vmatpush1.bf16.msra.mxu0 0
        %2130 = vmatprep.subr.bf16.mxu0 0
        %2131 = vmatpush1.bf16.msra.mxu0 0
        %2132 = vmatprep.mubr.bf16.mxu0 0
        %2133 = vmatmul.mubr.bf16.gmra.mrb[0].mxu0 %v2089
        %v2134 = vpop.f32.mrb[0].mxu0
        %v2135 = vadd.f32 0.0, %v2134
        %v2136 = vpop.f32.mrb[0].mxu0
        %v2137 = vpop.f32.mrb[0].mxu0
        %v2138 = vadd.f32 0.0, %v2137
        %v2139 = vpop.f32.mrb[0].mxu0
        %2140 = vmatprep.mubr.bf16.mxu0 0
        %2141 = vmatmul.mubr.bf16.gmra.mrb[0].mxu0 %v2092
        %v2142 = vpop.f32.mrb[0].mxu0
        %v2143 = vadd.f32 0.0, %v2142
        %v2144 = vpop.f32.mrb[0].mxu0
        %v2145 = vpop.f32.mrb[0].mxu0
        %v2146 = vadd.f32 0.0, %v2145
        %v2147 = vpop.f32.mrb[0].mxu0
        %2148 = vmatprep.mubr.bf16.mxu0 0
        %2149 = vmatmul.mubr.bf16.gmra.mrb[0].mxu0 %v2095
        %v2150 = vpop.f32.mrb[0].mxu0
        %v2151 = vadd.f32 0.0, %v2150
        %v2152 = vpop.f32.mrb[0].mxu0
        %v2153 = vpop.f32.mrb[0].mxu0
        %v2154 = vadd.f32 0.0, %v2153
        %v2155 = vpop.f32.mrb[0].mxu0
        %2156 = vmatprep.mubr.bf16.mxu0 0
        %2157 = vmatmul.mubr.bf16.gmra.mrb[0].mxu0 %v2098
        %v2158 = vpop.f32.mrb[0].mxu0
        %v2159 = vadd.f32 0.0, %v2158
        %v2160 = vpop.f32.mrb[0].mxu0
        %v2161 = vpop.f32.mrb[0].mxu0
        %v2162 = vadd.f32 0.0, %v2161
        %v2163 = vpop.f32.mrb[0].mxu0
        %2164 = vdwg.mxu0
        %v2169 = vunpack.c.l.b16 %v1745
        %v2170 = vunpack.c.l.b16 %v1746
        %v2171 = vunpack.c.l.b16 %v1747
        %v2172 = vunpack.c.l.b16 %v1748
        %v2173 = vpack.c.b16 %v2170, %v2169
        %v2174 = vpack.c.b16 %v2172, %v2171
        %v2178 = vsel %vm1490, %v1741, 0
        %v2181 = vsel %vm1490, %v1742, 0
        %v2184 = vsel %vm1490, %v1743, 0
        %v2187 = vsel %vm1490, %v1744, 0
        %2189 = vmatprep.subr.bf16.mxu0 0
        %2190 = vmatpush1.bf16.msra.mxu0 %v2173
        %2191 = vmatprep.subr.bf16.mxu0 0
        %2192 = vmatpush1.bf16.msra.mxu0 %v2174
        %2193 = vmatprep.subr.bf16.mxu0 0
        %2194 = vmatpush1.bf16.msra.mxu0 0
        %2195 = vmatprep.subr.bf16.mxu0 0
        %2196 = vmatpush1.bf16.msra.mxu0 0
        %2197 = vmatprep.subr.bf16.mxu0 0
        %2198 = vmatpush1.bf16.msra.mxu0 0
        %2199 = vmatprep.subr.bf16.mxu0 0
        %2200 = vmatpush1.bf16.msra.mxu0 0
        %2201 = vmatprep.subr.bf16.mxu0 0
        %2202 = vmatpush1.bf16.msra.mxu0 0
        %2203 = vmatprep.subr.bf16.mxu0 0
        %2204 = vmatpush1.bf16.msra.mxu0 0
        %2205 = vmatprep.subr.bf16.mxu0 0
        %2206 = vmatpush1.bf16.msra.mxu0 0
        %2207 = vmatprep.subr.bf16.mxu0 0
        %2208 = vmatpush1.bf16.msra.mxu0 0
        %2209 = vmatprep.subr.bf16.mxu0 0
        %2210 = vmatpush1.bf16.msra.mxu0 0
        %2211 = vmatprep.subr.bf16.mxu0 0
        %2212 = vmatpush1.bf16.msra.mxu0 0
        %2213 = vmatprep.subr.bf16.mxu0 0
        %2214 = vmatpush1.bf16.msra.mxu0 0
        %2215 = vmatprep.subr.bf16.mxu0 0
        %2216 = vmatpush1.bf16.msra.mxu0 0
        %2217 = vmatprep.subr.bf16.mxu0 0
        %2218 = vmatpush1.bf16.msra.mxu0 0
        %2219 = vmatprep.subr.bf16.mxu0 0
        %2220 = vmatpush1.bf16.msra.mxu0 0
        %2221 = vmatprep.mubr.bf16.mxu0 0
        %2222 = vmatmul.mubr.bf16.gmra.mrb[0].mxu0 %v2178
        %v2223 = vpop.f32.mrb[0].mxu0
        %v2224 = vadd.f32 %v2135, %v2223
        %v2225 = vpop.f32.mrb[0].mxu0
        %v2226 = vpop.f32.mrb[0].mxu0
        %v2227 = vadd.f32 %v2138, %v2226
        %v2228 = vpop.f32.mrb[0].mxu0
        %2229 = vmatprep.mubr.bf16.mxu0 0
        %2230 = vmatmul.mubr.bf16.gmra.mrb[0].mxu0 %v2181
        %v2231 = vpop.f32.mrb[0].mxu0
        %v2232 = vadd.f32 %v2143, %v2231
        %v2233 = vpop.f32.mrb[0].mxu0
        %v2234 = vpop.f32.mrb[0].mxu0
        %v2235 = vadd.f32 %v2146, %v2234
        %v2236 = vpop.f32.mrb[0].mxu0
        %2237 = vmatprep.mubr.bf16.mxu0 0
        %2238 = vmatmul.mubr.bf16.gmra.mrb[0].mxu0 %v2184
        %v2239 = vpop.f32.mrb[0].mxu0
        %v2240 = vadd.f32 %v2151, %v2239
        %v2241 = vpop.f32.mrb[0].mxu0
        %v2242 = vpop.f32.mrb[0].mxu0
        %v2243 = vadd.f32 %v2154, %v2242
        %v2244 = vpop.f32.mrb[0].mxu0
        %2245 = vmatprep.mubr.bf16.mxu0 0
        %2246 = vmatmul.mubr.bf16.gmra.mrb[0].mxu0 %v2187
        %v2247 = vpop.f32.mrb[0].mxu0
        %v2248 = vadd.f32 %v2159, %v2247
        %v2249 = vpop.f32.mrb[0].mxu0
        %v2250 = vpop.f32.mrb[0].mxu0
        %v2251 = vadd.f32 %v2162, %v2250
        %v2252 = vpop.f32.mrb[0].mxu0
        %2253 = vdwg.mxu0
        %2254 = vrot.lane.b32.xlu0 %v1212, 64
        %v2255 = vpop.permute.xlu0 %2254
        %2256 = vrot.lane.b32.xlu0 %v1213, 64
        %v2257 = vpop.permute.xlu0 %2256
        %2258 = vrot.lane.b32.xlu0 %v1214, 64
        %v2259 = vpop.permute.xlu0 %2258
        %2260 = vrot.lane.b32.xlu0 %v1215, 64
        %v2261 = vpop.permute.xlu0 %2260
        %2262 = vrot.lane.b32.xlu0 %v1445, 64
        %v2263 = vpop.permute.xlu0 %2262
        %2264 = vrot.lane.b32.xlu0 %v1447, 64
        %v2265 = vpop.permute.xlu0 %2264
        %2266 = vrot.lane.b32.xlu0 %v1449, 64
        %v2267 = vpop.permute.xlu0 %2266
        %2268 = vrot.lane.b32.xlu0 %v1451, 64
        %v2269 = vpop.permute.xlu0 %2268
        %2270 = vrot.lane.b32.xlu0 %v1453, 64
        %v2271 = vpop.permute.xlu0 %2270
        %2272 = vrot.lane.b32.xlu0 %v1455, 64
        %v2273 = vpop.permute.xlu0 %2272
        %2274 = vrot.lane.b32.xlu0 %v1457, 64
        %v2275 = vpop.permute.xlu0 %2274
        %2276 = vrot.lane.b32.xlu0 %v1459, 64
        %v2277 = vpop.permute.xlu0 %2276
        %v2279 = vsel %vm1490, %v2255, 0
        %v2282 = vsel %vm1490, %v2257, 0
        %v2285 = vsel %vm1490, %v2259, 0
        %v2288 = vsel %vm1490, %v2261, 0
        %v2291 = vsel %vm1490, %v2263, 0
        %v2294 = vsel %vm1490, %v2265, 0
        %v2297 = vsel %vm1490, %v2267, 0
        %v2300 = vsel %vm1490, %v2269, 0
        %v2303 = vsel %vm1490, %v2271, 0
        %v2306 = vsel %vm1490, %v2273, 0
        %v2309 = vsel %vm1490, %v2275, 0
        %v2312 = vsel %vm1490, %v2277, 0
        %2314 = vmatprep.subr.bf16.mxu0 0
        %2315 = vmatpush1.bf16.xpose.msra.mxu0 %v2291
        %2316 = vmatprep.subr.bf16.mxu0 0
        %2317 = vmatpush1.bf16.xpose.msra.mxu0 %v2294
        %2318 = vmatprep.subr.bf16.mxu0 0
        %2319 = vmatpush1.bf16.xpose.msra.mxu0 %v2297
        %2320 = vmatprep.subr.bf16.mxu0 0
        %2321 = vmatpush1.bf16.xpose.msra.mxu0 %v2300
        %2322 = vmatprep.subr.bf16.mxu0 0
        %2323 = vmatpush1.bf16.xpose.msra.mxu0 %v2303
        %2324 = vmatprep.subr.bf16.mxu0 0
        %2325 = vmatpush1.bf16.xpose.msra.mxu0 %v2306
        %2326 = vmatprep.subr.bf16.mxu0 0
        %2327 = vmatpush1.bf16.xpose.msra.mxu0 %v2309
        %2328 = vmatprep.subr.bf16.mxu0 0
        %2329 = vmatpush1.bf16.xpose.msra.mxu0 %v2312
        %2330 = vmatprep.subr.bf16.mxu0 0
        %2331 = vmatpush1.bf16.xpose.msra.mxu0 0
        %2332 = vmatprep.subr.bf16.mxu0 0
        %2333 = vmatpush1.bf16.xpose.msra.mxu0 0
        %2334 = vmatprep.subr.bf16.mxu0 0
        %2335 = vmatpush1.bf16.xpose.msra.mxu0 0
        %2336 = vmatprep.subr.bf16.mxu0 0
        %2337 = vmatpush1.bf16.xpose.msra.mxu0 0
        %2338 = vmatprep.subr.bf16.mxu0 0
        %2339 = vmatpush1.bf16.xpose.msra.mxu0 0
        %2340 = vmatprep.subr.bf16.mxu0 0
        %2341 = vmatpush1.bf16.xpose.msra.mxu0 0
        %2342 = vmatprep.subr.bf16.mxu0 0
        %2343 = vmatpush1.bf16.xpose.msra.mxu0 0
        %2344 = vmatprep.subr.bf16.mxu0 0
        %2345 = vmatpush1.bf16.xpose.msra.mxu0 0
        %2346 = vmatprep.mubr.bf16.mxu0 0
        %2347 = vmatmul.mubr.bf16.gmra.mrb[0].mxu0 %v2279
        %v2348 = vpop.f32.mrb[0].mxu0
        %v2349 = vadd.f32 0.0, %v2348
        %v2350 = vpop.f32.mrb[0].mxu0
        %v2351 = vpop.f32.mrb[0].mxu0
        %v2352 = vadd.f32 0.0, %v2351
        %v2353 = vpop.f32.mrb[0].mxu0
        %2354 = vmatprep.mubr.bf16.mxu0 0
        %2355 = vmatmul.mubr.bf16.gmra.mrb[0].mxu0 %v2282
        %v2356 = vpop.f32.mrb[0].mxu0
        %v2357 = vadd.f32 0.0, %v2356
        %v2358 = vpop.f32.mrb[0].mxu0
        %v2359 = vpop.f32.mrb[0].mxu0
        %v2360 = vadd.f32 0.0, %v2359
        %v2361 = vpop.f32.mrb[0].mxu0
        %2362 = vmatprep.mubr.bf16.mxu0 0
        %2363 = vmatmul.mubr.bf16.gmra.mrb[0].mxu0 %v2285
        %v2364 = vpop.f32.mrb[0].mxu0
        %v2365 = vadd.f32 0.0, %v2364
        %v2366 = vpop.f32.mrb[0].mxu0
        %v2367 = vpop.f32.mrb[0].mxu0
        %v2368 = vadd.f32 0.0, %v2367
        %v2369 = vpop.f32.mrb[0].mxu0
        %2370 = vmatprep.mubr.bf16.mxu0 0
        %2371 = vmatmul.mubr.bf16.gmra.mrb[0].mxu0 %v2288
        %v2372 = vpop.f32.mrb[0].mxu0
        %v2373 = vadd.f32 0.0, %v2372
        %v2374 = vpop.f32.mrb[0].mxu0
        %v2375 = vpop.f32.mrb[0].mxu0
        %v2376 = vadd.f32 0.0, %v2375
        %v2377 = vpop.f32.mrb[0].mxu0
        %2378 = vdwg.mxu0
        %v2379 = vsel %vm1482, %v2349, -1e+30
        %v2380 = vsel %vm1483, %v2352, -1e+30
        %v2381 = vsel %vm1484, %v2357, -1e+30
        %v2382 = vsel %vm1485, %v2360, -1e+30
        %v2383 = vsel %vm1486, %v2365, -1e+30
        %v2384 = vsel %vm1487, %v2368, -1e+30
        %v2385 = vsel %vm1488, %v2373, -1e+30
        %v2386 = vsel %vm1489, %v2376, -1e+30
        %2387 = vmax.xlane.f32.xlu0 %v2379
        %v2388 = vpop.xlane.xlu0 %2387
        %2389 = vmax.xlane.f32.xlu0 %v2380
        %v2390 = vpop.xlane.xlu0 %2389
        %2391 = vmax.xlane.f32.xlu0 %v2381
        %v2392 = vpop.xlane.xlu0 %2391
        %2393 = vmax.xlane.f32.xlu0 %v2382
        %v2394 = vpop.xlane.xlu0 %2393
        %2395 = vmax.xlane.f32.xlu0 %v2383
        %v2396 = vpop.xlane.xlu0 %2395
        %2397 = vmax.xlane.f32.xlu0 %v2384
        %v2398 = vpop.xlane.xlu0 %2397
        %2399 = vmax.xlane.f32.xlu0 %v2385
        %v2400 = vpop.xlane.xlu0 %2399
        %2401 = vmax.xlane.f32.xlu0 %v2386
        %v2402 = vpop.xlane.xlu0 %2401
        %v2403 = vsub.f32 %v2379, %v2388
        %v2404 = vsub.f32 %v2380, %v2390
        %v2405 = vsub.f32 %v2381, %v2392
        %v2406 = vsub.f32 %v2382, %v2394
        %v2407 = vsub.f32 %v2383, %v2396
        %v2408 = vsub.f32 %v2384, %v2398
        %v2409 = vsub.f32 %v2385, %v2400
        %v2410 = vsub.f32 %v2386, %v2402
        %v2411 = vmul.f32 %v2403, 1.442695
        %v2412 = vpow.pop %v2411
        %v2413 = vmul.f32 %v2404, 1.442695
        %v2414 = vpow.pop %v2413
        %v2415 = vmul.f32 %v2405, 1.442695
        %v2416 = vpow.pop %v2415
        %v2417 = vmul.f32 %v2406, 1.442695
        %v2418 = vpow.pop %v2417
        %v2419 = vmul.f32 %v2407, 1.442695
        %v2420 = vpow.pop %v2419
        %v2421 = vmul.f32 %v2408, 1.442695
        %v2422 = vpow.pop %v2421
        %v2423 = vmul.f32 %v2409, 1.442695
        %v2424 = vpow.pop %v2423
        %v2425 = vmul.f32 %v2410, 1.442695
        %v2426 = vpow.pop %v2425
        %2427 = vadd.xlane.f32.xlu0 %v2412
        %v2428 = vpop.xlane.xlu0 %2427
        %2429 = vadd.xlane.f32.xlu0 %v2414
        %v2430 = vpop.xlane.xlu0 %2429
        %2431 = vadd.xlane.f32.xlu0 %v2416
        %v2432 = vpop.xlane.xlu0 %2431
        %2433 = vadd.xlane.f32.xlu0 %v2418
        %v2434 = vpop.xlane.xlu0 %2433
        %2435 = vadd.xlane.f32.xlu0 %v2420
        %v2436 = vpop.xlane.xlu0 %2435
        %2437 = vadd.xlane.f32.xlu0 %v2422
        %v2438 = vpop.xlane.xlu0 %2437
        %2439 = vadd.xlane.f32.xlu0 %v2424
        %v2440 = vpop.xlane.xlu0 %2439
        %2441 = vadd.xlane.f32.xlu0 %v2426
        %v2442 = vpop.xlane.xlu0 %2441
        %v2443 = vpack.c.bf16 %v2414, %v2412
        %v2444 = vpack.c.bf16 %v2418, %v2416
        %v2445 = vpack.c.bf16 %v2422, %v2420
        %v2446 = vpack.c.bf16 %v2426, %v2424
        %2447 = vrot.lane.b32.xlu0 %v1446, 64
        %v2448 = vpop.permute.xlu0 %2447
        %2449 = vrot.lane.b32.xlu0 %v1448, 64
        %v2450 = vpop.permute.xlu0 %2449
        %2451 = vrot.lane.b32.xlu0 %v1450, 64
        %v2452 = vpop.permute.xlu0 %2451
        %2453 = vrot.lane.b32.xlu0 %v1452, 64
        %v2454 = vpop.permute.xlu0 %2453
        %2455 = vrot.lane.b32.xlu0 %v1454, 64
        %v2456 = vpop.permute.xlu0 %2455
        %2457 = vrot.lane.b32.xlu0 %v1456, 64
        %v2458 = vpop.permute.xlu0 %2457
        %2459 = vrot.lane.b32.xlu0 %v1458, 64
        %v2460 = vpop.permute.xlu0 %2459
        %2461 = vrot.lane.b32.xlu0 %v1460, 64
        %v2462 = vpop.permute.xlu0 %2461
        %2471 = vmatprep.subr.bf16.mxu0 0
        %2472 = vmatpush1.bf16.msra.mxu0 %v2448
        %2473 = vmatprep.subr.bf16.mxu0 0
        %2474 = vmatpush1.bf16.msra.mxu0 %v2450
        %2475 = vmatprep.subr.bf16.mxu0 0
        %2476 = vmatpush1.bf16.msra.mxu0 %v2452
        %2477 = vmatprep.subr.bf16.mxu0 0
        %2478 = vmatpush1.bf16.msra.mxu0 %v2454
        %2479 = vmatprep.subr.bf16.mxu0 0
        %2480 = vmatpush1.bf16.msra.mxu0 %v2456
        %2481 = vmatprep.subr.bf16.mxu0 0
        %2482 = vmatpush1.bf16.msra.mxu0 %v2458
        %2483 = vmatprep.subr.bf16.mxu0 0
        %2484 = vmatpush1.bf16.msra.mxu0 %v2460
        %2485 = vmatprep.subr.bf16.mxu0 0
        %2486 = vmatpush1.bf16.msra.mxu0 %v2462
        %2487 = vmatprep.subr.bf16.mxu0 0
        %2488 = vmatpush1.bf16.msra.mxu0 0
        %2489 = vmatprep.subr.bf16.mxu0 0
        %2490 = vmatpush1.bf16.msra.mxu0 0
        %2491 = vmatprep.subr.bf16.mxu0 0
        %2492 = vmatpush1.bf16.msra.mxu0 0
        %2493 = vmatprep.subr.bf16.mxu0 0
        %2494 = vmatpush1.bf16.msra.mxu0 0
        %2495 = vmatprep.subr.bf16.mxu0 0
        %2496 = vmatpush1.bf16.msra.mxu0 0
        %2497 = vmatprep.subr.bf16.mxu0 0
        %2498 = vmatpush1.bf16.msra.mxu0 0
        %2499 = vmatprep.subr.bf16.mxu0 0
        %2500 = vmatpush1.bf16.msra.mxu0 0
        %2501 = vmatprep.subr.bf16.mxu0 0
        %2502 = vmatpush1.bf16.msra.mxu0 0
        %2503 = vmatprep.mubr.bf16.mxu0 0
        %2504 = vmatmul.mubr.bf16.gmra.mrb[0].mxu0 %v2443
        %v2505 = vpop.f32.mrb[0].mxu0
        %v2506 = vadd.f32 0.0, %v2505
        %v2507 = vpop.f32.mrb[0].mxu0
        %v2508 = vpop.f32.mrb[0].mxu0
        %v2509 = vadd.f32 0.0, %v2508
        %v2510 = vpop.f32.mrb[0].mxu0
        %2511 = vmatprep.mubr.bf16.mxu0 0
        %2512 = vmatmul.mubr.bf16.gmra.mrb[0].mxu0 %v2444
        %v2513 = vpop.f32.mrb[0].mxu0
        %v2514 = vadd.f32 0.0, %v2513
        %v2515 = vpop.f32.mrb[0].mxu0
        %v2516 = vpop.f32.mrb[0].mxu0
        %v2517 = vadd.f32 0.0, %v2516
        %v2518 = vpop.f32.mrb[0].mxu0
        %2519 = vmatprep.mubr.bf16.mxu0 0
        %2520 = vmatmul.mubr.bf16.gmra.mrb[0].mxu0 %v2445
        %v2521 = vpop.f32.mrb[0].mxu0
        %v2522 = vadd.f32 0.0, %v2521
        %v2523 = vpop.f32.mrb[0].mxu0
        %v2524 = vpop.f32.mrb[0].mxu0
        %v2525 = vadd.f32 0.0, %v2524
        %v2526 = vpop.f32.mrb[0].mxu0
        %2527 = vmatprep.mubr.bf16.mxu0 0
        %2528 = vmatmul.mubr.bf16.gmra.mrb[0].mxu0 %v2446
        %v2529 = vpop.f32.mrb[0].mxu0
        %v2530 = vadd.f32 0.0, %v2529
        %v2531 = vpop.f32.mrb[0].mxu0
        %v2532 = vpop.f32.mrb[0].mxu0
        %v2533 = vadd.f32 0.0, %v2532
        %v2534 = vpop.f32.mrb[0].mxu0
        %2535 = vdwg.mxu0
        %v2536 = vrcp.pop %v2428
        %v2537 = vrcp.pop %v2430
        %v2538 = vrcp.pop %v2432
        %v2539 = vrcp.pop %v2434
        %v2540 = vrcp.pop %v2436
        %v2541 = vrcp.pop %v2438
        %v2542 = vrcp.pop %v2440
        %v2543 = vrcp.pop %v2442
        %v2544 = vmul.f32 %v2506, %v2536
        %v2545 = vmul.f32 %v2509, %v2537
        %v2546 = vmul.f32 %v2514, %v2538
        %v2547 = vmul.f32 %v2517, %v2539
        %v2548 = vmul.f32 %v2522, %v2540
        %v2549 = vmul.f32 %v2525, %v2541
        %v2550 = vmul.f32 %v2530, %v2542
        %v2551 = vmul.f32 %v2533, %v2543
        %v2552 = vpack.c.bf16 %v2545, %v2544
        %v2553 = vpack.c.bf16 %v2547, %v2546
        %v2554 = vpack.c.bf16 %v2549, %v2548
        %v2555 = vpack.c.bf16 %v2551, %v2550
        %s2556 = scalar_lea.vmem [#allocation10], 32
        %v2557 = vld [vmem:[%s2556] sm:$0xf]
        %v2558 = vld [vmem:[%s2556 + $0x4] sm:$0xf]
        %v2559 = vld [vmem:[%s2556 + $0x8] sm:$0xf]
        %v2560 = vld [vmem:[%s2556 + $0xc] sm:$0xf]
        %v2565 = vunpack.c.l.b16 %v2557
        %v2566 = vunpack.c.l.b16 %v2558
        %v2567 = vunpack.c.l.b16 %v2559
        %v2568 = vunpack.c.l.b16 %v2560
        %v2569 = vpack.c.b16 %v2566, %v2565
        %v2570 = vpack.c.b16 %v2568, %v2567
        %v2574 = vsel %vm1490, %v2552, 0
        %v2577 = vsel %vm1490, %v2553, 0
        %v2580 = vsel %vm1490, %v2554, 0
        %v2583 = vsel %vm1490, %v2555, 0
        %2585 = vmatprep.subr.bf16.mxu0 0
        %2586 = vmatpush1.bf16.msra.mxu0 %v2569
        %2587 = vmatprep.subr.bf16.mxu0 0
        %2588 = vmatpush1.bf16.msra.mxu0 %v2570
        %2589 = vmatprep.subr.bf16.mxu0 0
        %2590 = vmatpush1.bf16.msra.mxu0 0
        %2591 = vmatprep.subr.bf16.mxu0 0
        %2592 = vmatpush1.bf16.msra.mxu0 0
        %2593 = vmatprep.subr.bf16.mxu0 0
        %2594 = vmatpush1.bf16.msra.mxu0 0
        %2595 = vmatprep.subr.bf16.mxu0 0
        %2596 = vmatpush1.bf16.msra.mxu0 0
        %2597 = vmatprep.subr.bf16.mxu0 0
        %2598 = vmatpush1.bf16.msra.mxu0 0
        %2599 = vmatprep.subr.bf16.mxu0 0
        %2600 = vmatpush1.bf16.msra.mxu0 0
        %2601 = vmatprep.subr.bf16.mxu0 0
        %2602 = vmatpush1.bf16.msra.mxu0 0
        %2603 = vmatprep.subr.bf16.mxu0 0
        %2604 = vmatpush1.bf16.msra.mxu0 0
        %2605 = vmatprep.subr.bf16.mxu0 0
        %2606 = vmatpush1.bf16.msra.mxu0 0
        %2607 = vmatprep.subr.bf16.mxu0 0
        %2608 = vmatpush1.bf16.msra.mxu0 0
        %2609 = vmatprep.subr.bf16.mxu0 0
        %2610 = vmatpush1.bf16.msra.mxu0 0
        %2611 = vmatprep.subr.bf16.mxu0 0
        %2612 = vmatpush1.bf16.msra.mxu0 0
        %2613 = vmatprep.subr.bf16.mxu0 0
        %2614 = vmatpush1.bf16.msra.mxu0 0
        %2615 = vmatprep.subr.bf16.mxu0 0
        %2616 = vmatpush1.bf16.msra.mxu0 0
        %2617 = vmatprep.mubr.bf16.mxu0 0
        %2618 = vmatmul.mubr.bf16.gmra.mrb[0].mxu0 %v2574
        %v2619 = vpop.f32.mrb[0].mxu0
        %v2620 = vadd.f32 0.0, %v2619
        %v2621 = vpop.f32.mrb[0].mxu0
        %v2622 = vpop.f32.mrb[0].mxu0
        %v2623 = vadd.f32 0.0, %v2622
        %v2624 = vpop.f32.mrb[0].mxu0
        %2625 = vmatprep.mubr.bf16.mxu0 0
        %2626 = vmatmul.mubr.bf16.gmra.mrb[0].mxu0 %v2577
        %v2627 = vpop.f32.mrb[0].mxu0
        %v2628 = vadd.f32 0.0, %v2627
        %v2629 = vpop.f32.mrb[0].mxu0
        %v2630 = vpop.f32.mrb[0].mxu0
        %v2631 = vadd.f32 0.0, %v2630
        %v2632 = vpop.f32.mrb[0].mxu0
        %2633 = vmatprep.mubr.bf16.mxu0 0
        %2634 = vmatmul.mubr.bf16.gmra.mrb[0].mxu0 %v2580
        %v2635 = vpop.f32.mrb[0].mxu0
        %v2636 = vadd.f32 0.0, %v2635
        %v2637 = vpop.f32.mrb[0].mxu0
        %v2638 = vpop.f32.mrb[0].mxu0
        %v2639 = vadd.f32 0.0, %v2638
        %v2640 = vpop.f32.mrb[0].mxu0
        %2641 = vmatprep.mubr.bf16.mxu0 0
        %2642 = vmatmul.mubr.bf16.gmra.mrb[0].mxu0 %v2583
        %v2643 = vpop.f32.mrb[0].mxu0
        %v2644 = vadd.f32 0.0, %v2643
        %v2645 = vpop.f32.mrb[0].mxu0
        %v2646 = vpop.f32.mrb[0].mxu0
        %v2647 = vadd.f32 0.0, %v2646
        %v2648 = vpop.f32.mrb[0].mxu0
        %2649 = vdwg.mxu0
        %v2650 = vadd.f32 %v2224, %v2620
        %v2651 = vadd.f32 %v2227, %v2623
        %v2652 = vadd.f32 %v2232, %v2628
        %v2653 = vadd.f32 %v2235, %v2631
        %v2654 = vadd.f32 %v2240, %v2636
        %v2655 = vadd.f32 %v2243, %v2639
        %v2656 = vadd.f32 %v2248, %v2644
        %v2657 = vadd.f32 %v2251, %v2647
        %2658 = vrot.lane.b32.xlu0 %v1212, 32
        %v2659 = vpop.permute.xlu0 %2658
        %2660 = vrot.lane.b32.xlu0 %v1213, 32
        %v2661 = vpop.permute.xlu0 %2660
        %2662 = vrot.lane.b32.xlu0 %v1214, 32
        %v2663 = vpop.permute.xlu0 %2662
        %2664 = vrot.lane.b32.xlu0 %v1215, 32
        %v2665 = vpop.permute.xlu0 %2664
        %2666 = vrot.lane.b32.xlu0 %v1445, 32
        %v2667 = vpop.permute.xlu0 %2666
        %2668 = vrot.lane.b32.xlu0 %v1447, 32
        %v2669 = vpop.permute.xlu0 %2668
        %2670 = vrot.lane.b32.xlu0 %v1449, 32
        %v2671 = vpop.permute.xlu0 %2670
        %2672 = vrot.lane.b32.xlu0 %v1451, 32
        %v2673 = vpop.permute.xlu0 %2672
        %2674 = vrot.lane.b32.xlu0 %v1453, 32
        %v2675 = vpop.permute.xlu0 %2674
        %2676 = vrot.lane.b32.xlu0 %v1455, 32
        %v2677 = vpop.permute.xlu0 %2676
        %2678 = vrot.lane.b32.xlu0 %v1457, 32
        %v2679 = vpop.permute.xlu0 %2678
        %2680 = vrot.lane.b32.xlu0 %v1459, 32
        %v2681 = vpop.permute.xlu0 %2680
        %v2683 = vsel %vm1490, %v2659, 0
        %v2686 = vsel %vm1490, %v2661, 0
        %v2689 = vsel %vm1490, %v2663, 0
        %v2692 = vsel %vm1490, %v2665, 0
        %v2695 = vsel %vm1490, %v2667, 0
        %v2698 = vsel %vm1490, %v2669, 0
        %v2701 = vsel %vm1490, %v2671, 0
        %v2704 = vsel %vm1490, %v2673, 0
        %v2707 = vsel %vm1490, %v2675, 0
        %v2710 = vsel %vm1490, %v2677, 0
        %v2713 = vsel %vm1490, %v2679, 0
        %v2716 = vsel %vm1490, %v2681, 0
        %2718 = vmatprep.subr.bf16.mxu0 0
        %2719 = vmatpush1.bf16.xpose.msra.mxu0 %v2695
        %2720 = vmatprep.subr.bf16.mxu0 0
        %2721 = vmatpush1.bf16.xpose.msra.mxu0 %v2698
        %2722 = vmatprep.subr.bf16.mxu0 0
        %2723 = vmatpush1.bf16.xpose.msra.mxu0 %v2701
        %2724 = vmatprep.subr.bf16.mxu0 0
        %2725 = vmatpush1.bf16.xpose.msra.mxu0 %v2704
        %2726 = vmatprep.subr.bf16.mxu0 0
        %2727 = vmatpush1.bf16.xpose.msra.mxu0 %v2707
        %2728 = vmatprep.subr.bf16.mxu0 0
        %2729 = vmatpush1.bf16.xpose.msra.mxu0 %v2710
        %2730 = vmatprep.subr.bf16.mxu0 0
        %2731 = vmatpush1.bf16.xpose.msra.mxu0 %v2713
        %2732 = vmatprep.subr.bf16.mxu0 0
        %2733 = vmatpush1.bf16.xpose.msra.mxu0 %v2716
        %2734 = vmatprep.subr.bf16.mxu0 0
        %2735 = vmatpush1.bf16.xpose.msra.mxu0 0
        %2736 = vmatprep.subr.bf16.mxu0 0
        %2737 = vmatpush1.bf16.xpose.msra.mxu0 0
        %2738 = vmatprep.subr.bf16.mxu0 0
        %2739 = vmatpush1.bf16.xpose.msra.mxu0 0
        %2740 = vmatprep.subr.bf16.mxu0 0
        %2741 = vmatpush1.bf16.xpose.msra.mxu0 0
        %2742 = vmatprep.subr.bf16.mxu0 0
        %2743 = vmatpush1.bf16.xpose.msra.mxu0 0
        %2744 = vmatprep.subr.bf16.mxu0 0
        %2745 = vmatpush1.bf16.xpose.msra.mxu0 0
        %2746 = vmatprep.subr.bf16.mxu0 0
        %2747 = vmatpush1.bf16.xpose.msra.mxu0 0
        %2748 = vmatprep.subr.bf16.mxu0 0
        %2749 = vmatpush1.bf16.xpose.msra.mxu0 0
        %2750 = vmatprep.mubr.bf16.mxu0 0
        %2751 = vmatmul.mubr.bf16.gmra.mrb[0].mxu0 %v2683
        %v2752 = vpop.f32.mrb[0].mxu0
        %v2753 = vadd.f32 0.0, %v2752
        %v2754 = vpop.f32.mrb[0].mxu0
        %v2755 = vpop.f32.mrb[0].mxu0
        %v2756 = vadd.f32 0.0, %v2755
        %v2757 = vpop.f32.mrb[0].mxu0
        %2758 = vmatprep.mubr.bf16.mxu0 0
        %2759 = vmatmul.mubr.bf16.gmra.mrb[0].mxu0 %v2686
        %v2760 = vpop.f32.mrb[0].mxu0
        %v2761 = vadd.f32 0.0, %v2760
        %v2762 = vpop.f32.mrb[0].mxu0
        %v2763 = vpop.f32.mrb[0].mxu0
        %v2764 = vadd.f32 0.0, %v2763
        %v2765 = vpop.f32.mrb[0].mxu0
        %2766 = vmatprep.mubr.bf16.mxu0 0
        %2767 = vmatmul.mubr.bf16.gmra.mrb[0].mxu0 %v2689
        %v2768 = vpop.f32.mrb[0].mxu0
        %v2769 = vadd.f32 0.0, %v2768
        %v2770 = vpop.f32.mrb[0].mxu0
        %v2771 = vpop.f32.mrb[0].mxu0
        %v2772 = vadd.f32 0.0, %v2771
        %v2773 = vpop.f32.mrb[0].mxu0
        %2774 = vmatprep.mubr.bf16.mxu0 0
        %2775 = vmatmul.mubr.bf16.gmra.mrb[0].mxu0 %v2692
        %v2776 = vpop.f32.mrb[0].mxu0
        %v2777 = vadd.f32 0.0, %v2776
        %v2778 = vpop.f32.mrb[0].mxu0
        %v2779 = vpop.f32.mrb[0].mxu0
        %v2780 = vadd.f32 0.0, %v2779
        %v2781 = vpop.f32.mrb[0].mxu0
        %2782 = vdwg.mxu0
        %v2783 = vsel %vm1482, %v2753, -1e+30
        %v2784 = vsel %vm1483, %v2756, -1e+30
        %v2785 = vsel %vm1484, %v2761, -1e+30
        %v2786 = vsel %vm1485, %v2764, -1e+30
        %v2787 = vsel %vm1486, %v2769, -1e+30
        %v2788 = vsel %vm1487, %v2772, -1e+30
        %v2789 = vsel %vm1488, %v2777, -1e+30
        %v2790 = vsel %vm1489, %v2780, -1e+30
        %2791 = vmax.xlane.f32.xlu0 %v2783
        %v2792 = vpop.xlane.xlu0 %2791
        %2793 = vmax.xlane.f32.xlu0 %v2784
        %v2794 = vpop.xlane.xlu0 %2793
        %2795 = vmax.xlane.f32.xlu0 %v2785
        %v2796 = vpop.xlane.xlu0 %2795
        %2797 = vmax.xlane.f32.xlu0 %v2786
        %v2798 = vpop.xlane.xlu0 %2797
        %2799 = vmax.xlane.f32.xlu0 %v2787
        %v2800 = vpop.xlane.xlu0 %2799
        %2801 = vmax.xlane.f32.xlu0 %v2788
        %v2802 = vpop.xlane.xlu0 %2801
        %2803 = vmax.xlane.f32.xlu0 %v2789
        %v2804 = vpop.xlane.xlu0 %2803
        %2805 = vmax.xlane.f32.xlu0 %v2790
        %v2806 = vpop.xlane.xlu0 %2805
        %v2807 = vsub.f32 %v2783, %v2792
        %v2808 = vsub.f32 %v2784, %v2794
        %v2809 = vsub.f32 %v2785, %v2796
        %v2810 = vsub.f32 %v2786, %v2798
        %v2811 = vsub.f32 %v2787, %v2800
        %v2812 = vsub.f32 %v2788, %v2802
        %v2813 = vsub.f32 %v2789, %v2804
        %v2814 = vsub.f32 %v2790, %v2806
        %v2815 = vmul.f32 %v2807, 1.442695
        %v2816 = vpow.pop %v2815
        %v2817 = vmul.f32 %v2808, 1.442695
        %v2818 = vpow.pop %v2817
        %v2819 = vmul.f32 %v2809, 1.442695
        %v2820 = vpow.pop %v2819
        %v2821 = vmul.f32 %v2810, 1.442695
        %v2822 = vpow.pop %v2821
        %v2823 = vmul.f32 %v2811, 1.442695
        %v2824 = vpow.pop %v2823
        %v2825 = vmul.f32 %v2812, 1.442695
        %v2826 = vpow.pop %v2825
        %v2827 = vmul.f32 %v2813, 1.442695
        %v2828 = vpow.pop %v2827
        %v2829 = vmul.f32 %v2814, 1.442695
        %v2830 = vpow.pop %v2829
        %2831 = vadd.xlane.f32.xlu0 %v2816
        %v2832 = vpop.xlane.xlu0 %2831
        %2833 = vadd.xlane.f32.xlu0 %v2818
        %v2834 = vpop.xlane.xlu0 %2833
        %2835 = vadd.xlane.f32.xlu0 %v2820
        %v2836 = vpop.xlane.xlu0 %2835
        %2837 = vadd.xlane.f32.xlu0 %v2822
        %v2838 = vpop.xlane.xlu0 %2837
        %2839 = vadd.xlane.f32.xlu0 %v2824
        %v2840 = vpop.xlane.xlu0 %2839
        %2841 = vadd.xlane.f32.xlu0 %v2826
        %v2842 = vpop.xlane.xlu0 %2841
        %2843 = vadd.xlane.f32.xlu0 %v2828
        %v2844 = vpop.xlane.xlu0 %2843
        %2845 = vadd.xlane.f32.xlu0 %v2830
        %v2846 = vpop.xlane.xlu0 %2845
        %v2847 = vpack.c.bf16 %v2818, %v2816
        %v2848 = vpack.c.bf16 %v2822, %v2820
        %v2849 = vpack.c.bf16 %v2826, %v2824
        %v2850 = vpack.c.bf16 %v2830, %v2828
        %2851 = vrot.lane.b32.xlu0 %v1446, 32
        %v2852 = vpop.permute.xlu0 %2851
        %2853 = vrot.lane.b32.xlu0 %v1448, 32
        %v2854 = vpop.permute.xlu0 %2853
        %2855 = vrot.lane.b32.xlu0 %v1450, 32
        %v2856 = vpop.permute.xlu0 %2855
        %2857 = vrot.lane.b32.xlu0 %v1452, 32
        %v2858 = vpop.permute.xlu0 %2857
        %2859 = vrot.lane.b32.xlu0 %v1454, 32
        %v2860 = vpop.permute.xlu0 %2859
        %2861 = vrot.lane.b32.xlu0 %v1456, 32
        %v2862 = vpop.permute.xlu0 %2861
        %2863 = vrot.lane.b32.xlu0 %v1458, 32
        %v2864 = vpop.permute.xlu0 %2863
        %2865 = vrot.lane.b32.xlu0 %v1460, 32
        %v2866 = vpop.permute.xlu0 %2865
        %2875 = vmatprep.subr.bf16.mxu0 0
        %2876 = vmatpush1.bf16.msra.mxu0 %v2852
        %2877 = vmatprep.subr.bf16.mxu0 0
        %2878 = vmatpush1.bf16.msra.mxu0 %v2854
        %2879 = vmatprep.subr.bf16.mxu0 0
        %2880 = vmatpush1.bf16.msra.mxu0 %v2856
        %2881 = vmatprep.subr.bf16.mxu0 0
        %2882 = vmatpush1.bf16.msra.mxu0 %v2858
        %2883 = vmatprep.subr.bf16.mxu0 0
        %2884 = vmatpush1.bf16.msra.mxu0 %v2860
        %2885 = vmatprep.subr.bf16.mxu0 0
        %2886 = vmatpush1.bf16.msra.mxu0 %v2862
        %2887 = vmatprep.subr.bf16.mxu0 0
        %2888 = vmatpush1.bf16.msra.mxu0 %v2864
        %2889 = vmatprep.subr.bf16.mxu0 0
        %2890 = vmatpush1.bf16.msra.mxu0 %v2866
        %2891 = vmatprep.subr.bf16.mxu0 0
        %2892 = vmatpush1.bf16.msra.mxu0 0
        %2893 = vmatprep.subr.bf16.mxu0 0
        %2894 = vmatpush1.bf16.msra.mxu0 0
        %2895 = vmatprep.subr.bf16.mxu0 0
        %2896 = vmatpush1.bf16.msra.mxu0 0
        %2897 = vmatprep.subr.bf16.mxu0 0
        %2898 = vmatpush1.bf16.msra.mxu0 0
        %2899 = vmatprep.subr.bf16.mxu0 0
        %2900 = vmatpush1.bf16.msra.mxu0 0
        %2901 = vmatprep.subr.bf16.mxu0 0
        %2902 = vmatpush1.bf16.msra.mxu0 0
        %2903 = vmatprep.subr.bf16.mxu0 0
        %2904 = vmatpush1.bf16.msra.mxu0 0
        %2905 = vmatprep.subr.bf16.mxu0 0
        %2906 = vmatpush1.bf16.msra.mxu0 0
        %2907 = vmatprep.mubr.bf16.mxu0 0
        %2908 = vmatmul.mubr.bf16.gmra.mrb[0].mxu0 %v2847
        %v2909 = vpop.f32.mrb[0].mxu0
        %v2910 = vadd.f32 0.0, %v2909
        %v2911 = vpop.f32.mrb[0].mxu0
        %v2912 = vpop.f32.mrb[0].mxu0
        %v2913 = vadd.f32 0.0, %v2912
        %v2914 = vpop.f32.mrb[0].mxu0
        %2915 = vmatprep.mubr.bf16.mxu0 0
        %2916 = vmatmul.mubr.bf16.gmra.mrb[0].mxu0 %v2848
        %v2917 = vpop.f32.mrb[0].mxu0
        %v2918 = vadd.f32 0.0, %v2917
        %v2919 = vpop.f32.mrb[0].mxu0
        %v2920 = vpop.f32.mrb[0].mxu0
        %v2921 = vadd.f32 0.0, %v2920
        %v2922 = vpop.f32.mrb[0].mxu0
        %2923 = vmatprep.mubr.bf16.mxu0 0
        %2924 = vmatmul.mubr.bf16.gmra.mrb[0].mxu0 %v2849
        %v2925 = vpop.f32.mrb[0].mxu0
        %v2926 = vadd.f32 0.0, %v2925
        %v2927 = vpop.f32.mrb[0].mxu0
        %v2928 = vpop.f32.mrb[0].mxu0
        %v2929 = vadd.f32 0.0, %v2928
        %v2930 = vpop.f32.mrb[0].mxu0
        %2931 = vmatprep.mubr.bf16.mxu0 0
        %2932 = vmatmul.mubr.bf16.gmra.mrb[0].mxu0 %v2850
        %v2933 = vpop.f32.mrb[0].mxu0
        %v2934 = vadd.f32 0.0, %v2933
        %v2935 = vpop.f32.mrb[0].mxu0
        %v2936 = vpop.f32.mrb[0].mxu0
        %v2937 = vadd.f32 0.0, %v2936
        %v2938 = vpop.f32.mrb[0].mxu0
        %2939 = vdwg.mxu0
        %v2940 = vrcp.pop %v2832
        %v2941 = vrcp.pop %v2834
        %v2942 = vrcp.pop %v2836
        %v2943 = vrcp.pop %v2838
        %v2944 = vrcp.pop %v2840
        %v2945 = vrcp.pop %v2842
        %v2946 = vrcp.pop %v2844
        %v2947 = vrcp.pop %v2846
        %v2948 = vmul.f32 %v2910, %v2940
        %v2949 = vmul.f32 %v2913, %v2941
        %v2950 = vmul.f32 %v2918, %v2942
        %v2951 = vmul.f32 %v2921, %v2943
        %v2952 = vmul.f32 %v2926, %v2944
        %v2953 = vmul.f32 %v2929, %v2945
        %v2954 = vmul.f32 %v2934, %v2946
        %v2955 = vmul.f32 %v2937, %v2947
        %v2956 = vpack.c.bf16 %v2949, %v2948
        %v2957 = vpack.c.bf16 %v2951, %v2950
        %v2958 = vpack.c.bf16 %v2953, %v2952
        %v2959 = vpack.c.bf16 %v2955, %v2954
        %s2960 = scalar_lea.vmem [#allocation10], 48
        %v2961 = vld [vmem:[%s2960] sm:$0xf]
        %v2962 = vld [vmem:[%s2960 + $0x4] sm:$0xf]
        %v2963 = vld [vmem:[%s2960 + $0x8] sm:$0xf]
        %v2964 = vld [vmem:[%s2960 + $0xc] sm:$0xf]
        %v2969 = vunpack.c.l.b16 %v2961
        %v2970 = vunpack.c.l.b16 %v2962
        %v2971 = vunpack.c.l.b16 %v2963
        %v2972 = vunpack.c.l.b16 %v2964
        %v2973 = vpack.c.b16 %v2970, %v2969
        %v2974 = vpack.c.b16 %v2972, %v2971
        %v2978 = vsel %vm1490, %v2956, 0
        %v2981 = vsel %vm1490, %v2957, 0
        %v2984 = vsel %vm1490, %v2958, 0
        %v2987 = vsel %vm1490, %v2959, 0
        %2989 = vmatprep.subr.bf16.mxu0 0
        %2990 = vmatpush1.bf16.msra.mxu0 %v2973
        %2991 = vmatprep.subr.bf16.mxu0 0
        %2992 = vmatpush1.bf16.msra.mxu0 %v2974
        %2993 = vmatprep.subr.bf16.mxu0 0
        %2994 = vmatpush1.bf16.msra.mxu0 0
        %2995 = vmatprep.subr.bf16.mxu0 0
        %2996 = vmatpush1.bf16.msra.mxu0 0
        %2997 = vmatprep.subr.bf16.mxu0 0
        %2998 = vmatpush1.bf16.msra.mxu0 0
        %2999 = vmatprep.subr.bf16.mxu0 0
        %3000 = vmatpush1.bf16.msra.mxu0 0
        %3001 = vmatprep.subr.bf16.mxu0 0
        %3002 = vmatpush1.bf16.msra.mxu0 0
        %3003 = vmatprep.subr.bf16.mxu0 0
        %3004 = vmatpush1.bf16.msra.mxu0 0
        %3005 = vmatprep.subr.bf16.mxu0 0
        %3006 = vmatpush1.bf16.msra.mxu0 0
        %3007 = vmatprep.subr.bf16.mxu0 0
        %3008 = vmatpush1.bf16.msra.mxu0 0
        %3009 = vmatprep.subr.bf16.mxu0 0
        %3010 = vmatpush1.bf16.msra.mxu0 0
        %3011 = vmatprep.subr.bf16.mxu0 0
        %3012 = vmatpush1.bf16.msra.mxu0 0
        %3013 = vmatprep.subr.bf16.mxu0 0
        %3014 = vmatpush1.bf16.msra.mxu0 0
        %3015 = vmatprep.subr.bf16.mxu0 0
        %3016 = vmatpush1.bf16.msra.mxu0 0
        %3017 = vmatprep.subr.bf16.mxu0 0
        %3018 = vmatpush1.bf16.msra.mxu0 0
        %3019 = vmatprep.subr.bf16.mxu0 0
        %3020 = vmatpush1.bf16.msra.mxu0 0
        %3021 = vmatprep.mubr.bf16.mxu0 0
        %3022 = vmatmul.mubr.bf16.gmra.mrb[0].mxu0 %v2978
        %v3023 = vpop.f32.mrb[0].mxu0
        %v3024 = vadd.f32 0.0, %v3023
        %v3025 = vpop.f32.mrb[0].mxu0
        %v3026 = vpop.f32.mrb[0].mxu0
        %v3027 = vadd.f32 0.0, %v3026
        %v3028 = vpop.f32.mrb[0].mxu0
        %3029 = vmatprep.mubr.bf16.mxu0 0
        %3030 = vmatmul.mubr.bf16.gmra.mrb[0].mxu0 %v2981
        %v3031 = vpop.f32.mrb[0].mxu0
        %v3032 = vadd.f32 0.0, %v3031
        %v3033 = vpop.f32.mrb[0].mxu0
        %v3034 = vpop.f32.mrb[0].mxu0
        %v3035 = vadd.f32 0.0, %v3034
        %v3036 = vpop.f32.mrb[0].mxu0
        %3037 = vmatprep.mubr.bf16.mxu0 0
        %3038 = vmatmul.mubr.bf16.gmra.mrb[0].mxu0 %v2984
        %v3039 = vpop.f32.mrb[0].mxu0
        %v3040 = vadd.f32 0.0, %v3039
        %v3041 = vpop.f32.mrb[0].mxu0
        %v3042 = vpop.f32.mrb[0].mxu0
        %v3043 = vadd.f32 0.0, %v3042
        %v3044 = vpop.f32.mrb[0].mxu0
        %3045 = vmatprep.mubr.bf16.mxu0 0
        %3046 = vmatmul.mubr.bf16.gmra.mrb[0].mxu0 %v2987
        %v3047 = vpop.f32.mrb[0].mxu0
        %v3048 = vadd.f32 0.0, %v3047
        %v3049 = vpop.f32.mrb[0].mxu0
        %v3050 = vpop.f32.mrb[0].mxu0
        %v3051 = vadd.f32 0.0, %v3050
        %v3052 = vpop.f32.mrb[0].mxu0
        %3053 = vdwg.mxu0
        %v3054 = vadd.f32 %v2650, %v3024
        %v3055 = vadd.f32 %v2651, %v3027
        %v3056 = vadd.f32 %v2652, %v3032
        %v3057 = vadd.f32 %v2653, %v3035
        %v3058 = vadd.f32 %v2654, %v3040
        %v3059 = vadd.f32 %v2655, %v3043
        %v3060 = vadd.f32 %v2656, %v3048
        %v3061 = vadd.f32 %v2657, %v3051
        %v3062 = vld [vmem:[%s9] sm:$0x1]
        %v3064 = vlaneseq
        %v3065 = vshrl.u32 %v3064, 7
        %v3066 = vsub.s32 0, %v3065
        %v3067 = vrot.slane %v3062, %v3066
        %v3069 = vadd.f32 %v3054, %v3067
        %v3070 = vadd.f32 %v3055, %v3067
        %v3071 = vadd.f32 %v3056, %v3067
        %v3072 = vadd.f32 %v3057, %v3067
        %v3073 = vadd.f32 %v3058, %v3067
        %v3074 = vadd.f32 %v3059, %v3067
        %v3075 = vadd.f32 %v3060, %v3067
        %v3076 = vadd.f32 %v3061, %v3067
        %v3077 = vadd.f32 %v673, %v3069
        %v3078 = vadd.f32 %v674, %v3070
        %v3079 = vadd.f32 %v675, %v3071
        %v3080 = vadd.f32 %v676, %v3072
        %v3081 = vadd.f32 %v677, %v3073
        %v3082 = vadd.f32 %v678, %v3074
        %v3083 = vadd.f32 %v679, %v3075
        %v3084 = vadd.f32 %v680, %v3076
        %v3085 = vld [vmem:[%s10] sm:$0x1]
        %v3086 = vld [vmem:[%s11] sm:$0x1]
        %3087 = vadd.xlane.f32.xlu0 %v3077
        %v3088 = vpop.xlane.xlu0 %3087
        %3089 = vadd.xlane.f32.xlu0 %v3078
        %v3090 = vpop.xlane.xlu0 %3089
        %3091 = vadd.xlane.f32.xlu0 %v3079
        %v3092 = vpop.xlane.xlu0 %3091
        %3093 = vadd.xlane.f32.xlu0 %v3080
        %v3094 = vpop.xlane.xlu0 %3093
        %3095 = vadd.xlane.f32.xlu0 %v3081
        %v3096 = vpop.xlane.xlu0 %3095
        %3097 = vadd.xlane.f32.xlu0 %v3082
        %v3098 = vpop.xlane.xlu0 %3097
        %3099 = vadd.xlane.f32.xlu0 %v3083
        %v3100 = vpop.xlane.xlu0 %3099
        %3101 = vadd.xlane.f32.xlu0 %v3084
        %v3102 = vpop.xlane.xlu0 %3101
        %v3103 = vmul.f32 %v3088, %v715
        %v3104 = vmul.f32 %v3090, %v715
        %v3105 = vmul.f32 %v3092, %v715
        %v3106 = vmul.f32 %v3094, %v715
        %v3107 = vmul.f32 %v3096, %v715
        %v3108 = vmul.f32 %v3098, %v715
        %v3109 = vmul.f32 %v3100, %v715
        %v3110 = vmul.f32 %v3102, %v715
        %v3111 = vmul.f32 %v3077, %v3077
        %v3112 = vmul.f32 %v3078, %v3078
        %v3113 = vmul.f32 %v3079, %v3079
        %v3114 = vmul.f32 %v3080, %v3080
        %v3115 = vmul.f32 %v3081, %v3081
        %v3116 = vmul.f32 %v3082, %v3082
        %v3117 = vmul.f32 %v3083, %v3083
        %v3118 = vmul.f32 %v3084, %v3084
        %3119 = vadd.xlane.f32.xlu0 %v3111
        %v3120 = vpop.xlane.xlu0 %3119
        %3121 = vadd.xlane.f32.xlu0 %v3112
        %v3122 = vpop.xlane.xlu0 %3121
        %3123 = vadd.xlane.f32.xlu0 %v3113
        %v3124 = vpop.xlane.xlu0 %3123
        %3125 = vadd.xlane.f32.xlu0 %v3114
        %v3126 = vpop.xlane.xlu0 %3125
        %3127 = vadd.xlane.f32.xlu0 %v3115
        %v3128 = vpop.xlane.xlu0 %3127
        %3129 = vadd.xlane.f32.xlu0 %v3116
        %v3130 = vpop.xlane.xlu0 %3129
        %3131 = vadd.xlane.f32.xlu0 %v3117
        %v3132 = vpop.xlane.xlu0 %3131
        %3133 = vadd.xlane.f32.xlu0 %v3118
        %v3134 = vpop.xlane.xlu0 %3133
        %v3135 = vmul.f32 %v3120, %v715
        %v3136 = vmul.f32 %v3122, %v715
        %v3137 = vmul.f32 %v3124, %v715
        %v3138 = vmul.f32 %v3126, %v715
        %v3139 = vmul.f32 %v3128, %v715
        %v3140 = vmul.f32 %v3130, %v715
        %v3141 = vmul.f32 %v3132, %v715
        %v3142 = vmul.f32 %v3134, %v715
        %v3143 = vmul.f32 %v3103, %v3103
        %v3144 = vmul.f32 %v3104, %v3104
        %v3145 = vmul.f32 %v3105, %v3105
        %v3146 = vmul.f32 %v3106, %v3106
        %v3147 = vmul.f32 %v3107, %v3107
        %v3148 = vmul.f32 %v3108, %v3108
        %v3149 = vmul.f32 %v3109, %v3109
        %v3150 = vmul.f32 %v3110, %v3110
        %v3151 = vsub.f32 %v3135, %v3143
        %v3152 = vsub.f32 %v3136, %v3144
        %v3153 = vsub.f32 %v3137, %v3145
        %v3154 = vsub.f32 %v3138, %v3146
        %v3155 = vsub.f32 %v3139, %v3147
        %v3156 = vsub.f32 %v3140, %v3148
        %v3157 = vsub.f32 %v3141, %v3149
        %v3158 = vsub.f32 %v3142, %v3150
        %v3159 = vsub.f32 %v3077, %v3103
        %v3160 = vsub.f32 %v3078, %v3104
        %v3161 = vsub.f32 %v3079, %v3105
        %v3162 = vsub.f32 %v3080, %v3106
        %v3163 = vsub.f32 %v3081, %v3107
        %v3164 = vsub.f32 %v3082, %v3108
        %v3165 = vsub.f32 %v3083, %v3109
        %v3166 = vsub.f32 %v3084, %v3110
        %v3167 = vadd.f32 %v3151, 1e-05
        %v3168 = vadd.f32 %v3152, 1e-05
        %v3169 = vadd.f32 %v3153, 1e-05
        %v3170 = vadd.f32 %v3154, 1e-05
        %v3171 = vadd.f32 %v3155, 1e-05
        %v3172 = vadd.f32 %v3156, 1e-05
        %v3173 = vadd.f32 %v3157, 1e-05
        %v3174 = vadd.f32 %v3158, 1e-05
        %v3175 = vrsqrt.pop %v3167
        %v3176 = vrsqrt.pop %v3168
        %v3177 = vrsqrt.pop %v3169
        %v3178 = vrsqrt.pop %v3170
        %v3179 = vrsqrt.pop %v3171
        %v3180 = vrsqrt.pop %v3172
        %v3181 = vrsqrt.pop %v3173
        %v3182 = vrsqrt.pop %v3174
        %v3183 = vmul.f32 %v3159, %v3175
        %v3184 = vmul.f32 %v3160, %v3176
        %v3185 = vmul.f32 %v3161, %v3177
        %v3186 = vmul.f32 %v3162, %v3178
        %v3187 = vmul.f32 %v3163, %v3179
        %v3188 = vmul.f32 %v3164, %v3180
        %v3189 = vmul.f32 %v3165, %v3181
        %v3190 = vmul.f32 %v3166, %v3182
        %v3192 = vlaneseq
        %v3193 = vshrl.u32 %v3192, 7
        %v3194 = vsub.s32 0, %v3193
        %v3195 = vrot.slane %v3085, %v3194
        %v3197 = vmul.f32 %v3183, %v3195
        %v3198 = vmul.f32 %v3184, %v3195
        %v3199 = vmul.f32 %v3185, %v3195
        %v3200 = vmul.f32 %v3186, %v3195
        %v3201 = vmul.f32 %v3187, %v3195
        %v3202 = vmul.f32 %v3188, %v3195
        %v3203 = vmul.f32 %v3189, %v3195
        %v3204 = vmul.f32 %v3190, %v3195
        %v3206 = vlaneseq
        %v3207 = vshrl.u32 %v3206, 7
        %v3208 = vsub.s32 0, %v3207
        %v3209 = vrot.slane %v3086, %v3208
        %v3211 = vadd.f32 %v3197, %v3209
        %v3212 = vadd.f32 %v3198, %v3209
        %v3213 = vadd.f32 %v3199, %v3209
        %v3214 = vadd.f32 %v3200, %v3209
        %v3215 = vadd.f32 %v3201, %v3209
        %v3216 = vadd.f32 %v3202, %v3209
        %v3217 = vadd.f32 %v3203, %v3209
        %v3218 = vadd.f32 %v3204, %v3209
        %v3219 = vpack.c.bf16 %v3212, %v3211
        %v3220 = vpack.c.bf16 %v3214, %v3213
        %v3221 = vpack.c.bf16 %v3216, %v3215
        %v3222 = vpack.c.bf16 %v3218, %v3217
        %v3223 = vld [vmem:[#allocation11] sm:$0xff]
        %v3224 = vld [vmem:[#allocation11 + $0x8] sm:$0xff]
        %v3225 = vld [vmem:[#allocation11 + $0x10] sm:$0xff]
        %v3226 = vld [vmem:[#allocation11 + $0x18] sm:$0xff]
        %v3227 = vld [vmem:[#allocation11 + $0x20] sm:$0xff]
        %v3228 = vld [vmem:[#allocation11 + $0x28] sm:$0xff]
        %v3229 = vld [vmem:[#allocation11 + $0x30] sm:$0xff]
        %v3230 = vld [vmem:[#allocation11 + $0x38] sm:$0xff]
        %v3231 = vld [vmem:[#allocation11 + $0x40] sm:$0xff]
        %v3232 = vld [vmem:[#allocation11 + $0x48] sm:$0xff]
        %v3233 = vld [vmem:[#allocation11 + $0x50] sm:$0xff]
        %v3234 = vld [vmem:[#allocation11 + $0x58] sm:$0xff]
        %v3235 = vld [vmem:[#allocation11 + $0x60] sm:$0xff]
        %v3236 = vld [vmem:[#allocation11 + $0x68] sm:$0xff]
        %v3237 = vld [vmem:[#allocation11 + $0x70] sm:$0xff]
        %v3238 = vld [vmem:[#allocation11 + $0x78] sm:$0xff]
        %v3239 = vld [vmem:[#allocation11 + $0x80] sm:$0xff]
        %v3240 = vld [vmem:[#allocation11 + $0x88] sm:$0xff]
        %v3241 = vld [vmem:[#allocation11 + $0x90] sm:$0xff]
        %v3242 = vld [vmem:[#allocation11 + $0x98] sm:$0xff]
        %v3243 = vld [vmem:[#allocation11 + $0xa0] sm:$0xff]
        %v3244 = vld [vmem:[#allocation11 + $0xa8] sm:$0xff]
        %v3245 = vld [vmem:[#allocation11 + $0xb0] sm:$0xff]
        %v3246 = vld [vmem:[#allocation11 + $0xb8] sm:$0xff]
        %v3247 = vld [vmem:[#allocation11 + $0xc0] sm:$0xff]
        %v3248 = vld [vmem:[#allocation11 + $0xc8] sm:$0xff]
        %v3249 = vld [vmem:[#allocation11 + $0xd0] sm:$0xff]
        %v3250 = vld [vmem:[#allocation11 + $0xd8] sm:$0xff]
        %v3251 = vld [vmem:[#allocation11 + $0xe0] sm:$0xff]
        %v3252 = vld [vmem:[#allocation11 + $0xe8] sm:$0xff]
        %v3253 = vld [vmem:[#allocation11 + $0xf0] sm:$0xff]
        %v3254 = vld [vmem:[#allocation11 + $0xf8] sm:$0xff]
        %v3255 = vld [vmem:[%s13] sm:$0xf]
        %v3257 = vlaneseq
        %v3258 = vshrl.u32 %v3257, 7
        %v3259 = vsub.s32 0, %v3258
        %v3260 = vrot.slane %v3255, %v3259
        %v3261 = vlaneseq
        %v3262 = vshrl.u32 %v3261, 7
        %v3263 = vsub.s32 1, %v3262
        %v3264 = vrot.slane %v3255, %v3263
        %v3265 = vlaneseq
        %v3266 = vshrl.u32 %v3265, 7
        %v3267 = vsub.s32 2, %v3266
        %v3268 = vrot.slane %v3255, %v3267
        %v3269 = vlaneseq
        %v3270 = vshrl.u32 %v3269, 7
        %v3271 = vsub.s32 3, %v3270
        %v3272 = vrot.slane %v3255, %v3271
        %v3309 = vunpack.c.l.b16 %v3223
        %v3310 = vunpack.c.h.b16 %v3223
        %v3311 = vunpack.c.l.b16 %v3224
        %v3312 = vunpack.c.h.b16 %v3224
        %v3313 = vunpack.c.l.b16 %v3225
        %v3314 = vunpack.c.h.b16 %v3225
        %v3315 = vunpack.c.l.b16 %v3226
        %v3316 = vunpack.c.h.b16 %v3226
        %v3317 = vunpack.c.l.b16 %v3227
        %v3318 = vunpack.c.h.b16 %v3227
        %v3319 = vunpack.c.l.b16 %v3228
        %v3320 = vunpack.c.h.b16 %v3228
        %v3321 = vunpack.c.l.b16 %v3229
        %v3322 = vunpack.c.h.b16 %v3229
        %v3323 = vunpack.c.l.b16 %v3230
        %v3324 = vunpack.c.h.b16 %v3230
        %v3325 = vunpack.c.l.b16 %v3231
        %v3326 = vunpack.c.h.b16 %v3231
        %v3327 = vunpack.c.l.b16 %v3232
        %v3328 = vunpack.c.h.b16 %v3232
        %v3329 = vunpack.c.l.b16 %v3233
        %v3330 = vunpack.c.h.b16 %v3233
        %v3331 = vunpack.c.l.b16 %v3234
        %v3332 = vunpack.c.h.b16 %v3234
        %v3333 = vunpack.c.l.b16 %v3235
        %v3334 = vunpack.c.h.b16 %v3235
        %v3335 = vunpack.c.l.b16 %v3236
        %v3336 = vunpack.c.h.b16 %v3236
        %v3337 = vunpack.c.l.b16 %v3237
        %v3338 = vunpack.c.h.b16 %v3237
        %v3339 = vunpack.c.l.b16 %v3238
        %v3340 = vunpack.c.h.b16 %v3238
        %v3341 = vunpack.c.l.b16 %v3239
        %v3342 = vunpack.c.h.b16 %v3239
        %v3343 = vunpack.c.l.b16 %v3240
        %v3344 = vunpack.c.h.b16 %v3240
        %v3345 = vunpack.c.l.b16 %v3241
        %v3346 = vunpack.c.h.b16 %v3241
        %v3347 = vunpack.c.l.b16 %v3242
        %v3348 = vunpack.c.h.b16 %v3242
        %v3349 = vunpack.c.l.b16 %v3243
        %v3350 = vunpack.c.h.b16 %v3243
        %v3351 = vunpack.c.l.b16 %v3244
        %v3352 = vunpack.c.h.b16 %v3244
        %v3353 = vunpack.c.l.b16 %v3245
        %v3354 = vunpack.c.h.b16 %v3245
        %v3355 = vunpack.c.l.b16 %v3246
        %v3356 = vunpack.c.h.b16 %v3246
        %v3357 = vunpack.c.l.b16 %v3247
        %v3358 = vunpack.c.h.b16 %v3247
        %v3359 = vunpack.c.l.b16 %v3248
        %v3360 = vunpack.c.h.b16 %v3248
        %v3361 = vunpack.c.l.b16 %v3249
        %v3362 = vunpack.c.h.b16 %v3249
        %v3363 = vunpack.c.l.b16 %v3250
        %v3364 = vunpack.c.h.b16 %v3250
        %v3365 = vunpack.c.l.b16 %v3251
        %v3366 = vunpack.c.h.b16 %v3251
        %v3367 = vunpack.c.l.b16 %v3252
        %v3368 = vunpack.c.h.b16 %v3252
        %v3369 = vunpack.c.l.b16 %v3253
        %v3370 = vunpack.c.h.b16 %v3253
        %v3371 = vunpack.c.l.b16 %v3254
        %v3372 = vunpack.c.h.b16 %v3254
        %v3373 = vpack.c.b16 %v3313, %v3309
        %v3374 = vpack.c.b16 %v3314, %v3310
        %v3375 = vpack.c.b16 %v3315, %v3311
        %v3376 = vpack.c.b16 %v3316, %v3312
        %v3377 = vpack.c.b16 %v3321, %v3317
        %v3378 = vpack.c.b16 %v3322, %v3318
        %v3379 = vpack.c.b16 %v3323, %v3319
        %v3380 = vpack.c.b16 %v3324, %v3320
        %v3381 = vpack.c.b16 %v3329, %v3325
        %v3382 = vpack.c.b16 %v3330, %v3326
        %v3383 = vpack.c.b16 %v3331, %v3327
        %v3384 = vpack.c.b16 %v3332, %v3328
        %v3385 = vpack.c.b16 %v3337, %v3333
        %v3386 = vpack.c.b16 %v3338, %v3334
        %v3387 = vpack.c.b16 %v3339, %v3335
        %v3388 = vpack.c.b16 %v3340, %v3336
        %v3389 = vpack.c.b16 %v3345, %v3341
        %v3390 = vpack.c.b16 %v3346, %v3342
        %v3391 = vpack.c.b16 %v3347, %v3343
        %v3392 = vpack.c.b16 %v3348, %v3344
        %v3393 = vpack.c.b16 %v3353, %v3349
        %v3394 = vpack.c.b16 %v3354, %v3350
        %v3395 = vpack.c.b16 %v3355, %v3351
        %v3396 = vpack.c.b16 %v3356, %v3352
        %v3397 = vpack.c.b16 %v3361, %v3357
        %v3398 = vpack.c.b16 %v3362, %v3358
        %v3399 = vpack.c.b16 %v3363, %v3359
        %v3400 = vpack.c.b16 %v3364, %v3360
        %v3401 = vpack.c.b16 %v3369, %v3365
        %v3402 = vpack.c.b16 %v3370, %v3366
        %v3403 = vpack.c.b16 %v3371, %v3367
        %v3404 = vpack.c.b16 %v3372, %v3368
        %3437 = vmatprep.subr.bf16.mxu0 %v3374
        %3438 = vmatpush1.bf16.msra.mxu0 %v3373
        %3439 = vmatprep.subr.bf16.mxu0 %v3378
        %3440 = vmatpush1.bf16.msra.mxu0 %v3377
        %3441 = vmatprep.subr.bf16.mxu0 %v3382
        %3442 = vmatpush1.bf16.msra.mxu0 %v3381
        %3443 = vmatprep.subr.bf16.mxu0 %v3386
        %3444 = vmatpush1.bf16.msra.mxu0 %v3385
        %3445 = vmatprep.subr.bf16.mxu0 %v3390
        %3446 = vmatpush1.bf16.msra.mxu0 %v3389
        %3447 = vmatprep.subr.bf16.mxu0 %v3394
        %3448 = vmatpush1.bf16.msra.mxu0 %v3393
        %3449 = vmatprep.subr.bf16.mxu0 %v3398
        %3450 = vmatpush1.bf16.msra.mxu0 %v3397
        %3451 = vmatprep.subr.bf16.mxu0 %v3402
        %3452 = vmatpush1.bf16.msra.mxu0 %v3401
        %3453 = vmatprep.subr.bf16.mxu0 0
        %3454 = vmatpush1.bf16.msra.mxu0 0
        %3455 = vmatprep.subr.bf16.mxu0 0
        %3456 = vmatpush1.bf16.msra.mxu0 0
        %3457 = vmatprep.subr.bf16.mxu0 0
        %3458 = vmatpush1.bf16.msra.mxu0 0
        %3459 = vmatprep.subr.bf16.mxu0 0
        %3460 = vmatpush1.bf16.msra.mxu0 0
        %3461 = vmatprep.subr.bf16.mxu0 0
        %3462 = vmatpush1.bf16.msra.mxu0 0
        %3463 = vmatprep.subr.bf16.mxu0 0
        %3464 = vmatpush1.bf16.msra.mxu0 0
        %3465 = vmatprep.subr.bf16.mxu0 0
        %3466 = vmatpush1.bf16.msra.mxu0 0
        %3467 = vmatprep.subr.bf16.mxu0 0
        %3468 = vmatpush1.bf16.msra.mxu0 0
        %3469 = vmatprep.mubr.bf16.mxu0 0
        %3470 = vmatmul.mubr.bf16.gmra.mrb[0].mxu0 %v3219
        %v3471 = vpop.f32.mrb[0].mxu0
        %v3472 = vadd.f32 %v3260, %v3471
        %v3473 = vpop.f32.mrb[0].mxu0
        %v3474 = vadd.f32 %v3264, %v3473
        %v3475 = vpop.f32.mrb[0].mxu0
        %v3476 = vadd.f32 %v3260, %v3475
        %v3477 = vpop.f32.mrb[0].mxu0
        %v3478 = vadd.f32 %v3264, %v3477
        %3479 = vmatprep.mubr.bf16.mxu0 0
        %3480 = vmatmul.mubr.bf16.gmra.mrb[0].mxu0 %v3220
        %v3481 = vpop.f32.mrb[0].mxu0
        %v3482 = vadd.f32 %v3260, %v3481
        %v3483 = vpop.f32.mrb[0].mxu0
        %v3484 = vadd.f32 %v3264, %v3483
        %v3485 = vpop.f32.mrb[0].mxu0
        %v3486 = vadd.f32 %v3260, %v3485
        %v3487 = vpop.f32.mrb[0].mxu0
        %v3488 = vadd.f32 %v3264, %v3487
        %3489 = vmatprep.mubr.bf16.mxu0 0
        %3490 = vmatmul.mubr.bf16.gmra.mrb[0].mxu0 %v3221
        %v3491 = vpop.f32.mrb[0].mxu0
        %v3492 = vadd.f32 %v3260, %v3491
        %v3493 = vpop.f32.mrb[0].mxu0
        %v3494 = vadd.f32 %v3264, %v3493
        %v3495 = vpop.f32.mrb[0].mxu0
        %v3496 = vadd.f32 %v3260, %v3495
        %v3497 = vpop.f32.mrb[0].mxu0
        %v3498 = vadd.f32 %v3264, %v3497
        %3499 = vmatprep.mubr.bf16.mxu0 0
        %3500 = vmatmul.mubr.bf16.gmra.mrb[0].mxu0 %v3222
        %v3501 = vpop.f32.mrb[0].mxu0
        %v3502 = vadd.f32 %v3260, %v3501
        %v3503 = vpop.f32.mrb[0].mxu0
        %v3504 = vadd.f32 %v3264, %v3503
        %v3505 = vpop.f32.mrb[0].mxu0
        %v3506 = vadd.f32 %v3260, %v3505
        %v3507 = vpop.f32.mrb[0].mxu0
        %v3508 = vadd.f32 %v3264, %v3507
        %3509 = vdwg.mxu0
        %3510 = vmatprep.subr.bf16.mxu0 %v3376
        %3511 = vmatpush1.bf16.msra.mxu0 %v3375
        %3512 = vmatprep.subr.bf16.mxu0 %v3380
        %3513 = vmatpush1.bf16.msra.mxu0 %v3379
        %3514 = vmatprep.subr.bf16.mxu0 %v3384
        %3515 = vmatpush1.bf16.msra.mxu0 %v3383
        %3516 = vmatprep.subr.bf16.mxu0 %v3388
        %3517 = vmatpush1.bf16.msra.mxu0 %v3387
        %3518 = vmatprep.subr.bf16.mxu0 %v3392
        %3519 = vmatpush1.bf16.msra.mxu0 %v3391
        %3520 = vmatprep.subr.bf16.mxu0 %v3396
        %3521 = vmatpush1.bf16.msra.mxu0 %v3395
        %3522 = vmatprep.subr.bf16.mxu0 %v3400
        %3523 = vmatpush1.bf16.msra.mxu0 %v3399
        %3524 = vmatprep.subr.bf16.mxu0 %v3404
        %3525 = vmatpush1.bf16.msra.mxu0 %v3403
        %3526 = vmatprep.subr.bf16.mxu0 0
        %3527 = vmatpush1.bf16.msra.mxu0 0
        %3528 = vmatprep.subr.bf16.mxu0 0
        %3529 = vmatpush1.bf16.msra.mxu0 0
        %3530 = vmatprep.subr.bf16.mxu0 0
        %3531 = vmatpush1.bf16.msra.mxu0 0
        %3532 = vmatprep.subr.bf16.mxu0 0
        %3533 = vmatpush1.bf16.msra.mxu0 0
        %3534 = vmatprep.subr.bf16.mxu0 0
        %3535 = vmatpush1.bf16.msra.mxu0 0
        %3536 = vmatprep.subr.bf16.mxu0 0
        %3537 = vmatpush1.bf16.msra.mxu0 0
        %3538 = vmatprep.subr.bf16.mxu0 0
        %3539 = vmatpush1.bf16.msra.mxu0 0
        %3540 = vmatprep.subr.bf16.mxu0 0
        %3541 = vmatpush1.bf16.msra.mxu0 0
        %3542 = vmatprep.mubr.bf16.mxu0 0
        %3543 = vmatmul.mubr.bf16.gmra.mrb[0].mxu0 %v3219
        %v3544 = vpop.f32.mrb[0].mxu0
        %v3545 = vadd.f32 %v3268, %v3544
        %v3546 = vpop.f32.mrb[0].mxu0
        %v3547 = vadd.f32 %v3272, %v3546
        %v3548 = vpop.f32.mrb[0].mxu0
        %v3549 = vadd.f32 %v3268, %v3548
        %v3550 = vpop.f32.mrb[0].mxu0
        %v3551 = vadd.f32 %v3272, %v3550
        %3552 = vmatprep.mubr.bf16.mxu0 0
        %3553 = vmatmul.mubr.bf16.gmra.mrb[0].mxu0 %v3220
        %v3554 = vpop.f32.mrb[0].mxu0
        %v3555 = vadd.f32 %v3268, %v3554
        %v3556 = vpop.f32.mrb[0].mxu0
        %v3557 = vadd.f32 %v3272, %v3556
        %v3558 = vpop.f32.mrb[0].mxu0
        %v3559 = vadd.f32 %v3268, %v3558
        %v3560 = vpop.f32.mrb[0].mxu0
        %v3561 = vadd.f32 %v3272, %v3560
        %3562 = vmatprep.mubr.bf16.mxu0 0
        %3563 = vmatmul.mubr.bf16.gmra.mrb[0].mxu0 %v3221
        %v3564 = vpop.f32.mrb[0].mxu0
        %v3565 = vadd.f32 %v3268, %v3564
        %v3566 = vpop.f32.mrb[0].mxu0
        %v3567 = vadd.f32 %v3272, %v3566
        %v3568 = vpop.f32.mrb[0].mxu0
        %v3569 = vadd.f32 %v3268, %v3568
        %v3570 = vpop.f32.mrb[0].mxu0
        %v3571 = vadd.f32 %v3272, %v3570
        %3572 = vmatprep.mubr.bf16.mxu0 0
        %3573 = vmatmul.mubr.bf16.gmra.mrb[0].mxu0 %v3222
        %v3574 = vpop.f32.mrb[0].mxu0
        %v3575 = vadd.f32 %v3268, %v3574
        %v3576 = vpop.f32.mrb[0].mxu0
        %v3577 = vadd.f32 %v3272, %v3576
        %v3578 = vpop.f32.mrb[0].mxu0
        %v3579 = vadd.f32 %v3268, %v3578
        %v3580 = vpop.f32.mrb[0].mxu0
        %v3581 = vadd.f32 %v3272, %v3580
        %3582 = vdwg.mxu0
        %v3583 = vmul.f32 %v3472, 0.5
        %v3584 = vmul.f32 %v3474, 0.5
        %v3585 = vmul.f32 %v3545, 0.5
        %v3586 = vmul.f32 %v3547, 0.5
        %v3587 = vmul.f32 %v3476, 0.5
        %v3588 = vmul.f32 %v3478, 0.5
        %v3589 = vmul.f32 %v3549, 0.5
        %v3590 = vmul.f32 %v3551, 0.5
        %v3591 = vmul.f32 %v3482, 0.5
        %v3592 = vmul.f32 %v3484, 0.5
        %v3593 = vmul.f32 %v3555, 0.5
        %v3594 = vmul.f32 %v3557, 0.5
        %v3595 = vmul.f32 %v3486, 0.5
        %v3596 = vmul.f32 %v3488, 0.5
        %v3597 = vmul.f32 %v3559, 0.5
        %v3598 = vmul.f32 %v3561, 0.5
        %v3599 = vmul.f32 %v3492, 0.5
        %v3600 = vmul.f32 %v3494, 0.5
        %v3601 = vmul.f32 %v3565, 0.5
        %v3602 = vmul.f32 %v3567, 0.5
        %v3603 = vmul.f32 %v3496, 0.5
        %v3604 = vmul.f32 %v3498, 0.5
        %v3605 = vmul.f32 %v3569, 0.5
        %v3606 = vmul.f32 %v3571, 0.5
        %v3607 = vmul.f32 %v3502, 0.5
        %v3608 = vmul.f32 %v3504, 0.5
        %v3609 = vmul.f32 %v3575, 0.5
        %v3610 = vmul.f32 %v3577, 0.5
        %v3611 = vmul.f32 %v3506, 0.5
        %v3612 = vmul.f32 %v3508, 0.5
        %v3613 = vmul.f32 %v3579, 0.5
        %v3614 = vmul.f32 %v3581, 0.5
        %v3615 = vmul.f32 %v3472, 0.044715
        %v3616 = vmul.f32 %v3474, 0.044715
        %v3617 = vmul.f32 %v3545, 0.044715
        %v3618 = vmul.f32 %v3547, 0.044715
        %v3619 = vmul.f32 %v3476, 0.044715
        %v3620 = vmul.f32 %v3478, 0.044715
        %v3621 = vmul.f32 %v3549, 0.044715
        %v3622 = vmul.f32 %v3551, 0.044715
        %v3623 = vmul.f32 %v3482, 0.044715
        %v3624 = vmul.f32 %v3484, 0.044715
        %v3625 = vmul.f32 %v3555, 0.044715
        %v3626 = vmul.f32 %v3557, 0.044715
        %v3627 = vmul.f32 %v3486, 0.044715
        %v3628 = vmul.f32 %v3488, 0.044715
        %v3629 = vmul.f32 %v3559, 0.044715
        %v3630 = vmul.f32 %v3561, 0.044715
        %v3631 = vmul.f32 %v3492, 0.044715
        %v3632 = vmul.f32 %v3494, 0.044715
        %v3633 = vmul.f32 %v3565, 0.044715
        %v3634 = vmul.f32 %v3567, 0.044715
        %v3635 = vmul.f32 %v3496, 0.044715
        %v3636 = vmul.f32 %v3498, 0.044715
        %v3637 = vmul.f32 %v3569, 0.044715
        %v3638 = vmul.f32 %v3571, 0.044715
        %v3639 = vmul.f32 %v3502, 0.044715
        %v3640 = vmul.f32 %v3504, 0.044715
        %v3641 = vmul.f32 %v3575, 0.044715
        %v3642 = vmul.f32 %v3577, 0.044715
        %v3643 = vmul.f32 %v3506, 0.044715
        %v3644 = vmul.f32 %v3508, 0.044715
        %v3645 = vmul.f32 %v3579, 0.044715
        %v3646 = vmul.f32 %v3581, 0.044715
        %v3647 = vmul.f32 %v3615, %v3472
        %v3648 = vmul.f32 %v3616, %v3474
        %v3649 = vmul.f32 %v3617, %v3545
        %v3650 = vmul.f32 %v3618, %v3547
        %v3651 = vmul.f32 %v3619, %v3476
        %v3652 = vmul.f32 %v3620, %v3478
        %v3653 = vmul.f32 %v3621, %v3549
        %v3654 = vmul.f32 %v3622, %v3551
        %v3655 = vmul.f32 %v3623, %v3482
        %v3656 = vmul.f32 %v3624, %v3484
        %v3657 = vmul.f32 %v3625, %v3555
        %v3658 = vmul.f32 %v3626, %v3557
        %v3659 = vmul.f32 %v3627, %v3486
        %v3660 = vmul.f32 %v3628, %v3488
        %v3661 = vmul.f32 %v3629, %v3559
        %v3662 = vmul.f32 %v3630, %v3561
        %v3663 = vmul.f32 %v3631, %v3492
        %v3664 = vmul.f32 %v3632, %v3494
        %v3665 = vmul.f32 %v3633, %v3565
        %v3666 = vmul.f32 %v3634, %v3567
        %v3667 = vmul.f32 %v3635, %v3496
        %v3668 = vmul.f32 %v3636, %v3498
        %v3669 = vmul.f32 %v3637, %v3569
        %v3670 = vmul.f32 %v3638, %v3571
        %v3671 = vmul.f32 %v3639, %v3502
        %v3672 = vmul.f32 %v3640, %v3504
        %v3673 = vmul.f32 %v3641, %v3575
        %v3674 = vmul.f32 %v3642, %v3577
        %v3675 = vmul.f32 %v3643, %v3506
        %v3676 = vmul.f32 %v3644, %v3508
        %v3677 = vmul.f32 %v3645, %v3579
        %v3678 = vmul.f32 %v3646, %v3581
        %v3679 = vmul.f32 %v3647, %v3472
        %v3680 = vmul.f32 %v3648, %v3474
        %v3681 = vmul.f32 %v3649, %v3545
        %v3682 = vmul.f32 %v3650, %v3547
        %v3683 = vmul.f32 %v3651, %v3476
        %v3684 = vmul.f32 %v3652, %v3478
        %v3685 = vmul.f32 %v3653, %v3549
        %v3686 = vmul.f32 %v3654, %v3551
        %v3687 = vmul.f32 %v3655, %v3482
        %v3688 = vmul.f32 %v3656, %v3484
        %v3689 = vmul.f32 %v3657, %v3555
        %v3690 = vmul.f32 %v3658, %v3557
        %v3691 = vmul.f32 %v3659, %v3486
        %v3692 = vmul.f32 %v3660, %v3488
        %v3693 = vmul.f32 %v3661, %v3559
        %v3694 = vmul.f32 %v3662, %v3561
        %v3695 = vmul.f32 %v3663, %v3492
        %v3696 = vmul.f32 %v3664, %v3494
        %v3697 = vmul.f32 %v3665, %v3565
        %v3698 = vmul.f32 %v3666, %v3567
        %v3699 = vmul.f32 %v3667, %v3496
        %v3700 = vmul.f32 %v3668, %v3498
        %v3701 = vmul.f32 %v3669, %v3569
        %v3702 = vmul.f32 %v3670, %v3571
        %v3703 = vmul.f32 %v3671, %v3502
        %v3704 = vmul.f32 %v3672, %v3504
        %v3705 = vmul.f32 %v3673, %v3575
        %v3706 = vmul.f32 %v3674, %v3577
        %v3707 = vmul.f32 %v3675, %v3506
        %v3708 = vmul.f32 %v3676, %v3508
        %v3709 = vmul.f32 %v3677, %v3579
        %v3710 = vmul.f32 %v3678, %v3581
        %v3711 = vadd.f32 %v3472, %v3679
        %v3712 = vadd.f32 %v3474, %v3680
        %v3713 = vadd.f32 %v3545, %v3681
        %v3714 = vadd.f32 %v3547, %v3682
        %v3715 = vadd.f32 %v3476, %v3683
        %v3716 = vadd.f32 %v3478, %v3684
        %v3717 = vadd.f32 %v3549, %v3685
        %v3718 = vadd.f32 %v3551, %v3686
        %v3719 = vadd.f32 %v3482, %v3687
        %v3720 = vadd.f32 %v3484, %v3688
        %v3721 = vadd.f32 %v3555, %v3689
        %v3722 = vadd.f32 %v3557, %v3690
        %v3723 = vadd.f32 %v3486, %v3691
        %v3724 = vadd.f32 %v3488, %v3692
        %v3725 = vadd.f32 %v3559, %v3693
        %v3726 = vadd.f32 %v3561, %v3694
        %v3727 = vadd.f32 %v3492, %v3695
        %v3728 = vadd.f32 %v3494, %v3696
        %v3729 = vadd.f32 %v3565, %v3697
        %v3730 = vadd.f32 %v3567, %v3698
        %v3731 = vadd.f32 %v3496, %v3699
        %v3732 = vadd.f32 %v3498, %v3700
        %v3733 = vadd.f32 %v3569, %v3701
        %v3734 = vadd.f32 %v3571, %v3702
        %v3735 = vadd.f32 %v3502, %v3703
        %v3736 = vadd.f32 %v3504, %v3704
        %v3737 = vadd.f32 %v3575, %v3705
        %v3738 = vadd.f32 %v3577, %v3706
        %v3739 = vadd.f32 %v3506, %v3707
        %v3740 = vadd.f32 %v3508, %v3708
        %v3741 = vadd.f32 %v3579, %v3709
        %v3742 = vadd.f32 %v3581, %v3710
        %v3743 = vmul.f32 %v3711, 0.7978846
        %v3744 = vmul.f32 %v3712, 0.7978846
        %v3745 = vmul.f32 %v3713, 0.7978846
        %v3746 = vmul.f32 %v3714, 0.7978846
        %v3747 = vmul.f32 %v3715, 0.7978846
        %v3748 = vmul.f32 %v3716, 0.7978846
        %v3749 = vmul.f32 %v3717, 0.7978846
        %v3750 = vmul.f32 %v3718, 0.7978846
        %v3751 = vmul.f32 %v3719, 0.7978846
        %v3752 = vmul.f32 %v3720, 0.7978846
        %v3753 = vmul.f32 %v3721, 0.7978846
        %v3754 = vmul.f32 %v3722, 0.7978846
        %v3755 = vmul.f32 %v3723, 0.7978846
        %v3756 = vmul.f32 %v3724, 0.7978846
        %v3757 = vmul.f32 %v3725, 0.7978846
        %v3758 = vmul.f32 %v3726, 0.7978846
        %v3759 = vmul.f32 %v3727, 0.7978846
        %v3760 = vmul.f32 %v3728, 0.7978846
        %v3761 = vmul.f32 %v3729, 0.7978846
        %v3762 = vmul.f32 %v3730, 0.7978846
        %v3763 = vmul.f32 %v3731, 0.7978846
        %v3764 = vmul.f32 %v3732, 0.7978846
        %v3765 = vmul.f32 %v3733, 0.7978846
        %v3766 = vmul.f32 %v3734, 0.7978846
        %v3767 = vmul.f32 %v3735, 0.7978846
        %v3768 = vmul.f32 %v3736, 0.7978846
        %v3769 = vmul.f32 %v3737, 0.7978846
        %v3770 = vmul.f32 %v3738, 0.7978846
        %v3771 = vmul.f32 %v3739, 0.7978846
        %v3772 = vmul.f32 %v3740, 0.7978846
        %v3773 = vmul.f32 %v3741, 0.7978846
        %v3774 = vmul.f32 %v3742, 0.7978846
        %v3775 = vtanh.pop %v3743
        %v3776 = vtanh.pop %v3744
        %v3777 = vtanh.pop %v3745
        %v3778 = vtanh.pop %v3746
        %v3779 = vtanh.pop %v3747
        %v3780 = vtanh.pop %v3748
        %v3781 = vtanh.pop %v3749
        %v3782 = vtanh.pop %v3750
        %v3783 = vtanh.pop %v3751
        %v3784 = vtanh.pop %v3752
        %v3785 = vtanh.pop %v3753
        %v3786 = vtanh.pop %v3754
        %v3787 = vtanh.pop %v3755
        %v3788 = vtanh.pop %v3756
        %v3789 = vtanh.pop %v3757
        %v3790 = vtanh.pop %v3758
        %v3791 = vtanh.pop %v3759
        %v3792 = vtanh.pop %v3760
        %v3793 = vtanh.pop %v3761
        %v3794 = vtanh.pop %v3762
        %v3795 = vtanh.pop %v3763
        %v3796 = vtanh.pop %v3764
        %v3797 = vtanh.pop %v3765
        %v3798 = vtanh.pop %v3766
        %v3799 = vtanh.pop %v3767
        %v3800 = vtanh.pop %v3768
        %v3801 = vtanh.pop %v3769
        %v3802 = vtanh.pop %v3770
        %v3803 = vtanh.pop %v3771
        %v3804 = vtanh.pop %v3772
        %v3805 = vtanh.pop %v3773
        %v3806 = vtanh.pop %v3774
        %v3807 = vadd.f32 %v3775, 1.0
        %v3808 = vadd.f32 %v3776, 1.0
        %v3809 = vadd.f32 %v3777, 1.0
        %v3810 = vadd.f32 %v3778, 1.0
        %v3811 = vadd.f32 %v3779, 1.0
        %v3812 = vadd.f32 %v3780, 1.0
        %v3813 = vadd.f32 %v3781, 1.0
        %v3814 = vadd.f32 %v3782, 1.0
        %v3815 = vadd.f32 %v3783, 1.0
        %v3816 = vadd.f32 %v3784, 1.0
        %v3817 = vadd.f32 %v3785, 1.0
        %v3818 = vadd.f32 %v3786, 1.0
        %v3819 = vadd.f32 %v3787, 1.0
        %v3820 = vadd.f32 %v3788, 1.0
        %v3821 = vadd.f32 %v3789, 1.0
        %v3822 = vadd.f32 %v3790, 1.0
        %v3823 = vadd.f32 %v3791, 1.0
        %v3824 = vadd.f32 %v3792, 1.0
        %v3825 = vadd.f32 %v3793, 1.0
        %v3826 = vadd.f32 %v3794, 1.0
        %v3827 = vadd.f32 %v3795, 1.0
        %v3828 = vadd.f32 %v3796, 1.0
        %v3829 = vadd.f32 %v3797, 1.0
        %v3830 = vadd.f32 %v3798, 1.0
        %v3831 = vadd.f32 %v3799, 1.0
        %v3832 = vadd.f32 %v3800, 1.0
        %v3833 = vadd.f32 %v3801, 1.0
        %v3834 = vadd.f32 %v3802, 1.0
        %v3835 = vadd.f32 %v3803, 1.0
        %v3836 = vadd.f32 %v3804, 1.0
        %v3837 = vadd.f32 %v3805, 1.0
        %v3838 = vadd.f32 %v3806, 1.0
        %v3839 = vmul.f32 %v3583, %v3807
        %v3840 = vmul.f32 %v3584, %v3808
        %v3841 = vmul.f32 %v3585, %v3809
        %v3842 = vmul.f32 %v3586, %v3810
        %v3843 = vmul.f32 %v3587, %v3811
        %v3844 = vmul.f32 %v3588, %v3812
        %v3845 = vmul.f32 %v3589, %v3813
        %v3846 = vmul.f32 %v3590, %v3814
        %v3847 = vmul.f32 %v3591, %v3815
        %v3848 = vmul.f32 %v3592, %v3816
        %v3849 = vmul.f32 %v3593, %v3817
        %v3850 = vmul.f32 %v3594, %v3818
        %v3851 = vmul.f32 %v3595, %v3819
        %v3852 = vmul.f32 %v3596, %v3820
        %v3853 = vmul.f32 %v3597, %v3821
        %v3854 = vmul.f32 %v3598, %v3822
        %v3855 = vmul.f32 %v3599, %v3823
        %v3856 = vmul.f32 %v3600, %v3824
        %v3857 = vmul.f32 %v3601, %v3825
        %v3858 = vmul.f32 %v3602, %v3826
        %v3859 = vmul.f32 %v3603, %v3827
        %v3860 = vmul.f32 %v3604, %v3828
        %v3861 = vmul.f32 %v3605, %v3829
        %v3862 = vmul.f32 %v3606, %v3830
        %v3863 = vmul.f32 %v3607, %v3831
        %v3864 = vmul.f32 %v3608, %v3832
        %v3865 = vmul.f32 %v3609, %v3833
        %v3866 = vmul.f32 %v3610, %v3834
        %v3867 = vmul.f32 %v3611, %v3835
        %v3868 = vmul.f32 %v3612, %v3836
        %v3869 = vmul.f32 %v3613, %v3837
        %v3870 = vmul.f32 %v3614, %v3838
        %v3871 = vpack.c.bf16 %v3843, %v3839
        %v3872 = vpack.c.bf16 %v3844, %v3840
        %v3873 = vpack.c.bf16 %v3845, %v3841
        %v3874 = vpack.c.bf16 %v3846, %v3842
        %v3875 = vpack.c.bf16 %v3851, %v3847
        %v3876 = vpack.c.bf16 %v3852, %v3848
        %v3877 = vpack.c.bf16 %v3853, %v3849
        %v3878 = vpack.c.bf16 %v3854, %v3850
        %v3879 = vpack.c.bf16 %v3859, %v3855
        %v3880 = vpack.c.bf16 %v3860, %v3856
        %v3881 = vpack.c.bf16 %v3861, %v3857
        %v3882 = vpack.c.bf16 %v3862, %v3858
        %v3883 = vpack.c.bf16 %v3867, %v3863
        %v3884 = vpack.c.bf16 %v3868, %v3864
        %v3885 = vpack.c.bf16 %v3869, %v3865
        %v3886 = vpack.c.bf16 %v3870, %v3866
        %v3887 = vld [vmem:[#allocation13] sm:$0xf]
        %v3888 = vld [vmem:[#allocation13 + $0x4] sm:$0xf]
        %v3889 = vld [vmem:[#allocation13 + $0x8] sm:$0xf]
        %v3890 = vld [vmem:[#allocation13 + $0xc] sm:$0xf]
        %v3891 = vld [vmem:[#allocation13 + $0x10] sm:$0xf]
        %v3892 = vld [vmem:[#allocation13 + $0x14] sm:$0xf]
        %v3893 = vld [vmem:[#allocation13 + $0x18] sm:$0xf]
        %v3894 = vld [vmem:[#allocation13 + $0x1c] sm:$0xf]
        %v3895 = vld [vmem:[#allocation13 + $0x20] sm:$0xf]
        %v3896 = vld [vmem:[#allocation13 + $0x24] sm:$0xf]
        %v3897 = vld [vmem:[#allocation13 + $0x28] sm:$0xf]
        %v3898 = vld [vmem:[#allocation13 + $0x2c] sm:$0xf]
        %v3899 = vld [vmem:[#allocation13 + $0x30] sm:$0xf]
        %v3900 = vld [vmem:[#allocation13 + $0x34] sm:$0xf]
        %v3901 = vld [vmem:[#allocation13 + $0x38] sm:$0xf]
        %v3902 = vld [vmem:[#allocation13 + $0x3c] sm:$0xf]
        %v3903 = vld [vmem:[#allocation13 + $0x40] sm:$0xf]
        %v3904 = vld [vmem:[#allocation13 + $0x44] sm:$0xf]
        %v3905 = vld [vmem:[#allocation13 + $0x48] sm:$0xf]
        %v3906 = vld [vmem:[#allocation13 + $0x4c] sm:$0xf]
        %v3907 = vld [vmem:[#allocation13 + $0x50] sm:$0xf]
        %v3908 = vld [vmem:[#allocation13 + $0x54] sm:$0xf]
        %v3909 = vld [vmem:[#allocation13 + $0x58] sm:$0xf]
        %v3910 = vld [vmem:[#allocation13 + $0x5c] sm:$0xf]
        %v3911 = vld [vmem:[#allocation13 + $0x60] sm:$0xf]
        %v3912 = vld [vmem:[#allocation13 + $0x64] sm:$0xf]
        %v3913 = vld [vmem:[#allocation13 + $0x68] sm:$0xf]
        %v3914 = vld [vmem:[#allocation13 + $0x6c] sm:$0xf]
        %v3915 = vld [vmem:[#allocation13 + $0x70] sm:$0xf]
        %v3916 = vld [vmem:[#allocation13 + $0x74] sm:$0xf]
        %v3917 = vld [vmem:[#allocation13 + $0x78] sm:$0xf]
        %v3918 = vld [vmem:[#allocation13 + $0x7c] sm:$0xf]
        %v3919 = vld [vmem:[#allocation13 + $0x80] sm:$0xf]
        %v3920 = vld [vmem:[#allocation13 + $0x84] sm:$0xf]
        %v3921 = vld [vmem:[#allocation13 + $0x88] sm:$0xf]
        %v3922 = vld [vmem:[#allocation13 + $0x8c] sm:$0xf]
        %v3923 = vld [vmem:[#allocation13 + $0x90] sm:$0xf]
        %v3924 = vld [vmem:[#allocation13 + $0x94] sm:$0xf]
        %v3925 = vld [vmem:[#allocation13 + $0x98] sm:$0xf]
        %v3926 = vld [vmem:[#allocation13 + $0x9c] sm:$0xf]
        %v3927 = vld [vmem:[#allocation13 + $0xa0] sm:$0xf]
        %v3928 = vld [vmem:[#allocation13 + $0xa4] sm:$0xf]
        %v3929 = vld [vmem:[#allocation13 + $0xa8] sm:$0xf]
        %v3930 = vld [vmem:[#allocation13 + $0xac] sm:$0xf]
        %v3931 = vld [vmem:[#allocation13 + $0xb0] sm:$0xf]
        %v3932 = vld [vmem:[#allocation13 + $0xb4] sm:$0xf]
        %v3933 = vld [vmem:[#allocation13 + $0xb8] sm:$0xf]
        %v3934 = vld [vmem:[#allocation13 + $0xbc] sm:$0xf]
        %v3935 = vld [vmem:[#allocation13 + $0xc0] sm:$0xf]
        %v3936 = vld [vmem:[#allocation13 + $0xc4] sm:$0xf]
        %v3937 = vld [vmem:[#allocation13 + $0xc8] sm:$0xf]
        %v3938 = vld [vmem:[#allocation13 + $0xcc] sm:$0xf]
        %v3939 = vld [vmem:[#allocation13 + $0xd0] sm:$0xf]
        %v3940 = vld [vmem:[#allocation13 + $0xd4] sm:$0xf]
        %v3941 = vld [vmem:[#allocation13 + $0xd8] sm:$0xf]
        %v3942 = vld [vmem:[#allocation13 + $0xdc] sm:$0xf]
        %v3943 = vld [vmem:[#allocation13 + $0xe0] sm:$0xf]
        %v3944 = vld [vmem:[#allocation13 + $0xe4] sm:$0xf]
        %v3945 = vld [vmem:[#allocation13 + $0xe8] sm:$0xf]
        %v3946 = vld [vmem:[#allocation13 + $0xec] sm:$0xf]
        %v3947 = vld [vmem:[#allocation13 + $0xf0] sm:$0xf]
        %v3948 = vld [vmem:[#allocation13 + $0xf4] sm:$0xf]
        %v3949 = vld [vmem:[#allocation13 + $0xf8] sm:$0xf]
        %v3950 = vld [vmem:[#allocation13 + $0xfc] sm:$0xf]
        %v3951 = vld [vmem:[%s15] sm:$0x1]
        %v3953 = vlaneseq
        %v3954 = vshrl.u32 %v3953, 7
        %v3955 = vsub.s32 0, %v3954
        %v3956 = vrot.slane %v3951, %v3955
        %v4022 = vunpack.c.l.b16 %v3887
        %v4023 = vunpack.c.l.b16 %v3888
        %v4024 = vunpack.c.l.b16 %v3889
        %v4025 = vunpack.c.l.b16 %v3890
        %v4026 = vunpack.c.l.b16 %v3891
        %v4027 = vunpack.c.l.b16 %v3892
        %v4028 = vunpack.c.l.b16 %v3893
        %v4029 = vunpack.c.l.b16 %v3894
        %v4030 = vunpack.c.l.b16 %v3895
        %v4031 = vunpack.c.l.b16 %v3896
        %v4032 = vunpack.c.l.b16 %v3897
        %v4033 = vunpack.c.l.b16 %v3898
        %v4034 = vunpack.c.l.b16 %v3899
        %v4035 = vunpack.c.l.b16 %v3900
        %v4036 = vunpack.c.l.b16 %v3901
        %v4037 = vunpack.c.l.b16 %v3902
        %v4038 = vunpack.c.l.b16 %v3903
        %v4039 = vunpack.c.l.b16 %v3904
        %v4040 = vunpack.c.l.b16 %v3905
        %v4041 = vunpack.c.l.b16 %v3906
        %v4042 = vunpack.c.l.b16 %v3907
        %v4043 = vunpack.c.l.b16 %v3908
        %v4044 = vunpack.c.l.b16 %v3909
        %v4045 = vunpack.c.l.b16 %v3910
        %v4046 = vunpack.c.l.b16 %v3911
        %v4047 = vunpack.c.l.b16 %v3912
        %v4048 = vunpack.c.l.b16 %v3913
        %v4049 = vunpack.c.l.b16 %v3914
        %v4050 = vunpack.c.l.b16 %v3915
        %v4051 = vunpack.c.l.b16 %v3916
        %v4052 = vunpack.c.l.b16 %v3917
        %v4053 = vunpack.c.l.b16 %v3918
        %v4054 = vunpack.c.l.b16 %v3919
        %v4055 = vunpack.c.l.b16 %v3920
        %v4056 = vunpack.c.l.b16 %v3921
        %v4057 = vunpack.c.l.b16 %v3922
        %v4058 = vunpack.c.l.b16 %v3923
        %v4059 = vunpack.c.l.b16 %v3924
        %v4060 = vunpack.c.l.b16 %v3925
        %v4061 = vunpack.c.l.b16 %v3926
        %v4062 = vunpack.c.l.b16 %v3927
        %v4063 = vunpack.c.l.b16 %v3928
        %v4064 = vunpack.c.l.b16 %v3929
        %v4065 = vunpack.c.l.b16 %v3930
        %v4066 = vunpack.c.l.b16 %v3931
        %v4067 = vunpack.c.l.b16 %v3932
        %v4068 = vunpack.c.l.b16 %v3933
        %v4069 = vunpack.c.l.b16 %v3934
        %v4070 = vunpack.c.l.b16 %v3935
        %v4071 = vunpack.c.l.b16 %v3936
        %v4072 = vunpack.c.l.b16 %v3937
        %v4073 = vunpack.c.l.b16 %v3938
        %v4074 = vunpack.c.l.b16 %v3939
        %v4075 = vunpack.c.l.b16 %v3940
        %v4076 = vunpack.c.l.b16 %v3941
        %v4077 = vunpack.c.l.b16 %v3942
        %v4078 = vunpack.c.l.b16 %v3943
        %v4079 = vunpack.c.l.b16 %v3944
        %v4080 = vunpack.c.l.b16 %v3945
        %v4081 = vunpack.c.l.b16 %v3946
        %v4082 = vunpack.c.l.b16 %v3947
        %v4083 = vunpack.c.l.b16 %v3948
        %v4084 = vunpack.c.l.b16 %v3949
        %v4085 = vunpack.c.l.b16 %v3950
        %v4086 = vpack.c.b16 %v4023, %v4022
        %v4087 = vpack.c.b16 %v4025, %v4024
        %v4088 = vpack.c.b16 %v4027, %v4026
        %v4089 = vpack.c.b16 %v4029, %v4028
        %v4090 = vpack.c.b16 %v4031, %v4030
        %v4091 = vpack.c.b16 %v4033, %v4032
        %v4092 = vpack.c.b16 %v4035, %v4034
        %v4093 = vpack.c.b16 %v4037, %v4036
        %v4094 = vpack.c.b16 %v4039, %v4038
        %v4095 = vpack.c.b16 %v4041, %v4040
        %v4096 = vpack.c.b16 %v4043, %v4042
        %v4097 = vpack.c.b16 %v4045, %v4044
        %v4098 = vpack.c.b16 %v4047, %v4046
        %v4099 = vpack.c.b16 %v4049, %v4048
        %v4100 = vpack.c.b16 %v4051, %v4050
        %v4101 = vpack.c.b16 %v4053, %v4052
        %v4102 = vpack.c.b16 %v4055, %v4054
        %v4103 = vpack.c.b16 %v4057, %v4056
        %v4104 = vpack.c.b16 %v4059, %v4058
        %v4105 = vpack.c.b16 %v4061, %v4060
        %v4106 = vpack.c.b16 %v4063, %v4062
        %v4107 = vpack.c.b16 %v4065, %v4064
        %v4108 = vpack.c.b16 %v4067, %v4066
        %v4109 = vpack.c.b16 %v4069, %v4068
        %v4110 = vpack.c.b16 %v4071, %v4070
        %v4111 = vpack.c.b16 %v4073, %v4072
        %v4112 = vpack.c.b16 %v4075, %v4074
        %v4113 = vpack.c.b16 %v4077, %v4076
        %v4114 = vpack.c.b16 %v4079, %v4078
        %v4115 = vpack.c.b16 %v4081, %v4080
        %v4116 = vpack.c.b16 %v4083, %v4082
        %v4117 = vpack.c.b16 %v4085, %v4084
        %4150 = vmatprep.subr.bf16.mxu0 0
        %4151 = vmatpush1.bf16.msra.mxu0 %v4086
        %4152 = vmatprep.subr.bf16.mxu0 0
        %4153 = vmatpush1.bf16.msra.mxu0 %v4087
        %4154 = vmatprep.subr.bf16.mxu0 0
        %4155 = vmatpush1.bf16.msra.mxu0 %v4088
        %4156 = vmatprep.subr.bf16.mxu0 0
        %4157 = vmatpush1.bf16.msra.mxu0 %v4089
        %4158 = vmatprep.subr.bf16.mxu0 0
        %4159 = vmatpush1.bf16.msra.mxu0 %v4090
        %4160 = vmatprep.subr.bf16.mxu0 0
        %4161 = vmatpush1.bf16.msra.mxu0 %v4091
        %4162 = vmatprep.subr.bf16.mxu0 0
        %4163 = vmatpush1.bf16.msra.mxu0 %v4092
        %4164 = vmatprep.subr.bf16.mxu0 0
        %4165 = vmatpush1.bf16.msra.mxu0 %v4093
        %4166 = vmatprep.subr.bf16.mxu0 0
        %4167 = vmatpush1.bf16.msra.mxu0 %v4094
        %4168 = vmatprep.subr.bf16.mxu0 0
        %4169 = vmatpush1.bf16.msra.mxu0 %v4095
        %4170 = vmatprep.subr.bf16.mxu0 0
        %4171 = vmatpush1.bf16.msra.mxu0 %v4096
        %4172 = vmatprep.subr.bf16.mxu0 0
        %4173 = vmatpush1.bf16.msra.mxu0 %v4097
        %4174 = vmatprep.subr.bf16.mxu0 0
        %4175 = vmatpush1.bf16.msra.mxu0 %v4098
        %4176 = vmatprep.subr.bf16.mxu0 0
        %4177 = vmatpush1.bf16.msra.mxu0 %v4099
        %4178 = vmatprep.subr.bf16.mxu0 0
        %4179 = vmatpush1.bf16.msra.mxu0 %v4100
        %4180 = vmatprep.subr.bf16.mxu0 0
        %4181 = vmatpush1.bf16.msra.mxu0 %v4101
        %4182 = vmatprep.mubr.bf16.mxu0 %v3872
        %4183 = vmatmul.mubr.bf16.gmra.mrb[0].mxu0 %v3871
        %v4184 = vpop.f32.mrb[0].mxu0
        %v4185 = vadd.f32 %v3956, %v4184
        %v4186 = vpop.f32.mrb[0].mxu0
        %v4187 = vpop.f32.mrb[0].mxu0
        %v4188 = vadd.f32 %v3956, %v4187
        %v4189 = vpop.f32.mrb[0].mxu0
        %4190 = vmatprep.mubr.bf16.mxu0 %v3876
        %4191 = vmatmul.mubr.bf16.gmra.mrb[0].mxu0 %v3875
        %v4192 = vpop.f32.mrb[0].mxu0
        %v4193 = vadd.f32 %v3956, %v4192
        %v4194 = vpop.f32.mrb[0].mxu0
        %v4195 = vpop.f32.mrb[0].mxu0
        %v4196 = vadd.f32 %v3956, %v4195
        %v4197 = vpop.f32.mrb[0].mxu0
        %4198 = vmatprep.mubr.bf16.mxu0 %v3880
        %4199 = vmatmul.mubr.bf16.gmra.mrb[0].mxu0 %v3879
        %v4200 = vpop.f32.mrb[0].mxu0
        %v4201 = vadd.f32 %v3956, %v4200
        %v4202 = vpop.f32.mrb[0].mxu0
        %v4203 = vpop.f32.mrb[0].mxu0
        %v4204 = vadd.f32 %v3956, %v4203
        %v4205 = vpop.f32.mrb[0].mxu0
        %4206 = vmatprep.mubr.bf16.mxu0 %v3884
        %4207 = vmatmul.mubr.bf16.gmra.mrb[0].mxu0 %v3883
        %v4208 = vpop.f32.mrb[0].mxu0
        %v4209 = vadd.f32 %v3956, %v4208
        %v4210 = vpop.f32.mrb[0].mxu0
        %v4211 = vpop.f32.mrb[0].mxu0
        %v4212 = vadd.f32 %v3956, %v4211
        %v4213 = vpop.f32.mrb[0].mxu0
        %4214 = vdwg.mxu0
        %4215 = vmatprep.subr.bf16.mxu0 0
        %4216 = vmatpush1.bf16.msra.mxu0 %v4102
        %4217 = vmatprep.subr.bf16.mxu0 0
        %4218 = vmatpush1.bf16.msra.mxu0 %v4103
        %4219 = vmatprep.subr.bf16.mxu0 0
        %4220 = vmatpush1.bf16.msra.mxu0 %v4104
        %4221 = vmatprep.subr.bf16.mxu0 0
        %4222 = vmatpush1.bf16.msra.mxu0 %v4105
        %4223 = vmatprep.subr.bf16.mxu0 0
        %4224 = vmatpush1.bf16.msra.mxu0 %v4106
        %4225 = vmatprep.subr.bf16.mxu0 0
        %4226 = vmatpush1.bf16.msra.mxu0 %v4107
        %4227 = vmatprep.subr.bf16.mxu0 0
        %4228 = vmatpush1.bf16.msra.mxu0 %v4108
        %4229 = vmatprep.subr.bf16.mxu0 0
        %4230 = vmatpush1.bf16.msra.mxu0 %v4109
        %4231 = vmatprep.subr.bf16.mxu0 0
        %4232 = vmatpush1.bf16.msra.mxu0 %v4110
        %4233 = vmatprep.subr.bf16.mxu0 0
        %4234 = vmatpush1.bf16.msra.mxu0 %v4111
        %4235 = vmatprep.subr.bf16.mxu0 0
        %4236 = vmatpush1.bf16.msra.mxu0 %v4112
        %4237 = vmatprep.subr.bf16.mxu0 0
        %4238 = vmatpush1.bf16.msra.mxu0 %v4113
        %4239 = vmatprep.subr.bf16.mxu0 0
        %4240 = vmatpush1.bf16.msra.mxu0 %v4114
        %4241 = vmatprep.subr.bf16.mxu0 0
        %4242 = vmatpush1.bf16.msra.mxu0 %v4115
        %4243 = vmatprep.subr.bf16.mxu0 0
        %4244 = vmatpush1.bf16.msra.mxu0 %v4116
        %4245 = vmatprep.subr.bf16.mxu0 0
        %4246 = vmatpush1.bf16.msra.mxu0 %v4117
        %4247 = vmatprep.mubr.bf16.mxu0 %v3874
        %4248 = vmatmul.mubr.bf16.gmra.mrb[0].mxu0 %v3873
        %v4249 = vpop.f32.mrb[0].mxu0
        %v4250 = vadd.f32 %v4185, %v4249
        %v4251 = vpop.f32.mrb[0].mxu0
        %v4252 = vpop.f32.mrb[0].mxu0
        %v4253 = vadd.f32 %v4188, %v4252
        %v4254 = vpop.f32.mrb[0].mxu0
        %4255 = vmatprep.mubr.bf16.mxu0 %v3878
        %4256 = vmatmul.mubr.bf16.gmra.mrb[0].mxu0 %v3877
        %v4257 = vpop.f32.mrb[0].mxu0
        %v4258 = vadd.f32 %v4193, %v4257
        %v4259 = vpop.f32.mrb[0].mxu0
        %v4260 = vpop.f32.mrb[0].mxu0
        %v4261 = vadd.f32 %v4196, %v4260
        %v4262 = vpop.f32.mrb[0].mxu0
        %4263 = vmatprep.mubr.bf16.mxu0 %v3882
        %4264 = vmatmul.mubr.bf16.gmra.mrb[0].mxu0 %v3881
        %v4265 = vpop.f32.mrb[0].mxu0
        %v4266 = vadd.f32 %v4201, %v4265
        %v4267 = vpop.f32.mrb[0].mxu0
        %v4268 = vpop.f32.mrb[0].mxu0
        %v4269 = vadd.f32 %v4204, %v4268
        %v4270 = vpop.f32.mrb[0].mxu0
        %4271 = vmatprep.mubr.bf16.mxu0 %v3886
        %4272 = vmatmul.mubr.bf16.gmra.mrb[0].mxu0 %v3885
        %v4273 = vpop.f32.mrb[0].mxu0
        %v4274 = vadd.f32 %v4209, %v4273
        %v4275 = vpop.f32.mrb[0].mxu0
        %v4276 = vpop.f32.mrb[0].mxu0
        %v4277 = vadd.f32 %v4212, %v4276
        %v4278 = vpop.f32.mrb[0].mxu0
        %4279 = vdwg.mxu0
        %v4280 = vadd.f32 %v3077, %v4250
        %v4281 = vadd.f32 %v3078, %v4253
        %v4282 = vadd.f32 %v3079, %v4258
        %v4283 = vadd.f32 %v3080, %v4261
        %v4284 = vadd.f32 %v3081, %v4266
        %v4285 = vadd.f32 %v3082, %v4269
        %v4286 = vadd.f32 %v3083, %v4274
        %v4287 = vadd.f32 %v3084, %v4277
        %4288 = vst [vmem:[%s669] sm:$0xff] %v4280
        %4289 = vst [vmem:[%s669 + $0x8] sm:$0xff] %v4281
        %4290 = vst [vmem:[%s669 + $0x10] sm:$0xff] %v4282
        %4291 = vst [vmem:[%s669 + $0x18] sm:$0xff] %v4283
        %4292 = vst [vmem:[%s669 + $0x20] sm:$0xff] %v4284
        %4293 = vst [vmem:[%s669 + $0x28] sm:$0xff] %v4285
        %4294 = vst [vmem:[%s669 + $0x30] sm:$0xff] %v4286
        %4295 = vst [vmem:[%s669 + $0x38] sm:$0xff] %v4287
        %s4296 = sand.u32 %s408, 1
        %s4297 = scalar_lea.sflag [#allocation4], %s4296
        %s4298 = sand.u32 %s408, 1
        %s4299 = smul.addr %s4298, 64
        %s4300 = scalar_lea.vmem [#allocation14], %s4299
        // Predicated region
        $region113: #{tpu_custom_call.1} parent=83 // pred_check
          %p4301 = pneg %p418
        $region114: #{tpu_custom_call.1} parent=83 // pred_check_branch
          %4303 = sbr.rel (%p4301) target = $region116
        $region115: #{tpu_custom_call.1} parent=83 // pred_region
          %s4304 = smul.u32 8, %s43
          %s4306 = ssub.s32 1024, 1024
          %4307 = vsyncadd %s4297, %s4306
          %s4308 = smul.addr %s42, 16
          %s4309 = sadd.s32 %s4304, %s4308
          %s4310 = smul.addr %s4309, 128
          %s4311 = scalar_lea.hbm %s16, %s4310
          %s4312 = sshll.u32 %s4300, 4
          %s4313 = int_to_ptr.vmem [resolvable:$true] %s4312
          %4318 = dma.vmem_to_hbm [thread:$0]  %s4313, 1024, %s4311, %s4297, 128, 128, 8
        $region116: #{tpu_custom_call.1} parent=83 // pred_fallthru
          _
      $region84: #{tpu_custom_call.1} parent=5 // pred_fallthru
        _
      %p4319 = scmp.le.s32.totalorder 2, %s33
      // Predicated region
      $region117: #{tpu_custom_call.1} parent=5 // pred_check
        %p4320 = pneg %p4319
      $region118: #{tpu_custom_call.1} parent=5 // pred_check_branch
        %4322 = sbr.rel (%p4320) target = $region120
      $region119: #{tpu_custom_call.1} parent=5 // pred_region
        %s4323 = ssub.s32 %s33, 2
        // Predicated region
        $region121: #{tpu_custom_call.1} parent=119 // pred_check
          %p4324 = pneg %p424
        $region122: #{tpu_custom_call.1} parent=119 // pred_check_branch
          %4326 = sbr.rel (%p4324) target = $region124
        $region123: #{tpu_custom_call.1} parent=119 // pred_region
          %s4327 = sand.u32 %s409, 1
          %s4328 = scalar_lea.sflag [#allocation4], %s4327
          %s4329 = sand.u32 %s409, 1
          %s4330 = smul.addr %s4329, 64
          %s4331 = scalar_lea.vmem [#allocation14], %s4330
          %4332 = dma.done %s4328, 1024
        $region124: #{tpu_custom_call.1} parent=119 // pred_fallthru
          _
      $region120: #{tpu_custom_call.1} parent=5 // pred_fallthru
        _
    $region6: #{tpu_custom_call.1} parent=1 // loop_footer
      %s37 = sadd.s32 1, %s33
    $region7: #{tpu_custom_call.1} parent=1 // loop_footer_branch
      %32 = sbr.rel target = $region3
    $region8: #{tpu_custom_call.1} parent=1 // loop_exit
      _
    %4333 = vsyncpa [#allocation3], 1
    %s4334 = scalar_lea.sflag [#allocation3], 1
    %4335 = vsyncpa %s4334, 1
    %4336 = vsyncpa [#allocation6], 1
    %s4337 = scalar_lea.sflag [#allocation6], 1
    %4338 = vsyncpa %s4337, 1
    %4339 = vsyncpa [#allocation9], 1
    %4340 = vsyncpa [#allocation12], 1
    %4341 = vsyncpa [#allocation4], 1
    %s4342 = scalar_lea.sflag [#allocation4], 1
    %4343 = vsyncpa %s4342, 1

</llo_original>
